<compile_context>
chip_gen: v6e
topology: v6e:2x2x1
jax: 0.10.0
libtpu: 0.0.40
codegen_flags: <defaults>
</compile_context>

<pallas_src>
import numpy as np
import jax
import jax.numpy as jnp
from jax import lax
from jax.experimental import pallas as pl
from jax.experimental.pallas import tpu as pltpu


# --------------------------------------------------------------------------
# Feature probes / hardware-derived parameters
# --------------------------------------------------------------------------
_SINGLE_BUFFER_OK = None
_VMEM_LIMIT = None


def _probe_single_buffer():
    """Check pipeline_mode=pl.Buffered(1) works for grid-invariant inputs."""
    try:
        def k(x_ref, o_ref):
            o_ref[...] = x_ref[...] * 2.0

        x = jnp.arange(8 * 128, dtype=jnp.float32).reshape(8, 128)
        out = pl.pallas_call(
            k,
            out_shape=jax.ShapeDtypeStruct((16, 128), jnp.float32),
            grid=(2,),
            in_specs=[pl.BlockSpec((8, 128), lambda n: (0, 0),
                                   pipeline_mode=pl.Buffered(1))],
            out_specs=pl.BlockSpec((8, 128), lambda n: (n, 0)),
        )(x)
        expected = jnp.tile(x * 2.0, (2, 1))
        return bool(jnp.allclose(out, expected))
    except Exception:
        return False


def _single_buffer_ok():
    global _SINGLE_BUFFER_OK
    if _SINGLE_BUFFER_OK is None:
        _SINGLE_BUFFER_OK = _probe_single_buffer()
    return _SINGLE_BUFFER_OK


def _vmem_limit():
    """Per-generation VMEM budget: 96 MiB on v5e/v6e, 48 MiB on v7x."""
    global _VMEM_LIMIT
    if _VMEM_LIMIT is None:
        try:
            cap = int(pltpu.get_tpu_info().vmem_capacity_bytes)
            _VMEM_LIMIT = (cap * 3) // 4
        except Exception:
            _VMEM_LIMIT = 32 * 1024 * 1024
    return _VMEM_LIMIT


def _pick_batch_block(N, H):
    """Images per grid step: aim for ~256 matmul rows, keep 2+ steps if M>=128."""
    nb = max(1, min(N, 256 // max(H, 1)))
    if -(-N // nb) < 2:                       # only one grid step
        half = max(1, nb // 2)
        if half * H >= 128 and -(-N // half) >= 2:
            nb = half                          # v7x: keep both TCs busy
    while N % nb:                              # avoid a ragged final block
        nb -= 1
    return nb


# --------------------------------------------------------------------------
# Weight preprocessing (host side, once at init)
# --------------------------------------------------------------------------
def _toeplitz_weights(w_hwio, W):
    """(3,3,Cin,Cout) HWIO conv weights -> (3*W*Cin, W*Cout) banded matrix.

    LHS lane layout is ky*(W*Cin) + u*Cin + ci (the three height-shifted rows
    concatenated along lanes); output lane layout is x*Cout + co.
    T[ky*W*Cin + u*Cin + ci, x*Cout + co] = w[ky, u-x+1, ci, co] if 0<=u-x+1<=2.
    Width padding=1 is implicit (missing taps contribute zero).
    """
    w = np.asarray(w_hwio, np.float32)                     # (3, 3, Cin, Cout)
    _, _, cin, cout = w.shape
    t = np.zeros((3, W, cin, W, cout), np.float32)
    for ky in range(3):
        for kx in range(3):
            for x in range(W):
                u = x + kx - 1
                if 0 <= u < W:
                    t[ky, u, :, x, :] = w[ky, kx]
    return jnp.asarray(t.reshape(3 * W * cin, W * cout), jnp.bfloat16)


def _tiled_bias(b, W):
    """(Cout,) bias -> (1, W*Cout) f32, pre-tiled along the width axis."""
    return jnp.tile(b, W).reshape(1, W * b.shape[0]).astype(jnp.float32)


# --------------------------------------------------------------------------
# Fused layer kernel: conv3x3+ReLU, conv3x3+ReLU, then maxpool(2) OR fused FC
# --------------------------------------------------------------------------
def _make_layer_kernel(Nb, H, W, Cin, Cout, do_pool, do_fc):
    WCin, WCout = W * Cin, W * Cout

    def band_lhs(x_nhw, WC):
        # (Nb, H, W*C) bf16 -> (Nb*H, 3*W*C) bf16 with height pad=1 folded in.
        zrow = jnp.zeros((Nb, 1, WC), x_nhw.dtype)
        xp = jnp.concatenate([zrow, x_nhw, zrow], axis=1)          # (Nb,H+2,WC)
        lhs = jnp.concatenate(
            [xp[:, 0:H, :], xp[:, 1:H + 1, :], xp[:, 2:H + 2, :]], axis=-1)
        return lhs.reshape(Nb * H, 3 * WC)

    def kernel(x_ref, w1_ref, b1_ref, w2_ref, b2_ref, *rest):
        if do_fc:
            fw_ref, fb_ref, o_ref = rest
        else:
            (o_ref,) = rest

        # conv1 + relu : one deep-K matmul (K = 3*W*Cin), M = Nb*H rows
        lhs1 = band_lhs(x_ref[...], WCin)
        a1 = jnp.maximum(
            jnp.dot(lhs1, w1_ref[...], preferred_element_type=jnp.float32)
            + b1_ref[...], 0.0)                                    # (Nb*H,WCout)

        # conv2 + relu
        lhs2 = band_lhs(a1.astype(jnp.bfloat16).reshape(Nb, H, WCout), WCout)
        a2 = jnp.maximum(
            jnp.dot(lhs2, w2_ref[...], preferred_element_type=jnp.float32)
            + b2_ref[...], 0.0)                                    # (Nb*H,WCout)

        if do_fc:
            # Fused FC on the just-computed activations (no HBM round trip).
            feat = a2.astype(jnp.bfloat16).reshape(Nb, H * WCout)
            logits = (jnp.dot(feat, fw_ref[...],
                              preferred_element_type=jnp.float32)
                      + fb_ref[...])                               # (Nb, Cp)
            o_ref[...] = logits.reshape(Nb, 1, -1)
        elif do_pool:
            Wo = W // 2
            t = a2.reshape(Nb * H, Wo, 2 * Cout)
            wp = jnp.maximum(t[:, :, :Cout], t[:, :, Cout:])       # width pool
            wp = wp.reshape(Nb * (H // 2), 2, Wo * Cout)
            out = jnp.maximum(wp[:, 0, :], wp[:, 1, :])            # height pool
            o_ref[...] = out.reshape(Nb, H // 2, Wo * Cout).astype(o_ref.dtype)
        else:
            o_ref[...] = a2.reshape(Nb, H, WCout).astype(o_ref.dtype)

    return kernel


def conv_layer(x, w1, b1, w2, b2, *, H, W, Cin, Cout, do_pool,
               fc_w=None, fc_b=None):
    """x: (N, H, W*Cin) bf16 ->
         pooled layers : (N, H//2, (W//2)*Cout) bf16
         last layer    : (N, 1, Cp) f32  (FC fused, Cp = classes padded to 128)
    """
    N = x.shape[0]
    do_fc = fc_w is not None
    assert not (do_fc and do_pool)
    if do_pool:
        assert H % 2 == 0 and W % 2 == 0, "MaxPool2d(2) needs even H, W"

    Nb = _pick_batch_block(N, H)
    grid = (N // Nb,)
    WCin, WCout = W * Cin, W * Cout
    single_buf = _single_buffer_ok()

    def const_spec(shape):
        zeros = (0,) * len(shape)
        if single_buf:
            return pl.BlockSpec(shape, lambda n, _z=zeros: _z,
                                pipeline_mode=pl.Buffered(1))
        return pl.BlockSpec(shape, lambda n, _z=zeros: _z)

    in_specs = [
        pl.BlockSpec((Nb, H, WCin), lambda n: (n, 0, 0)),
        const_spec((3 * WCin, WCout)),
        const_spec((1, WCout)),
        const_spec((3 * WCout, WCout)),
        const_spec((1, WCout)),
    ]
    args = [x, w1, b1, w2, b2]

    flops = (2 * N * H * (3 * WCin) * WCout
             + 2 * N * H * (3 * WCout) * WCout)
    bytes_accessed = (x.size * 2 + w1.size * 2 + w2.size * 2
                      + (b1.size + b2.size) * 4)

    if do_fc:
        D, Cp = fc_w.shape
        assert D == H * WCout
        in_specs += [const_spec((D, Cp)), const_spec((1, Cp))]
        args += [fc_w, fc_b]
        out_shape = jax.ShapeDtypeStruct((N, 1, Cp), jnp.float32)
        out_spec = pl.BlockSpec((Nb, 1, Cp), lambda n: (n, 0, 0))
        flops += 2 * N * D * Cp
        bytes_accessed += fc_w.size * 2 + fc_b.size * 4 + N * Cp * 4
    else:
        Ho, Wo = (H // 2, W // 2) if do_pool else (H, W)
        out_shape = jax.ShapeDtypeStruct((N, Ho, Wo * Cout), jnp.bfloat16)
        out_spec = pl.BlockSpec((Nb, Ho, Wo * Cout), lambda n: (n, 0, 0))
        bytes_accessed += N * Ho * Wo * Cout * 2

    return pl.pallas_call(
        _make_layer_kernel(Nb, H, W, Cin, Cout, do_pool, do_fc),
        out_shape=out_shape,
        grid=grid,
        in_specs=in_specs,
        out_specs=out_spec,
        compiler_params=pltpu.CompilerParams(
            dimension_semantics=("parallel",),
            vmem_limit_bytes=_vmem_limit()),
        cost_estimate=pl.CostEstimate(flops=flops, transcendentals=0,
                                      bytes_accessed=int(bytes_accessed)),
    )(*args)


# --------------------------------------------------------------------------
# Parameter init (synthetic, mirrors ConvNet.__init__ shapes) + forward
# --------------------------------------------------------------------------
def init_params(config, key):
    last = config['channels']
    layer_size = config['layer_size']
    W = config['img_size']
    convs, raw_convs = [], []
    for l in range(config['layers']):
        key, k1, k2, k3, k4 = jax.random.split(key, 5)
        w1 = jax.random.normal(k1, (3, 3, last, layer_size), jnp.float32) * 0.1
        b1 = jax.random.normal(k2, (layer_size,), jnp.float32) * 0.01
        w2 = jax.random.normal(k3, (3, 3, layer_size, layer_size),
                               jnp.float32) * 0.1
        b2 = jax.random.normal(k4, (layer_size,), jnp.float32) * 0.01
        raw_convs.append((w1, b1, w2, b2))
        convs.append(dict(w1=_toeplitz_weights(w1, W), b1=_tiled_bias(b1, W),
                          w2=_toeplitz_weights(w2, W), b2=_tiled_bias(b2, W)))
        last = layer_size
        layer_size *= 2
        if l < config['layers'] - 1:
            W //= 2

    num_pools = config['layers'] - 1
    outshape = config['img_size'] // (2 ** num_pools)
    linear_size = outshape * outshape * last

    key, kf1, kf2 = jax.random.split(key, 3)
    # FC weight rows generated directly in NHWC flatten order (h, w, c);
    # equivalent to permuting torch's fc.weight once at init.
    fw = jax.random.normal(kf1, (linear_size, config['classes']),
                           jnp.float32) * 0.05
    fb = jax.random.normal(kf2, (config['classes'],), jnp.float32) * 0.01
    classes = config['classes']
    Cp = -(-classes // 128) * 128
    fw_p = jnp.zeros((linear_size, Cp), jnp.float32
                     ).at[:, :classes].set(fw).astype(jnp.bfloat16)
    fb_p = jnp.zeros((1, Cp), jnp.float32).at[:, :classes].set(fb)

    return convs, (fw_p, fb_p, classes), (raw_convs, fw, fb)


def convnet_forward(x_nchw, convs, fc_params, config):
    """x shape: (batch, channels, height, width) — same contract as torch."""
    N, C, H, W = x_nchw.shape
    # bf16 first (halves the transpose HBM traffic), then NCHW -> (N,H,W*C).
    x = jnp.transpose(x_nchw.astype(jnp.bfloat16), (0, 2, 3, 1))
    x = x.reshape(N, H, W * C)
    fw, fb, classes = fc_params
    c_out = config['layer_size']
    nlayers = config['layers']
    for l, p in enumerate(convs):
        if l < nlayers - 1:
            x = conv_layer(x, p['w1'], p['b1'], p['w2'], p['b2'],
                           H=H, W=W, Cin=C, Cout=c_out, do_pool=True)
            H //= 2
            W //= 2
        else:  # last layer: conv+relu, conv+relu, fused FC (no pool)
            x = conv_layer(x, p['w1'], p['b1'], p['w2'], p['b2'],
                           H=H, W=W, Cin=C, Cout=c_out, do_pool=False,
                           fc_w=fw, fc_b=fb)
        C = c_out
        c_out *= 2
    return x.reshape(N, -1)[:, :classes]       # drop lane-padding columns


def reference_forward(x_nchw, raw_convs, fw, fb, num_layers):
    """Pure-JAX f32 reference mirroring the torch module."""
    x = jnp.transpose(x_nchw, (0, 2, 3, 1))
    dn = ('NHWC', 'HWIO', 'NHWC')
    for l, (w1, b1, w2, b2) in enumerate(raw_convs):
        x = jax.nn.relu(lax.conv_general_dilated(x, w1, (1, 1), 'SAME',
                                                 dimension_numbers=dn) + b1)
        x = jax.nn.relu(lax.conv_general_dilated(x, w2, (1, 1), 'SAME',
                                                 dimension_numbers=dn) + b2)
        if l < num_layers - 1:
            x = lax.reduce_window(x, -jnp.inf, lax.max,
                                  (1, 2, 2, 1), (1, 2, 2, 1), 'VALID')
    x = x.reshape(x.shape[0], -1)
    return x @ fw + fb


if __name__ == "__main__":
    config = dict(channels=4, img_size=16, layers=2, layer_size=8, classes=10)
    batch = 2

    key = jax.random.PRNGKey(0)
    key, xkey = jax.random.split(key)
    x = jax.random.normal(
        xkey, (batch, config['channels'], config['img_size'],
               config['img_size']), jnp.float32)

    convs, fc_params, raws = init_params(config, key)

    fwd = jax.jit(lambda xx: convnet_forward(xx, convs, fc_params, config))
    out = jax.block_until_ready(fwd(x))

    assert out.shape == (batch, config['classes']), out.shape
    assert bool(jnp.all(jnp.isfinite(out)))

    # Correctness vs f32 pure-JAX reference (loose tolerance: bf16 pipeline).
    raw_convs, fw_raw, fb_raw = raws
    ref = reference_forward(x, raw_convs, fw_raw, fb_raw, config['layers'])
    rel_err = jnp.linalg.norm(out - ref) / (jnp.linalg.norm(ref) + 1e-6)
    assert float(rel_err) < 5e-2, f"relative error too high: {float(rel_err)}"

    print("KERNEL_OK")
</pallas_src>

<mosaic_0001>
module attributes {stable_mosaic.version = 11 : i64} {
  func.func @kernel(%arg0: i32, %arg1: memref<2x16x64xbf16, #tpu.memory_space<vmem>>, %arg2: memref<192x128xbf16, #tpu.memory_space<vmem>>, %arg3: memref<1x128xf32, #tpu.memory_space<vmem>>, %arg4: memref<384x128xbf16, #tpu.memory_space<vmem>>, %arg5: memref<1x128xf32, #tpu.memory_space<vmem>>, %arg6: memref<2x8x64xbf16, #tpu.memory_space<vmem>>) attributes {dimension_semantics = [#tpu.dimension_semantics<parallel>], iteration_bounds = array<i64: 1>, scalar_prefetch = 0 : i64, scratch_operands = 0 : i64, tpu.core_type = #tpu.core_type<tc>, window_params = [{transform_indices = @transform_0, window_bounds = array<i64: 2, 16, 64>}, {pipeline_mode = #tpu.pipeline_mode<synchronous>, transform_indices = @transform_1, window_bounds = array<i64: 192, 128>}, {pipeline_mode = #tpu.pipeline_mode<synchronous>, transform_indices = @transform_2, window_bounds = array<i64: 1, 128>}, {pipeline_mode = #tpu.pipeline_mode<synchronous>, transform_indices = @transform_3, window_bounds = array<i64: 384, 128>}, {pipeline_mode = #tpu.pipeline_mode<synchronous>, transform_indices = @transform_4, window_bounds = array<i64: 1, 128>}, {transform_indices = @transform_5, window_bounds = array<i64: 2, 8, 64>}]} {
    %c0 = arith.constant 0 : index
    %c0_0 = arith.constant 0 : index
    %c0_1 = arith.constant 0 : index
    %0 = vector.load %arg1[%c0, %c0_0, %c0_1] : memref<2x16x64xbf16, #tpu.memory_space<vmem>>, vector<2x16x64xbf16>
    %cst = arith.constant 0.000000e+00 : bf16
    %1 = vector.broadcast %cst : bf16 to vector<2x1x64xbf16>
    %2 = tpu.concatenate %1, %0, %1 in 1 : vector<2x1x64xbf16>, vector<2x16x64xbf16>, vector<2x1x64xbf16> -> vector<2x18x64xbf16>
    %3 = vector.extract_strided_slice %2 {offsets = [0, 0, 0], sizes = [2, 16, 64], strides = [1, 1, 1]} : vector<2x18x64xbf16> to vector<2x16x64xbf16>
    %4 = vector.extract_strided_slice %2 {offsets = [0, 1, 0], sizes = [2, 16, 64], strides = [1, 1, 1]} : vector<2x18x64xbf16> to vector<2x16x64xbf16>
    %5 = vector.extract_strided_slice %2 {offsets = [0, 2, 0], sizes = [2, 16, 64], strides = [1, 1, 1]} : vector<2x18x64xbf16> to vector<2x16x64xbf16>
    %6 = tpu.concatenate %3, %4, %5 in 2 : vector<2x16x64xbf16>, vector<2x16x64xbf16>, vector<2x16x64xbf16> -> vector<2x16x192xbf16>
    %7 = vector.shape_cast %6 : vector<2x16x192xbf16> to vector<32x192xbf16>
    %c0_2 = arith.constant 0 : index
    %c0_3 = arith.constant 0 : index
    %8 = vector.load %arg2[%c0_2, %c0_3] : memref<192x128xbf16, #tpu.memory_space<vmem>>, vector<192x128xbf16>
    %cst_4 = arith.constant dense<0.000000e+00> : vector<32x128xf32>
    %9 = tpu.matmul %7, %8, %cst_4 {dimension_numbers = #tpu.dot_dimension_numbers<[1], [0], [0], [1], [0, 0, 1, 1], [], []>} : vector<32x192xbf16>, vector<192x128xbf16>, vector<32x128xf32> -> vector<32x128xf32>
    %c0_5 = arith.constant 0 : index
    %c0_6 = arith.constant 0 : index
    %10 = vector.load %arg3[%c0_5, %c0_6] : memref<1x128xf32, #tpu.memory_space<vmem>>, vector<1x128xf32>
    %11 = vector.broadcast %10 : vector<1x128xf32> to vector<32x128xf32>
    %12 = arith.addf %9, %11 : vector<32x128xf32>
    %cst_7 = arith.constant 0.000000e+00 : f32
    %13 = vector.broadcast %cst_7 : f32 to vector<32x128xf32>
    %14 = arith.maximumf %12, %13 : vector<32x128xf32>
    %15 = arith.truncf %14 : vector<32x128xf32> to vector<32x128xbf16>
    %16 = vector.shape_cast %15 : vector<32x128xbf16> to vector<2x16x128xbf16>
    %cst_8 = arith.constant 0.000000e+00 : bf16
    %17 = vector.broadcast %cst_8 : bf16 to vector<2x1x128xbf16>
    %18 = tpu.concatenate %17, %16, %17 in 1 : vector<2x1x128xbf16>, vector<2x16x128xbf16>, vector<2x1x128xbf16> -> vector<2x18x128xbf16>
    %19 = vector.extract_strided_slice %18 {offsets = [0, 0, 0], sizes = [2, 16, 128], strides = [1, 1, 1]} : vector<2x18x128xbf16> to vector<2x16x128xbf16>
    %20 = vector.extract_strided_slice %18 {offsets = [0, 1, 0], sizes = [2, 16, 128], strides = [1, 1, 1]} : vector<2x18x128xbf16> to vector<2x16x128xbf16>
    %21 = vector.extract_strided_slice %18 {offsets = [0, 2, 0], sizes = [2, 16, 128], strides = [1, 1, 1]} : vector<2x18x128xbf16> to vector<2x16x128xbf16>
    %22 = tpu.concatenate %19, %20, %21 in 2 : vector<2x16x128xbf16>, vector<2x16x128xbf16>, vector<2x16x128xbf16> -> vector<2x16x384xbf16>
    %23 = vector.shape_cast %22 : vector<2x16x384xbf16> to vector<32x384xbf16>
    %c0_9 = arith.constant 0 : index
    %c0_10 = arith.constant 0 : index
    %24 = vector.load %arg4[%c0_9, %c0_10] : memref<384x128xbf16, #tpu.memory_space<vmem>>, vector<384x128xbf16>
    %cst_11 = arith.constant dense<0.000000e+00> : vector<32x128xf32>
    %25 = tpu.matmul %23, %24, %cst_11 {dimension_numbers = #tpu.dot_dimension_numbers<[1], [0], [0], [1], [0, 0, 1, 1], [], []>} : vector<32x384xbf16>, vector<384x128xbf16>, vector<32x128xf32> -> vector<32x128xf32>
    %c0_12 = arith.constant 0 : index
    %c0_13 = arith.constant 0 : index
    %26 = vector.load %arg5[%c0_12, %c0_13] : memref<1x128xf32, #tpu.memory_space<vmem>>, vector<1x128xf32>
    %27 = vector.broadcast %26 : vector<1x128xf32> to vector<32x128xf32>
    %28 = arith.addf %25, %27 : vector<32x128xf32>
    %cst_14 = arith.constant 0.000000e+00 : f32
    %29 = vector.broadcast %cst_14 : f32 to vector<32x128xf32>
    %30 = arith.maximumf %28, %29 : vector<32x128xf32>
    %31 = vector.shape_cast %30 : vector<32x128xf32> to vector<32x8x16xf32>
    %32 = vector.extract_strided_slice %31 {offsets = [0, 0, 0], sizes = [32, 8, 8], strides = [1, 1, 1]} : vector<32x8x16xf32> to vector<32x8x8xf32>
    %33 = vector.extract_strided_slice %31 {offsets = [0, 0, 8], sizes = [32, 8, 8], strides = [1, 1, 1]} : vector<32x8x16xf32> to vector<32x8x8xf32>
    %34 = arith.maximumf %32, %33 : vector<32x8x8xf32>
    %35 = vector.shape_cast %34 : vector<32x8x8xf32> to vector<16x2x64xf32>
    %36 = vector.extract_strided_slice %35 {offsets = [0, 0, 0], sizes = [16, 1, 64], strides = [1, 1, 1]} : vector<16x2x64xf32> to vector<16x1x64xf32>
    %37 = vector.shape_cast %36 : vector<16x1x64xf32> to vector<16x64xf32>
    %38 = vector.extract_strided_slice %35 {offsets = [0, 1, 0], sizes = [16, 1, 64], strides = [1, 1, 1]} : vector<16x2x64xf32> to vector<16x1x64xf32>
    %39 = vector.shape_cast %38 : vector<16x1x64xf32> to vector<16x64xf32>
    %40 = arith.maximumf %37, %39 : vector<16x64xf32>
    %41 = vector.shape_cast %40 : vector<16x64xf32> to vector<2x8x64xf32>
    %42 = arith.truncf %41 : vector<2x8x64xf32> to vector<2x8x64xbf16>
    %c0_15 = arith.constant 0 : index
    %c0_16 = arith.constant 0 : index
    %c0_17 = arith.constant 0 : index
    %43 = vector.load %arg6[%c0_15, %c0_16, %c0_17] : memref<2x8x64xbf16, #tpu.memory_space<vmem>>, vector<2x8x64xbf16>
    tpu.vector_store %arg6[%c0_15, %c0_16, %c0_17], %42 {strides = array<i32>} : memref<2x8x64xbf16, #tpu.memory_space<vmem>>, vector<2x8x64xbf16>,
    return
  }
  func.func @transform_0(%arg0: i32) -> (i32, i32, i32) {
    %c0_i32 = arith.constant 0 : i32
    %c0_i32_0 = arith.constant 0 : i32
    %c0_i32_1 = arith.constant 0 : i32
    return %arg0, %c0_i32, %c0_i32_0 : i32, i32, i32
  }
  func.func @transform_1(%arg0: i32) -> (i32, i32) {
    %c0_i32 = arith.constant 0 : i32
    %c0_i32_0 = arith.constant 0 : i32
    %c0_i32_1 = arith.constant 0 : i32
    return %c0_i32, %c0_i32_0 : i32, i32
  }
  func.func @transform_2(%arg0: i32) -> (i32, i32) {
    %c0_i32 = arith.constant 0 : i32
    %c0_i32_0 = arith.constant 0 : i32
    %c0_i32_1 = arith.constant 0 : i32
    return %c0_i32, %c0_i32_0 : i32, i32
  }
  func.func @transform_3(%arg0: i32) -> (i32, i32) {
    %c0_i32 = arith.constant 0 : i32
    %c0_i32_0 = arith.constant 0 : i32
    %c0_i32_1 = arith.constant 0 : i32
    return %c0_i32, %c0_i32_0 : i32, i32
  }
  func.func @transform_4(%arg0: i32) -> (i32, i32) {
    %c0_i32 = arith.constant 0 : i32
    %c0_i32_0 = arith.constant 0 : i32
    %c0_i32_1 = arith.constant 0 : i32
    return %c0_i32, %c0_i32_0 : i32, i32
  }
  func.func @transform_5(%arg0: i32) -> (i32, i32, i32) {
    %c0_i32 = arith.constant 0 : i32
    %c0_i32_0 = arith.constant 0 : i32
    %c0_i32_1 = arith.constant 0 : i32
    return %arg0, %c0_i32, %c0_i32_0 : i32, i32, i32
  }
}

module attributes {stable_mosaic.version = 11 : i64} {
  func.func @kernel(%arg0: i32, %arg1: memref<2x8x64xbf16, #tpu.memory_space<vmem>>, %arg2: memref<192x128xbf16, #tpu.memory_space<vmem>>, %arg3: memref<1x128xf32, #tpu.memory_space<vmem>>, %arg4: memref<384x128xbf16, #tpu.memory_space<vmem>>, %arg5: memref<1x128xf32, #tpu.memory_space<vmem>>, %arg6: memref<1024x128xbf16, #tpu.memory_space<vmem>>, %arg7: memref<1x128xf32, #tpu.memory_space<vmem>>, %arg8: memref<2x1x128xf32, #tpu.memory_space<vmem>>) attributes {dimension_semantics = [#tpu.dimension_semantics<parallel>], iteration_bounds = array<i64: 1>, scalar_prefetch = 0 : i64, scratch_operands = 0 : i64, tpu.core_type = #tpu.core_type<tc>, window_params = [{transform_indices = @transform_0, window_bounds = array<i64: 2, 8, 64>}, {pipeline_mode = #tpu.pipeline_mode<synchronous>, transform_indices = @transform_1, window_bounds = array<i64: 192, 128>}, {pipeline_mode = #tpu.pipeline_mode<synchronous>, transform_indices = @transform_2, window_bounds = array<i64: 1, 128>}, {pipeline_mode = #tpu.pipeline_mode<synchronous>, transform_indices = @transform_3, window_bounds = array<i64: 384, 128>}, {pipeline_mode = #tpu.pipeline_mode<synchronous>, transform_indices = @transform_4, window_bounds = array<i64: 1, 128>}, {pipeline_mode = #tpu.pipeline_mode<synchronous>, transform_indices = @transform_5, window_bounds = array<i64: 1024, 128>}, {pipeline_mode = #tpu.pipeline_mode<synchronous>, transform_indices = @transform_6, window_bounds = array<i64: 1, 128>}, {transform_indices = @transform_7, window_bounds = array<i64: 2, 1, 128>}]} {
    %c0 = arith.constant 0 : index
    %c0_0 = arith.constant 0 : index
    %c0_1 = arith.constant 0 : index
    %0 = vector.load %arg1[%c0, %c0_0, %c0_1] : memref<2x8x64xbf16, #tpu.memory_space<vmem>>, vector<2x8x64xbf16>
    %cst = arith.constant 0.000000e+00 : bf16
    %1 = vector.broadcast %cst : bf16 to vector<2x1x64xbf16>
    %2 = tpu.concatenate %1, %0, %1 in 1 : vector<2x1x64xbf16>, vector<2x8x64xbf16>, vector<2x1x64xbf16> -> vector<2x10x64xbf16>
    %3 = vector.extract_strided_slice %2 {offsets = [0, 0, 0], sizes = [2, 8, 64], strides = [1, 1, 1]} : vector<2x10x64xbf16> to vector<2x8x64xbf16>
    %4 = vector.extract_strided_slice %2 {offsets = [0, 1, 0], sizes = [2, 8, 64], strides = [1, 1, 1]} : vector<2x10x64xbf16> to vector<2x8x64xbf16>
    %5 = vector.extract_strided_slice %2 {offsets = [0, 2, 0], sizes = [2, 8, 64], strides = [1, 1, 1]} : vector<2x10x64xbf16> to vector<2x8x64xbf16>
    %6 = tpu.concatenate %3, %4, %5 in 2 : vector<2x8x64xbf16>, vector<2x8x64xbf16>, vector<2x8x64xbf16> -> vector<2x8x192xbf16>
    %7 = vector.shape_cast %6 : vector<2x8x192xbf16> to vector<16x192xbf16>
    %c0_2 = arith.constant 0 : index
    %c0_3 = arith.constant 0 : index
    %8 = vector.load %arg2[%c0_2, %c0_3] : memref<192x128xbf16, #tpu.memory_space<vmem>>, vector<192x128xbf16>
    %cst_4 = arith.constant dense<0.000000e+00> : vector<16x128xf32>
    %9 = tpu.matmul %7, %8, %cst_4 {dimension_numbers = #tpu.dot_dimension_numbers<[1], [0], [0], [1], [0, 0, 1, 1], [], []>} : vector<16x192xbf16>, vector<192x128xbf16>, vector<16x128xf32> -> vector<16x128xf32>
    %c0_5 = arith.constant 0 : index
    %c0_6 = arith.constant 0 : index
    %10 = vector.load %arg3[%c0_5, %c0_6] : memref<1x128xf32, #tpu.memory_space<vmem>>, vector<1x128xf32>
    %11 = vector.broadcast %10 : vector<1x128xf32> to vector<16x128xf32>
    %12 = arith.addf %9, %11 : vector<16x128xf32>
    %cst_7 = arith.constant 0.000000e+00 : f32
    %13 = vector.broadcast %cst_7 : f32 to vector<16x128xf32>
    %14 = arith.maximumf %12, %13 : vector<16x128xf32>
    %15 = arith.truncf %14 : vector<16x128xf32> to vector<16x128xbf16>
    %16 = vector.shape_cast %15 : vector<16x128xbf16> to vector<2x8x128xbf16>
    %cst_8 = arith.constant 0.000000e+00 : bf16
    %17 = vector.broadcast %cst_8 : bf16 to vector<2x1x128xbf16>
    %18 = tpu.concatenate %17, %16, %17 in 1 : vector<2x1x128xbf16>, vector<2x8x128xbf16>, vector<2x1x128xbf16> -> vector<2x10x128xbf16>
    %19 = vector.extract_strided_slice %18 {offsets = [0, 0, 0], sizes = [2, 8, 128], strides = [1, 1, 1]} : vector<2x10x128xbf16> to vector<2x8x128xbf16>
    %20 = vector.extract_strided_slice %18 {offsets = [0, 1, 0], sizes = [2, 8, 128], strides = [1, 1, 1]} : vector<2x10x128xbf16> to vector<2x8x128xbf16>
    %21 = vector.extract_strided_slice %18 {offsets = [0, 2, 0], sizes = [2, 8, 128], strides = [1, 1, 1]} : vector<2x10x128xbf16> to vector<2x8x128xbf16>
    %22 = tpu.concatenate %19, %20, %21 in 2 : vector<2x8x128xbf16>, vector<2x8x128xbf16>, vector<2x8x128xbf16> -> vector<2x8x384xbf16>
    %23 = vector.shape_cast %22 : vector<2x8x384xbf16> to vector<16x384xbf16>
    %c0_9 = arith.constant 0 : index
    %c0_10 = arith.constant 0 : index
    %24 = vector.load %arg4[%c0_9, %c0_10] : memref<384x128xbf16, #tpu.memory_space<vmem>>, vector<384x128xbf16>
    %cst_11 = arith.constant dense<0.000000e+00> : vector<16x128xf32>
    %25 = tpu.matmul %23, %24, %cst_11 {dimension_numbers = #tpu.dot_dimension_numbers<[1], [0], [0], [1], [0, 0, 1, 1], [], []>} : vector<16x384xbf16>, vector<384x128xbf16>, vector<16x128xf32> -> vector<16x128xf32>
    %c0_12 = arith.constant 0 : index
    %c0_13 = arith.constant 0 : index
    %26 = vector.load %arg5[%c0_12, %c0_13] : memref<1x128xf32, #tpu.memory_space<vmem>>, vector<1x128xf32>
    %27 = vector.broadcast %26 : vector<1x128xf32> to vector<16x128xf32>
    %28 = arith.addf %25, %27 : vector<16x128xf32>
    %cst_14 = arith.constant 0.000000e+00 : f32
    %29 = vector.broadcast %cst_14 : f32 to vector<16x128xf32>
    %30 = arith.maximumf %28, %29 : vector<16x128xf32>
    %31 = arith.truncf %30 : vector<16x128xf32> to vector<16x128xbf16>
    %32 = vector.shape_cast %31 : vector<16x128xbf16> to vector<2x1024xbf16>
    %c0_15 = arith.constant 0 : index
    %c0_16 = arith.constant 0 : index
    %33 = vector.load %arg6[%c0_15, %c0_16] : memref<1024x128xbf16, #tpu.memory_space<vmem>>, vector<1024x128xbf16>
    %cst_17 = arith.constant dense<0.000000e+00> : vector<2x128xf32>
    %34 = tpu.matmul %32, %33, %cst_17 {dimension_numbers = #tpu.dot_dimension_numbers<[1], [0], [0], [1], [0, 0, 1, 1], [], []>} : vector<2x1024xbf16>, vector<1024x128xbf16>, vector<2x128xf32> -> vector<2x128xf32>
    %c0_18 = arith.constant 0 : index
    %c0_19 = arith.constant 0 : index
    %35 = vector.load %arg7[%c0_18, %c0_19] : memref<1x128xf32, #tpu.memory_space<vmem>>, vector<1x128xf32>
    %36 = vector.broadcast %35 : vector<1x128xf32> to vector<2x128xf32>
    %37 = arith.addf %34, %36 : vector<2x128xf32>
    %38 = vector.shape_cast %37 : vector<2x128xf32> to vector<2x1x128xf32>
    %c0_20 = arith.constant 0 : index
    %c0_21 = arith.constant 0 : index
    %c0_22 = arith.constant 0 : index
    %39 = vector.load %arg8[%c0_20, %c0_21, %c0_22] : memref<2x1x128xf32, #tpu.memory_space<vmem>>, vector<2x1x128xf32>
    tpu.vector_store %arg8[%c0_20, %c0_21, %c0_22], %38 {strides = array<i32>} : memref<2x1x128xf32, #tpu.memory_space<vmem>>, vector<2x1x128xf32>,
    return
  }
  func.func @transform_0(%arg0: i32) -> (i32, i32, i32) {
    %c0_i32 = arith.constant 0 : i32
    %c0_i32_0 = arith.constant 0 : i32
    %c0_i32_1 = arith.constant 0 : i32
    return %arg0, %c0_i32, %c0_i32_0 : i32, i32, i32
  }
  func.func @transform_1(%arg0: i32) -> (i32, i32) {
    %c0_i32 = arith.constant 0 : i32
    %c0_i32_0 = arith.constant 0 : i32
    %c0_i32_1 = arith.constant 0 : i32
    return %c0_i32, %c0_i32_0 : i32, i32
  }
  func.func @transform_2(%arg0: i32) -> (i32, i32) {
    %c0_i32 = arith.constant 0 : i32
    %c0_i32_0 = arith.constant 0 : i32
    %c0_i32_1 = arith.constant 0 : i32
    return %c0_i32, %c0_i32_0 : i32, i32
  }
  func.func @transform_3(%arg0: i32) -> (i32, i32) {
    %c0_i32 = arith.constant 0 : i32
    %c0_i32_0 = arith.constant 0 : i32
    %c0_i32_1 = arith.constant 0 : i32
    return %c0_i32, %c0_i32_0 : i32, i32
  }
  func.func @transform_4(%arg0: i32) -> (i32, i32) {
    %c0_i32 = arith.constant 0 : i32
    %c0_i32_0 = arith.constant 0 : i32
    %c0_i32_1 = arith.constant 0 : i32
    return %c0_i32, %c0_i32_0 : i32, i32
  }
  func.func @transform_5(%arg0: i32) -> (i32, i32) {
    %c0_i32 = arith.constant 0 : i32
    %c0_i32_0 = arith.constant 0 : i32
    %c0_i32_1 = arith.constant 0 : i32
    return %c0_i32, %c0_i32_0 : i32, i32
  }
  func.func @transform_6(%arg0: i32) -> (i32, i32) {
    %c0_i32 = arith.constant 0 : i32
    %c0_i32_0 = arith.constant 0 : i32
    %c0_i32_1 = arith.constant 0 : i32
    return %c0_i32, %c0_i32_0 : i32, i32
  }
  func.func @transform_7(%arg0: i32) -> (i32, i32, i32) {
    %c0_i32 = arith.constant 0 : i32
    %c0_i32_0 = arith.constant 0 : i32
    %c0_i32_1 = arith.constant 0 : i32
    return %arg0, %c0_i32, %c0_i32_0 : i32, i32, i32
  }
}

</mosaic_0001>

<llo_original>
// kernel: _lambda_.3
$region0: #{_lambda_.3}
  #allocation0 [shape = 'u32[]', space=smem, size = 0x4, offset = 0x4, fixed_abs, tag = 'smem constant byte address 0x4 - core index']
  #allocation1 [shape = 'u32[144,128]{1,0:T(1,128)}', space=vmem, size = 0x12000, scoped, tag = 'internal scratch']
  %s0 = inlined_call_operand.vmem [shape: bf16[2,8,64], index: 0, kind: input, shape index: {}]
  %s1 = inlined_call_operand.hbm [shape: bf16[192,128], index: 1, kind: input, shape index: {}]
  %s2 = inlined_call_operand.vmem [shape: f32[1,128], index: 2, kind: input, shape index: {}]
  %s3 = inlined_call_operand.hbm [shape: bf16[384,128], index: 3, kind: input, shape index: {}]
  %s4 = inlined_call_operand.vmem [shape: f32[1,128], index: 4, kind: input, shape index: {}]
  %s5 = inlined_call_operand.vmem [shape: bf16[1024,128], index: 5, kind: input, shape index: {}]
  %s6 = inlined_call_operand.vmem [shape: f32[1,128], index: 6, kind: input, shape index: {}]
  %s7 = inlined_call_operand.hbm [shape: f32[2,1,128], index: 7, kind: output, shape index: {}]
  %s8 = sld [smem:[#allocation0]]
  $region46: #{_lambda_.3} parent=0
    _
  %s10 = ssub.s32 1, %s8
  %s11 = scalar_select 0, %s10, %s8
  $region1: #{_lambda_.3} parent=0
    #allocation2 [shape = 'u8[49152]{0}', space=vmem, size = 0xc000, scoped, tag = 'input window, operand 1, single buffered']
    #allocation3 [shape = 's32[1]{0}', space=sflag, size = 0x4, scoped, tag = 'scoped memory for _lambda_.3']
    #allocation4 [shape = 's32[1]{0}', space=sflag, size = 0x4, scoped, tag = 'scoped memory for _lambda_.3']
    #allocation5 [shape = 'u8[98304]{0}', space=vmem, size = 0x18000, scoped, tag = 'input window, operand 3, single buffered']
    #allocation6 [shape = 's32[1]{0}', space=sflag, size = 0x4, scoped, tag = 'scoped memory for _lambda_.3']
    #allocation7 [shape = 'u8[1024]{0}', space=vmem, size = 0x400, scoped, tag = 'output window, operand 0, single buffered']
    %12 = vsyncpa [#allocation3], 0
    %13 = vsyncpa [#allocation6], 0
    %14 = vsyncpa [#allocation4], 0
    // Predicated region
    $region2: #{_lambda_.3} parent=1 // pred_check
      _
    $region3: #{_lambda_.3} parent=1 // pred_check_branch
      %16 = sbr.rel (0) target = $region5
    $region4: #{_lambda_.3} parent=1 // pred_region
      _
    $region5: #{_lambda_.3} parent=1 // pred_fallthru
      _
    // Predicated region
    $region6: #{_lambda_.3} parent=1 // pred_check
      _
    $region7: #{_lambda_.3} parent=1 // pred_check_branch
      %18 = sbr.rel (0) target = $region9
    $region8: #{_lambda_.3} parent=1 // pred_region
      %s20 = ssub.s32 1536, 1536
      %21 = vsyncadd [#allocation3], %s20
      %s22 = sshll.u32 [#allocation2], 4
      %s23 = int_to_ptr.vmem [resolvable:$true] %s22
      %28 = dma.hbm_to_vmem [thread:$0]  %s1, 1536, %s23, [#allocation3], 64, 64, 4
    $region9: #{_lambda_.3} parent=1 // pred_fallthru
      _
    // Predicated region
    $region10: #{_lambda_.3} parent=1 // pred_check
      _
    $region11: #{_lambda_.3} parent=1 // pred_check_branch
      %30 = sbr.rel (0) target = $region13
    $region12: #{_lambda_.3} parent=1 // pred_region
      _
    $region13: #{_lambda_.3} parent=1 // pred_fallthru
      _
    // Predicated region
    $region14: #{_lambda_.3} parent=1 // pred_check
      _
    $region15: #{_lambda_.3} parent=1 // pred_check_branch
      %32 = sbr.rel (0) target = $region17
    $region16: #{_lambda_.3} parent=1 // pred_region
      %s34 = ssub.s32 3072, 3072
      %35 = vsyncadd [#allocation6], %s34
      %s36 = sshll.u32 [#allocation5], 4
      %s37 = int_to_ptr.vmem [resolvable:$true] %s36
      %42 = dma.hbm_to_vmem [thread:$0]  %s3, 3072, %s37, [#allocation6], 64, 64, 4
    $region17: #{_lambda_.3} parent=1 // pred_fallthru
      _
    // Predicated region
    $region18: #{_lambda_.3} parent=1 // pred_check
      _
    $region19: #{_lambda_.3} parent=1 // pred_check_branch
      %44 = sbr.rel (0) target = $region21
    $region20: #{_lambda_.3} parent=1 // pred_region
      _
    $region21: #{_lambda_.3} parent=1 // pred_fallthru
      _
    // Predicated region
    $region22: #{_lambda_.3} parent=1 // pred_check
      _
    $region23: #{_lambda_.3} parent=1 // pred_check_branch
      %46 = sbr.rel (0) target = $region25
    $region24: #{_lambda_.3} parent=1 // pred_region
      _
    $region25: #{_lambda_.3} parent=1 // pred_fallthru
      _
    // Predicated region
    $region26: #{_lambda_.3} parent=1 // pred_check
      _
    $region27: #{_lambda_.3} parent=1 // pred_check_branch
      %48 = sbr.rel (0) target = $region29
    $region28: #{_lambda_.3} parent=1 // pred_region
      _
    $region29: #{_lambda_.3} parent=1 // pred_fallthru
      _
    // Predicated region
    $region30: #{_lambda_.3} parent=1 // pred_check
      _
    $region31: #{_lambda_.3} parent=1 // pred_check_branch
      %50 = sbr.rel (0) target = $region33
    $region32: #{_lambda_.3} parent=1 // pred_region
      %51 = dma.done [#allocation3], 1536
    $region33: #{_lambda_.3} parent=1 // pred_fallthru
      _
    // Predicated region
    $region34: #{_lambda_.3} parent=1 // pred_check
      _
    $region35: #{_lambda_.3} parent=1 // pred_check_branch
      %53 = sbr.rel (0) target = $region37
    $region36: #{_lambda_.3} parent=1 // pred_region
      %54 = dma.done [#allocation6], 3072
    $region37: #{_lambda_.3} parent=1 // pred_fallthru
      _
    %v56 = vld [vmem:[%s0] sm:$0xf]
    %v57 = vld [vmem:[%s0 + $0x4] sm:$0xf]
    %v60 = vunpack.c.l.b16 %v56
    %v61 = vunpack.c.l.b16 %v57
    %v62 = vpack.c.b16 %v60, %v60
    %v63 = vpack.c.b16 %v61, %v61
    %v65 = vshrl.u32 %v62, 16
    %v67 = vrot.slane %v65, 7
    %v68 = vshll.u32 %v62, 16
    %v70 = vor.u32 %v67, %v68
    %v72 = vshrl.u32 %v63, 16
    %v74 = vrot.slane %v72, 7
    %v75 = vshll.u32 %v63, 16
    %v77 = vor.u32 %v74, %v75
    %vm80 = vcmask 1040384
    %vm81 = vsmask.f32 256
    %vm82 = vmand %vm80, %vm81
    %v83 = vsel %vm82, 0, %v70
    %v84 = vsel %vm82, 0, %v77
    %vm85 = vcmask 1044480
    %vm86 = vsmask.f32 4352
    %vm87 = vmand %vm85, %vm86
    %v88 = vsel %vm87, %v83, 0
    %v89 = vsel %vm87, %v84, 0
    %v91 = vshrl.u32 %v88, 16
    %v93 = vshll.u32 %v88, 16
    %v95 = vrot.slane %v93, 1
    %v96 = vor.u32 %v91, %v95
    %v98 = vshrl.u32 %v89, 16
    %v100 = vshll.u32 %v89, 16
    %v102 = vrot.slane %v100, 1
    %v103 = vor.u32 %v98, %v102
    %104 = vrot.lane.b32.xlu0 %v96, 64
    %v105 = vpop.permute.xlu0 %104
    %106 = vrot.lane.b32.xlu0 %v103, 64
    %v107 = vpop.permute.xlu0 %106
    %v110 = vrot.slane %v88, 1
    %v111 = vrot.slane %v89, 1
    %vm112 = vcmask 523264
    %v114 = vsel %vm112, %v88, %v105
    %v116 = vsel %vm112, %v89, %v107
    %v119 = vunpack.c.l.b16 %v114
    %v120 = vunpack.c.l.b16 %v110
    %v121 = vunpack.c.l.b16 %v116
    %v122 = vunpack.c.l.b16 %v111
    %v123 = vld [vmem:[#allocation2] sm:$0xf]
    %v124 = vld [vmem:[#allocation2 + $0x4] sm:$0xf]
    %v125 = vld [vmem:[#allocation2 + $0x8] sm:$0xf]
    %v126 = vld [vmem:[#allocation2 + $0xc] sm:$0xf]
    %v127 = vld [vmem:[#allocation2 + $0x10] sm:$0xf]
    %v128 = vld [vmem:[#allocation2 + $0x14] sm:$0xf]
    %v129 = vld [vmem:[#allocation2 + $0x18] sm:$0xf]
    %v130 = vld [vmem:[#allocation2 + $0x1c] sm:$0xf]
    %v131 = vld [vmem:[#allocation2 + $0x20] sm:$0xf]
    %v132 = vld [vmem:[#allocation2 + $0x24] sm:$0xf]
    %v133 = vld [vmem:[#allocation2 + $0x28] sm:$0xf]
    %v134 = vld [vmem:[#allocation2 + $0x2c] sm:$0xf]
    %v135 = vld [vmem:[#allocation2 + $0x30] sm:$0xf]
    %v136 = vld [vmem:[#allocation2 + $0x34] sm:$0xf]
    %v137 = vld [vmem:[#allocation2 + $0x38] sm:$0xf]
    %v138 = vld [vmem:[#allocation2 + $0x3c] sm:$0xf]
    %v139 = vld [vmem:[#allocation2 + $0x40] sm:$0xf]
    %v140 = vld [vmem:[#allocation2 + $0x44] sm:$0xf]
    %v141 = vld [vmem:[#allocation2 + $0x48] sm:$0xf]
    %v142 = vld [vmem:[#allocation2 + $0x4c] sm:$0xf]
    %v143 = vld [vmem:[#allocation2 + $0x50] sm:$0xf]
    %v144 = vld [vmem:[#allocation2 + $0x54] sm:$0xf]
    %v145 = vld [vmem:[#allocation2 + $0x58] sm:$0xf]
    %v146 = vld [vmem:[#allocation2 + $0x5c] sm:$0xf]
    %v147 = vld [vmem:[%s2] sm:$0x1]
    %v149 = vlaneseq
    %v150 = vshrl.u32 %v149, 7
    %v151 = vsub.s32 0, %v150
    %v152 = vrot.slane %v147, %v151
    %v154 = vpack.c.b16 %v121, %v119
    %v155 = vpack.c.b16 %v122, %v120
    %v181 = vunpack.c.l.b16 %v123
    %v182 = vunpack.c.l.b16 %v124
    %v183 = vunpack.c.l.b16 %v125
    %v184 = vunpack.c.l.b16 %v126
    %v185 = vunpack.c.l.b16 %v127
    %v186 = vunpack.c.l.b16 %v128
    %v187 = vunpack.c.l.b16 %v129
    %v188 = vunpack.c.l.b16 %v130
    %v189 = vunpack.c.l.b16 %v131
    %v190 = vunpack.c.l.b16 %v132
    %v191 = vunpack.c.l.b16 %v133
    %v192 = vunpack.c.l.b16 %v134
    %v193 = vunpack.c.l.b16 %v135
    %v194 = vunpack.c.l.b16 %v136
    %v195 = vunpack.c.l.b16 %v137
    %v196 = vunpack.c.l.b16 %v138
    %v197 = vunpack.c.l.b16 %v139
    %v198 = vunpack.c.l.b16 %v140
    %v199 = vunpack.c.l.b16 %v141
    %v200 = vunpack.c.l.b16 %v142
    %v201 = vunpack.c.l.b16 %v143
    %v202 = vunpack.c.l.b16 %v144
    %v203 = vunpack.c.l.b16 %v145
    %v204 = vunpack.c.l.b16 %v146
    %v205 = vpack.c.b16 %v182, %v181
    %v206 = vpack.c.b16 %v184, %v183
    %v207 = vpack.c.b16 %v186, %v185
    %v208 = vpack.c.b16 %v188, %v187
    %v209 = vpack.c.b16 %v190, %v189
    %v210 = vpack.c.b16 %v192, %v191
    %v211 = vpack.c.b16 %v194, %v193
    %v212 = vpack.c.b16 %v196, %v195
    %v213 = vpack.c.b16 %v198, %v197
    %v214 = vpack.c.b16 %v200, %v199
    %v215 = vpack.c.b16 %v202, %v201
    %v216 = vpack.c.b16 %v204, %v203
    %v230 = vsel %vm112, %v155, 0
    %232 = vmatprep.subr.bf16.mxu0 0
    %233 = vmatpush1.bf16.msra.mxu0 %v212
    %234 = vmatprep.subr.bf16.mxu0 0
    %235 = vmatpush1.bf16.msra.mxu0 %v211
    %236 = vmatprep.subr.bf16.mxu0 0
    %237 = vmatpush1.bf16.msra.mxu0 %v210
    %238 = vmatprep.subr.bf16.mxu0 0
    %239 = vmatpush1.bf16.msra.mxu0 %v209
    %240 = vmatprep.subr.bf16.mxu0 0
    %241 = vmatpush1.bf16.msra.mxu0 %v208
    %242 = vmatprep.subr.bf16.mxu0 0
    %243 = vmatpush1.bf16.msra.mxu0 %v207
    %244 = vmatprep.subr.bf16.mxu0 0
    %245 = vmatpush1.bf16.msra.mxu0 %v206
    %246 = vmatprep.subr.bf16.mxu0 0
    %247 = vmatpush1.bf16.msra.mxu0 %v205
    %248 = vmatprep.subr.bf16.mxu0 0
    %249 = vmatpush2.bf16.msra.mxu0 0
    %250 = vmatprep.subr.bf16.mxu0 0
    %251 = vmatpush2.bf16.msra.mxu0 0
    %252 = vmatprep.subr.bf16.mxu0 0
    %253 = vmatpush2.bf16.msra.mxu0 0
    %254 = vmatprep.subr.bf16.mxu0 0
    %255 = vmatpush2.bf16.msra.mxu0 0
    %256 = vmatprep.subr.bf16.mxu0 0
    %257 = vmatpush2.bf16.msra.mxu0 %v216
    %258 = vmatprep.subr.bf16.mxu0 0
    %259 = vmatpush2.bf16.msra.mxu0 %v215
    %260 = vmatprep.subr.bf16.mxu0 0
    %261 = vmatpush2.bf16.msra.mxu0 %v214
    %262 = vmatprep.subr.bf16.mxu0 0
    %263 = vmatpush2.bf16.msra.mxu0 %v213
    %264 = vmatprep.mubr.bf16.mxu0 %v230
    %265 = vmatmul.mubr.bf16.gmra.mxu0 %v154
    %v266 = vpop.f32.mrf.mxu0
    %v267 = vadd.f32 %v152, %v266
    %v268 = vpop.f32.mrf.mxu0
    %v269 = vpop.f32.mrf.mxu0
    %v270 = vadd.f32 %v152, %v269
    %v271 = vpop.f32.mrf.mxu0
    %272 = vdwg.mxu0
    %v273 = vmax.f32 %v267, 0.0
    %v274 = vmax.f32 %v270, 0.0
    %v275 = vpack.c.bf16 %v274, %v273
    %v277 = vunpack.c.l.b16 %v275
    %v278 = vunpack.c.h.b16 %v275
    %v279 = vpack.c.b16 %v277, %v277
    %v280 = vpack.c.b16 %v278, %v278
    %v282 = vshrl.u32 %v279, 16
    %v284 = vrot.slane %v282, 7
    %v285 = vshll.u32 %v279, 16
    %v287 = vor.u32 %v284, %v285
    %v289 = vshrl.u32 %v280, 16
    %v291 = vrot.slane %v289, 7
    %v292 = vshll.u32 %v280, 16
    %v294 = vor.u32 %v291, %v292
    %v297 = vsel %vm82, 0, %v287
    %v298 = vsel %vm82, 0, %v294
    %v299 = vsel %vm87, %v297, 0
    %v300 = vsel %vm87, %v298, 0
    %v302 = vshrl.u32 %v299, 16
    %v304 = vshll.u32 %v299, 16
    %v306 = vrot.slane %v304, 1
    %v307 = vor.u32 %v302, %v306
    %v309 = vshrl.u32 %v300, 16
    %v311 = vshll.u32 %v300, 16
    %v313 = vrot.slane %v311, 1
    %v314 = vor.u32 %v309, %v313
    %v317 = vrot.slane %v299, 1
    %v318 = vrot.slane %v300, 1
    %v319 = vunpack.c.l.b16 %v299
    %v320 = vunpack.c.l.b16 %v307
    %v321 = vunpack.c.l.b16 %v317
    %v322 = vunpack.c.l.b16 %v300
    %v323 = vunpack.c.l.b16 %v314
    %v324 = vunpack.c.l.b16 %v318
    %v325 = vld [vmem:[#allocation5] sm:$0xf]
    %v326 = vld [vmem:[#allocation5 + $0x4] sm:$0xf]
    %v327 = vld [vmem:[#allocation5 + $0x8] sm:$0xf]
    %v328 = vld [vmem:[#allocation5 + $0xc] sm:$0xf]
    %v329 = vld [vmem:[#allocation5 + $0x10] sm:$0xf]
    %v330 = vld [vmem:[#allocation5 + $0x14] sm:$0xf]
    %v331 = vld [vmem:[#allocation5 + $0x18] sm:$0xf]
    %v332 = vld [vmem:[#allocation5 + $0x1c] sm:$0xf]
    %v333 = vld [vmem:[#allocation5 + $0x20] sm:$0xf]
    %v334 = vld [vmem:[#allocation5 + $0x24] sm:$0xf]
    %v335 = vld [vmem:[#allocation5 + $0x28] sm:$0xf]
    %v336 = vld [vmem:[#allocation5 + $0x2c] sm:$0xf]
    %v337 = vld [vmem:[#allocation5 + $0x30] sm:$0xf]
    %v338 = vld [vmem:[#allocation5 + $0x34] sm:$0xf]
    %v339 = vld [vmem:[#allocation5 + $0x38] sm:$0xf]
    %v340 = vld [vmem:[#allocation5 + $0x3c] sm:$0xf]
    %v341 = vld [vmem:[#allocation5 + $0x40] sm:$0xf]
    %v342 = vld [vmem:[#allocation5 + $0x44] sm:$0xf]
    %v343 = vld [vmem:[#allocation5 + $0x48] sm:$0xf]
    %v344 = vld [vmem:[#allocation5 + $0x4c] sm:$0xf]
    %v345 = vld [vmem:[#allocation5 + $0x50] sm:$0xf]
    %v346 = vld [vmem:[#allocation5 + $0x54] sm:$0xf]
    %v347 = vld [vmem:[#allocation5 + $0x58] sm:$0xf]
    %v348 = vld [vmem:[#allocation5 + $0x5c] sm:$0xf]
    %v349 = vld [vmem:[#allocation5 + $0x60] sm:$0xf]
    %v350 = vld [vmem:[#allocation5 + $0x64] sm:$0xf]
    %v351 = vld [vmem:[#allocation5 + $0x68] sm:$0xf]
    %v352 = vld [vmem:[#allocation5 + $0x6c] sm:$0xf]
    %v353 = vld [vmem:[#allocation5 + $0x70] sm:$0xf]
    %v354 = vld [vmem:[#allocation5 + $0x74] sm:$0xf]
    %v355 = vld [vmem:[#allocation5 + $0x78] sm:$0xf]
    %v356 = vld [vmem:[#allocation5 + $0x7c] sm:$0xf]
    %v357 = vld [vmem:[#allocation5 + $0x80] sm:$0xf]
    %v358 = vld [vmem:[#allocation5 + $0x84] sm:$0xf]
    %v359 = vld [vmem:[#allocation5 + $0x88] sm:$0xf]
    %v360 = vld [vmem:[#allocation5 + $0x8c] sm:$0xf]
    %v361 = vld [vmem:[#allocation5 + $0x90] sm:$0xf]
    %v362 = vld [vmem:[#allocation5 + $0x94] sm:$0xf]
    %v363 = vld [vmem:[#allocation5 + $0x98] sm:$0xf]
    %v364 = vld [vmem:[#allocation5 + $0x9c] sm:$0xf]
    %v365 = vld [vmem:[#allocation5 + $0xa0] sm:$0xf]
    %v366 = vld [vmem:[#allocation5 + $0xa4] sm:$0xf]
    %v367 = vld [vmem:[#allocation5 + $0xa8] sm:$0xf]
    %v368 = vld [vmem:[#allocation5 + $0xac] sm:$0xf]
    %v369 = vld [vmem:[#allocation5 + $0xb0] sm:$0xf]
    %v370 = vld [vmem:[#allocation5 + $0xb4] sm:$0xf]
    %v371 = vld [vmem:[#allocation5 + $0xb8] sm:$0xf]
    %v372 = vld [vmem:[#allocation5 + $0xbc] sm:$0xf]
    %v373 = vld [vmem:[%s4] sm:$0x1]
    %v375 = vlaneseq
    %v376 = vshrl.u32 %v375, 7
    %v377 = vsub.s32 0, %v376
    %v378 = vrot.slane %v373, %v377
    %v380 = vpack.c.b16 %v322, %v319
    %v381 = vpack.c.b16 %v323, %v320
    %v382 = vpack.c.b16 %v324, %v321
    %v434 = vunpack.c.l.b16 %v325
    %v435 = vunpack.c.l.b16 %v326
    %v436 = vunpack.c.l.b16 %v327
    %v437 = vunpack.c.l.b16 %v328
    %v438 = vunpack.c.l.b16 %v329
    %v439 = vunpack.c.l.b16 %v330
    %v440 = vunpack.c.l.b16 %v331
    %v441 = vunpack.c.l.b16 %v332
    %v442 = vunpack.c.l.b16 %v333
    %v443 = vunpack.c.l.b16 %v334
    %v444 = vunpack.c.l.b16 %v335
    %v445 = vunpack.c.l.b16 %v336
    %v446 = vunpack.c.l.b16 %v337
    %v447 = vunpack.c.l.b16 %v338
    %v448 = vunpack.c.l.b16 %v339
    %v449 = vunpack.c.l.b16 %v340
    %v450 = vunpack.c.l.b16 %v341
    %v451 = vunpack.c.l.b16 %v342
    %v452 = vunpack.c.l.b16 %v343
    %v453 = vunpack.c.l.b16 %v344
    %v454 = vunpack.c.l.b16 %v345
    %v455 = vunpack.c.l.b16 %v346
    %v456 = vunpack.c.l.b16 %v347
    %v457 = vunpack.c.l.b16 %v348
    %v458 = vunpack.c.l.b16 %v349
    %v459 = vunpack.c.l.b16 %v350
    %v460 = vunpack.c.l.b16 %v351
    %v461 = vunpack.c.l.b16 %v352
    %v462 = vunpack.c.l.b16 %v353
    %v463 = vunpack.c.l.b16 %v354
    %v464 = vunpack.c.l.b16 %v355
    %v465 = vunpack.c.l.b16 %v356
    %v466 = vunpack.c.l.b16 %v357
    %v467 = vunpack.c.l.b16 %v358
    %v468 = vunpack.c.l.b16 %v359
    %v469 = vunpack.c.l.b16 %v360
    %v470 = vunpack.c.l.b16 %v361
    %v471 = vunpack.c.l.b16 %v362
    %v472 = vunpack.c.l.b16 %v363
    %v473 = vunpack.c.l.b16 %v364
    %v474 = vunpack.c.l.b16 %v365
    %v475 = vunpack.c.l.b16 %v366
    %v476 = vunpack.c.l.b16 %v367
    %v477 = vunpack.c.l.b16 %v368
    %v478 = vunpack.c.l.b16 %v369
    %v479 = vunpack.c.l.b16 %v370
    %v480 = vunpack.c.l.b16 %v371
    %v481 = vunpack.c.l.b16 %v372
    %v482 = vpack.c.b16 %v435, %v434
    %v483 = vpack.c.b16 %v437, %v436
    %v484 = vpack.c.b16 %v439, %v438
    %v485 = vpack.c.b16 %v441, %v440
    %v486 = vpack.c.b16 %v443, %v442
    %v487 = vpack.c.b16 %v445, %v444
    %v488 = vpack.c.b16 %v447, %v446
    %v489 = vpack.c.b16 %v449, %v448
    %v490 = vpack.c.b16 %v451, %v450
    %v491 = vpack.c.b16 %v453, %v452
    %v492 = vpack.c.b16 %v455, %v454
    %v493 = vpack.c.b16 %v457, %v456
    %v494 = vpack.c.b16 %v459, %v458
    %v495 = vpack.c.b16 %v461, %v460
    %v496 = vpack.c.b16 %v463, %v462
    %v497 = vpack.c.b16 %v465, %v464
    %v498 = vpack.c.b16 %v467, %v466
    %v499 = vpack.c.b16 %v469, %v468
    %v500 = vpack.c.b16 %v471, %v470
    %v501 = vpack.c.b16 %v473, %v472
    %v502 = vpack.c.b16 %v475, %v474
    %v503 = vpack.c.b16 %v477, %v476
    %v504 = vpack.c.b16 %v479, %v478
    %v505 = vpack.c.b16 %v481, %v480
    %530 = vmatprep.subr.bf16.mxu0 0
    %531 = vmatpush1.bf16.msra.mxu0 %v489
    %532 = vmatprep.subr.bf16.mxu0 0
    %533 = vmatpush1.bf16.msra.mxu0 %v488
    %534 = vmatprep.subr.bf16.mxu0 0
    %535 = vmatpush1.bf16.msra.mxu0 %v487
    %536 = vmatprep.subr.bf16.mxu0 0
    %537 = vmatpush1.bf16.msra.mxu0 %v486
    %538 = vmatprep.subr.bf16.mxu0 0
    %539 = vmatpush1.bf16.msra.mxu0 %v485
    %540 = vmatprep.subr.bf16.mxu0 0
    %541 = vmatpush1.bf16.msra.mxu0 %v484
    %542 = vmatprep.subr.bf16.mxu0 0
    %543 = vmatpush1.bf16.msra.mxu0 %v483
    %544 = vmatprep.subr.bf16.mxu0 0
    %545 = vmatpush1.bf16.msra.mxu0 %v482
    %546 = vmatprep.subr.bf16.mxu0 0
    %547 = vmatpush2.bf16.msra.mxu0 %v497
    %548 = vmatprep.subr.bf16.mxu0 0
    %549 = vmatpush2.bf16.msra.mxu0 %v496
    %550 = vmatprep.subr.bf16.mxu0 0
    %551 = vmatpush2.bf16.msra.mxu0 %v495
    %552 = vmatprep.subr.bf16.mxu0 0
    %553 = vmatpush2.bf16.msra.mxu0 %v494
    %554 = vmatprep.subr.bf16.mxu0 0
    %555 = vmatpush2.bf16.msra.mxu0 %v493
    %556 = vmatprep.subr.bf16.mxu0 0
    %557 = vmatpush2.bf16.msra.mxu0 %v492
    %558 = vmatprep.subr.bf16.mxu0 0
    %559 = vmatpush2.bf16.msra.mxu0 %v491
    %560 = vmatprep.subr.bf16.mxu0 0
    %561 = vmatpush2.bf16.msra.mxu0 %v490
    %562 = vmatprep.mubr.bf16.mxu0 %v381
    %563 = vmatmul.mubr.bf16.gmra.mxu0 %v380
    %v564 = vpop.f32.mrf.mxu0
    %v565 = vadd.f32 %v378, %v564
    %v566 = vpop.f32.mrf.mxu0
    %v567 = vpop.f32.mrf.mxu0
    %v568 = vadd.f32 %v378, %v567
    %v569 = vpop.f32.mrf.mxu0
    %570 = vdwg.mxu0
    %571 = vmatprep.subr.bf16.mxu0 0
    %572 = vmatpush1.bf16.msra.mxu0 %v505
    %573 = vmatprep.subr.bf16.mxu0 0
    %574 = vmatpush1.bf16.msra.mxu0 %v504
    %575 = vmatprep.subr.bf16.mxu0 0
    %576 = vmatpush1.bf16.msra.mxu0 %v503
    %577 = vmatprep.subr.bf16.mxu0 0
    %578 = vmatpush1.bf16.msra.mxu0 %v502
    %579 = vmatprep.subr.bf16.mxu0 0
    %580 = vmatpush1.bf16.msra.mxu0 %v501
    %581 = vmatprep.subr.bf16.mxu0 0
    %582 = vmatpush1.bf16.msra.mxu0 %v500
    %583 = vmatprep.subr.bf16.mxu0 0
    %584 = vmatpush1.bf16.msra.mxu0 %v499
    %585 = vmatprep.subr.bf16.mxu0 0
    %586 = vmatpush1.bf16.msra.mxu0 %v498
    %587 = vmatprep.subr.bf16.mxu0 0
    %588 = vmatpush2.bf16.msra.mxu0 0
    %589 = vmatprep.subr.bf16.mxu0 0
    %590 = vmatpush2.bf16.msra.mxu0 0
    %591 = vmatprep.subr.bf16.mxu0 0
    %592 = vmatpush2.bf16.msra.mxu0 0
    %593 = vmatprep.subr.bf16.mxu0 0
    %594 = vmatpush2.bf16.msra.mxu0 0
    %595 = vmatprep.subr.bf16.mxu0 0
    %596 = vmatpush2.bf16.msra.mxu0 0
    %597 = vmatprep.subr.bf16.mxu0 0
    %598 = vmatpush2.bf16.msra.mxu0 0
    %599 = vmatprep.subr.bf16.mxu0 0
    %600 = vmatpush2.bf16.msra.mxu0 0
    %601 = vmatprep.subr.bf16.mxu0 0
    %602 = vmatpush2.bf16.msra.mxu0 0
    %603 = vmatprep.mubr.bf16.mxu0 0
    %604 = vmatmul.mubr.bf16.gmra.mxu0 %v382
    %v605 = vpop.f32.mrf.mxu0
    %v606 = vadd.f32 %v565, %v605
    %v607 = vpop.f32.mrf.mxu0
    %v608 = vpop.f32.mrf.mxu0
    %v609 = vadd.f32 %v568, %v608
    %v610 = vpop.f32.mrf.mxu0
    %611 = vdwg.mxu0
    %v612 = vmax.f32 %v606, 0.0
    %v613 = vmax.f32 %v609, 0.0
    %v614 = vpack.c.bf16 %v613, %v612
    %v616 = vunpack.i.l.s16 %v614
    %v617 = vunpack.i.h.s16 %v614
    %v618 = vpack.c.b16 %v617, %v616
    %v619 = vunpack.i.l.s16 %v618
    %v620 = vunpack.i.h.s16 %v618
    %v621 = vpack.c.b16 %v620, %v619
    %v622 = vunpack.i.l.s16 %v621
    %v623 = vunpack.i.h.s16 %v621
    %v624 = vpack.c.b16 %v623, %v622
    %v625 = vld [vmem:[%s5] sm:$0xf]
    %v626 = vld [vmem:[%s5 + $0x4] sm:$0xf]
    %v627 = vld [vmem:[%s5 + $0x8] sm:$0xf]
    %v628 = vld [vmem:[%s5 + $0xc] sm:$0xf]
    %v629 = vld [vmem:[%s5 + $0x10] sm:$0xf]
    %v630 = vld [vmem:[%s5 + $0x14] sm:$0xf]
    %v631 = vld [vmem:[%s5 + $0x18] sm:$0xf]
    %v632 = vld [vmem:[%s5 + $0x1c] sm:$0xf]
    %v633 = vld [vmem:[%s5 + $0x20] sm:$0xf]
    %v634 = vld [vmem:[%s5 + $0x24] sm:$0xf]
    %v635 = vld [vmem:[%s5 + $0x28] sm:$0xf]
    %v636 = vld [vmem:[%s5 + $0x2c] sm:$0xf]
    %v637 = vld [vmem:[%s5 + $0x30] sm:$0xf]
    %v638 = vld [vmem:[%s5 + $0x34] sm:$0xf]
    %v639 = vld [vmem:[%s5 + $0x38] sm:$0xf]
    %v640 = vld [vmem:[%s5 + $0x3c] sm:$0xf]
    %v641 = vld [vmem:[%s5 + $0x40] sm:$0xf]
    %v642 = vld [vmem:[%s5 + $0x44] sm:$0xf]
    %v643 = vld [vmem:[%s5 + $0x48] sm:$0xf]
    %v644 = vld [vmem:[%s5 + $0x4c] sm:$0xf]
    %v645 = vld [vmem:[%s5 + $0x50] sm:$0xf]
    %v646 = vld [vmem:[%s5 + $0x54] sm:$0xf]
    %v647 = vld [vmem:[%s5 + $0x58] sm:$0xf]
    %v648 = vld [vmem:[%s5 + $0x5c] sm:$0xf]
    %v649 = vld [vmem:[%s5 + $0x60] sm:$0xf]
    %v650 = vld [vmem:[%s5 + $0x64] sm:$0xf]
    %v651 = vld [vmem:[%s5 + $0x68] sm:$0xf]
    %v652 = vld [vmem:[%s5 + $0x6c] sm:$0xf]
    %v653 = vld [vmem:[%s5 + $0x70] sm:$0xf]
    %v654 = vld [vmem:[%s5 + $0x74] sm:$0xf]
    %v655 = vld [vmem:[%s5 + $0x78] sm:$0xf]
    %v656 = vld [vmem:[%s5 + $0x7c] sm:$0xf]
    %v657 = vld [vmem:[%s5 + $0x80] sm:$0xf]
    %v658 = vld [vmem:[%s5 + $0x84] sm:$0xf]
    %v659 = vld [vmem:[%s5 + $0x88] sm:$0xf]
    %v660 = vld [vmem:[%s5 + $0x8c] sm:$0xf]
    %v661 = vld [vmem:[%s5 + $0x90] sm:$0xf]
    %v662 = vld [vmem:[%s5 + $0x94] sm:$0xf]
    %v663 = vld [vmem:[%s5 + $0x98] sm:$0xf]
    %v664 = vld [vmem:[%s5 + $0x9c] sm:$0xf]
    %v665 = vld [vmem:[%s5 + $0xa0] sm:$0xf]
    %v666 = vld [vmem:[%s5 + $0xa4] sm:$0xf]
    %v667 = vld [vmem:[%s5 + $0xa8] sm:$0xf]
    %v668 = vld [vmem:[%s5 + $0xac] sm:$0xf]
    %v669 = vld [vmem:[%s5 + $0xb0] sm:$0xf]
    %v670 = vld [vmem:[%s5 + $0xb4] sm:$0xf]
    %v671 = vld [vmem:[%s5 + $0xb8] sm:$0xf]
    %v672 = vld [vmem:[%s5 + $0xbc] sm:$0xf]
    %v673 = vld [vmem:[%s5 + $0xc0] sm:$0xf]
    %v674 = vld [vmem:[%s5 + $0xc4] sm:$0xf]
    %v675 = vld [vmem:[%s5 + $0xc8] sm:$0xf]
    %v676 = vld [vmem:[%s5 + $0xcc] sm:$0xf]
    %v677 = vld [vmem:[%s5 + $0xd0] sm:$0xf]
    %v678 = vld [vmem:[%s5 + $0xd4] sm:$0xf]
    %v679 = vld [vmem:[%s5 + $0xd8] sm:$0xf]
    %v680 = vld [vmem:[%s5 + $0xdc] sm:$0xf]
    %v681 = vld [vmem:[%s5 + $0xe0] sm:$0xf]
    %v682 = vld [vmem:[%s5 + $0xe4] sm:$0xf]
    %v683 = vld [vmem:[%s5 + $0xe8] sm:$0xf]
    %v684 = vld [vmem:[%s5 + $0xec] sm:$0xf]
    %v685 = vld [vmem:[%s5 + $0xf0] sm:$0xf]
    %v686 = vld [vmem:[%s5 + $0xf4] sm:$0xf]
    %v687 = vld [vmem:[%s5 + $0xf8] sm:$0xf]
    %v688 = vld [vmem:[%s5 + $0xfc] sm:$0xf]
    %v689 = vld [vmem:[%s5 + $0x100] sm:$0xf]
    %v690 = vld [vmem:[%s5 + $0x104] sm:$0xf]
    %v691 = vld [vmem:[%s5 + $0x108] sm:$0xf]
    %v692 = vld [vmem:[%s5 + $0x10c] sm:$0xf]
    %v693 = vld [vmem:[%s5 + $0x110] sm:$0xf]
    %v694 = vld [vmem:[%s5 + $0x114] sm:$0xf]
    %v695 = vld [vmem:[%s5 + $0x118] sm:$0xf]
    %v696 = vld [vmem:[%s5 + $0x11c] sm:$0xf]
    %v697 = vld [vmem:[%s5 + $0x120] sm:$0xf]
    %v698 = vld [vmem:[%s5 + $0x124] sm:$0xf]
    %v699 = vld [vmem:[%s5 + $0x128] sm:$0xf]
    %v700 = vld [vmem:[%s5 + $0x12c] sm:$0xf]
    %v701 = vld [vmem:[%s5 + $0x130] sm:$0xf]
    %v702 = vld [vmem:[%s5 + $0x134] sm:$0xf]
    %v703 = vld [vmem:[%s5 + $0x138] sm:$0xf]
    %v704 = vld [vmem:[%s5 + $0x13c] sm:$0xf]
    %v705 = vld [vmem:[%s5 + $0x140] sm:$0xf]
    %v706 = vld [vmem:[%s5 + $0x144] sm:$0xf]
    %v707 = vld [vmem:[%s5 + $0x148] sm:$0xf]
    %v708 = vld [vmem:[%s5 + $0x14c] sm:$0xf]
    %v709 = vld [vmem:[%s5 + $0x150] sm:$0xf]
    %v710 = vld [vmem:[%s5 + $0x154] sm:$0xf]
    %v711 = vld [vmem:[%s5 + $0x158] sm:$0xf]
    %v712 = vld [vmem:[%s5 + $0x15c] sm:$0xf]
    %v713 = vld [vmem:[%s5 + $0x160] sm:$0xf]
    %v714 = vld [vmem:[%s5 + $0x164] sm:$0xf]
    %v715 = vld [vmem:[%s5 + $0x168] sm:$0xf]
    %v716 = vld [vmem:[%s5 + $0x16c] sm:$0xf]
    %v717 = vld [vmem:[%s5 + $0x170] sm:$0xf]
    %v718 = vld [vmem:[%s5 + $0x174] sm:$0xf]
    %v719 = vld [vmem:[%s5 + $0x178] sm:$0xf]
    %v720 = vld [vmem:[%s5 + $0x17c] sm:$0xf]
    %v721 = vld [vmem:[%s5 + $0x180] sm:$0xf]
    %v722 = vld [vmem:[%s5 + $0x184] sm:$0xf]
    %v723 = vld [vmem:[%s5 + $0x188] sm:$0xf]
    %v724 = vld [vmem:[%s5 + $0x18c] sm:$0xf]
    %v725 = vld [vmem:[%s5 + $0x190] sm:$0xf]
    %v726 = vld [vmem:[%s5 + $0x194] sm:$0xf]
    %v727 = vld [vmem:[%s5 + $0x198] sm:$0xf]
    %v728 = vld [vmem:[%s5 + $0x19c] sm:$0xf]
    %v729 = vld [vmem:[%s5 + $0x1a0] sm:$0xf]
    %v730 = vld [vmem:[%s5 + $0x1a4] sm:$0xf]
    %v731 = vld [vmem:[%s5 + $0x1a8] sm:$0xf]
    %v732 = vld [vmem:[%s5 + $0x1ac] sm:$0xf]
    %v733 = vld [vmem:[%s5 + $0x1b0] sm:$0xf]
    %v734 = vld [vmem:[%s5 + $0x1b4] sm:$0xf]
    %v735 = vld [vmem:[%s5 + $0x1b8] sm:$0xf]
    %v736 = vld [vmem:[%s5 + $0x1bc] sm:$0xf]
    %v737 = vld [vmem:[%s5 + $0x1c0] sm:$0xf]
    %v738 = vld [vmem:[%s5 + $0x1c4] sm:$0xf]
    %v739 = vld [vmem:[%s5 + $0x1c8] sm:$0xf]
    %v740 = vld [vmem:[%s5 + $0x1cc] sm:$0xf]
    %v741 = vld [vmem:[%s5 + $0x1d0] sm:$0xf]
    %v742 = vld [vmem:[%s5 + $0x1d4] sm:$0xf]
    %v743 = vld [vmem:[%s5 + $0x1d8] sm:$0xf]
    %v744 = vld [vmem:[%s5 + $0x1dc] sm:$0xf]
    %v745 = vld [vmem:[%s5 + $0x1e0] sm:$0xf]
    %v746 = vld [vmem:[%s5 + $0x1e4] sm:$0xf]
    %v747 = vld [vmem:[%s5 + $0x1e8] sm:$0xf]
    %v748 = vld [vmem:[%s5 + $0x1ec] sm:$0xf]
    %v749 = vld [vmem:[%s5 + $0x1f0] sm:$0xf]
    %v750 = vld [vmem:[%s5 + $0x1f4] sm:$0xf]
    %v751 = vld [vmem:[%s5 + $0x1f8] sm:$0xf]
    %v752 = vld [vmem:[%s5 + $0x1fc] sm:$0xf]
    %v753 = vld [vmem:[%s6] sm:$0x1]
    %v755 = vlaneseq
    %v756 = vshrl.u32 %v755, 7
    %v757 = vsub.s32 0, %v756
    %v758 = vrot.slane %v753, %v757
    %v760 = vcombine.high %v624, %v624
    %v762 = vunpack.c.l.s4 1966171168
    %v763 = vunpack.c.0.s8 %v762
    %v764 = vlaneseq
    %v765 = vshrl.u32 %v764, 7
    %v766 = vsub.s32 %v763, %v765
    %v767 = vrot.slane %v624, %v766
    %v769 = vunpack.c.l.s4 1966171168
    %v770 = vunpack.c.0.s8 %v769
    %v771 = vlaneseq
    %v772 = vshrl.u32 %v771, 7
    %v773 = vsub.s32 %v770, %v772
    %v774 = vrot.slane %v760, %v773
    %v775 = vcombine.high %v767, %v767
    %v776 = vcombine.high %v774, %v774
    %v778 = vunpack.c.l.s4 1966171168
    %v779 = vunpack.c.0.s8 %v778
    %v780 = vlaneseq
    %v781 = vshrl.u32 %v780, 7
    %v782 = vsub.s32 %v779, %v781
    %v783 = vrot.slane %v767, %v782
    %v785 = vunpack.c.l.s4 1966171168
    %v786 = vunpack.c.0.s8 %v785
    %v787 = vlaneseq
    %v788 = vshrl.u32 %v787, 7
    %v789 = vsub.s32 %v786, %v788
    %v790 = vrot.slane %v774, %v789
    %v792 = vunpack.c.l.s4 1966171168
    %v793 = vunpack.c.0.s8 %v792
    %v794 = vlaneseq
    %v795 = vshrl.u32 %v794, 7
    %v796 = vsub.s32 %v793, %v795
    %v797 = vrot.slane %v775, %v796
    %v799 = vunpack.c.l.s4 1966171168
    %v800 = vunpack.c.0.s8 %v799
    %v801 = vlaneseq
    %v802 = vshrl.u32 %v801, 7
    %v803 = vsub.s32 %v800, %v802
    %v804 = vrot.slane %v776, %v803
    %v805 = vcombine.high %v783, %v783
    %v806 = vcombine.high %v790, %v790
    %v807 = vcombine.high %v797, %v797
    %v808 = vcombine.high %v804, %v804
    %v945 = vunpack.c.l.b16 %v625
    %v946 = vunpack.c.l.b16 %v626
    %v947 = vunpack.c.l.b16 %v627
    %v948 = vunpack.c.l.b16 %v628
    %v949 = vunpack.c.l.b16 %v629
    %v950 = vunpack.c.l.b16 %v630
    %v951 = vunpack.c.l.b16 %v631
    %v952 = vunpack.c.l.b16 %v632
    %v953 = vunpack.c.l.b16 %v633
    %v954 = vunpack.c.l.b16 %v634
    %v955 = vunpack.c.l.b16 %v635
    %v956 = vunpack.c.l.b16 %v636
    %v957 = vunpack.c.l.b16 %v637
    %v958 = vunpack.c.l.b16 %v638
    %v959 = vunpack.c.l.b16 %v639
    %v960 = vunpack.c.l.b16 %v640
    %v961 = vunpack.c.l.b16 %v641
    %v962 = vunpack.c.l.b16 %v642
    %v963 = vunpack.c.l.b16 %v643
    %v964 = vunpack.c.l.b16 %v644
    %v965 = vunpack.c.l.b16 %v645
    %v966 = vunpack.c.l.b16 %v646
    %v967 = vunpack.c.l.b16 %v647
    %v968 = vunpack.c.l.b16 %v648
    %v969 = vunpack.c.l.b16 %v649
    %v970 = vunpack.c.l.b16 %v650
    %v971 = vunpack.c.l.b16 %v651
    %v972 = vunpack.c.l.b16 %v652
    %v973 = vunpack.c.l.b16 %v653
    %v974 = vunpack.c.l.b16 %v654
    %v975 = vunpack.c.l.b16 %v655
    %v976 = vunpack.c.l.b16 %v656
    %v977 = vunpack.c.l.b16 %v657
    %v978 = vunpack.c.l.b16 %v658
    %v979 = vunpack.c.l.b16 %v659
    %v980 = vunpack.c.l.b16 %v660
    %v981 = vunpack.c.l.b16 %v661
    %v982 = vunpack.c.l.b16 %v662
    %v983 = vunpack.c.l.b16 %v663
    %v984 = vunpack.c.l.b16 %v664
    %v985 = vunpack.c.l.b16 %v665
    %v986 = vunpack.c.l.b16 %v666
    %v987 = vunpack.c.l.b16 %v667
    %v988 = vunpack.c.l.b16 %v668
    %v989 = vunpack.c.l.b16 %v669
    %v990 = vunpack.c.l.b16 %v670
    %v991 = vunpack.c.l.b16 %v671
    %v992 = vunpack.c.l.b16 %v672
    %v993 = vunpack.c.l.b16 %v673
    %v994 = vunpack.c.l.b16 %v674
    %v995 = vunpack.c.l.b16 %v675
    %v996 = vunpack.c.l.b16 %v676
    %v997 = vunpack.c.l.b16 %v677
    %v998 = vunpack.c.l.b16 %v678
    %v999 = vunpack.c.l.b16 %v679
    %v1000 = vunpack.c.l.b16 %v680
    %v1001 = vunpack.c.l.b16 %v681
    %v1002 = vunpack.c.l.b16 %v682
    %v1003 = vunpack.c.l.b16 %v683
    %v1004 = vunpack.c.l.b16 %v684
    %v1005 = vunpack.c.l.b16 %v685
    %v1006 = vunpack.c.l.b16 %v686
    %v1007 = vunpack.c.l.b16 %v687
    %v1008 = vunpack.c.l.b16 %v688
    %v1009 = vunpack.c.l.b16 %v689
    %v1010 = vunpack.c.l.b16 %v690
    %v1011 = vunpack.c.l.b16 %v691
    %v1012 = vunpack.c.l.b16 %v692
    %v1013 = vunpack.c.l.b16 %v693
    %v1014 = vunpack.c.l.b16 %v694
    %v1015 = vunpack.c.l.b16 %v695
    %v1016 = vunpack.c.l.b16 %v696
    %v1017 = vunpack.c.l.b16 %v697
    %v1018 = vunpack.c.l.b16 %v698
    %v1019 = vunpack.c.l.b16 %v699
    %v1020 = vunpack.c.l.b16 %v700
    %v1021 = vunpack.c.l.b16 %v701
    %v1022 = vunpack.c.l.b16 %v702
    %v1023 = vunpack.c.l.b16 %v703
    %v1024 = vunpack.c.l.b16 %v704
    %v1025 = vunpack.c.l.b16 %v705
    %v1026 = vunpack.c.l.b16 %v706
    %v1027 = vunpack.c.l.b16 %v707
    %v1028 = vunpack.c.l.b16 %v708
    %v1029 = vunpack.c.l.b16 %v709
    %v1030 = vunpack.c.l.b16 %v710
    %v1031 = vunpack.c.l.b16 %v711
    %v1032 = vunpack.c.l.b16 %v712
    %v1033 = vunpack.c.l.b16 %v713
    %v1034 = vunpack.c.l.b16 %v714
    %v1035 = vunpack.c.l.b16 %v715
    %v1036 = vunpack.c.l.b16 %v716
    %v1037 = vunpack.c.l.b16 %v717
    %v1038 = vunpack.c.l.b16 %v718
    %v1039 = vunpack.c.l.b16 %v719
    %v1040 = vunpack.c.l.b16 %v720
    %v1041 = vunpack.c.l.b16 %v721
    %v1042 = vunpack.c.l.b16 %v722
    %v1043 = vunpack.c.l.b16 %v723
    %v1044 = vunpack.c.l.b16 %v724
    %v1045 = vunpack.c.l.b16 %v725
    %v1046 = vunpack.c.l.b16 %v726
    %v1047 = vunpack.c.l.b16 %v727
    %v1048 = vunpack.c.l.b16 %v728
    %v1049 = vunpack.c.l.b16 %v729
    %v1050 = vunpack.c.l.b16 %v730
    %v1051 = vunpack.c.l.b16 %v731
    %v1052 = vunpack.c.l.b16 %v732
    %v1053 = vunpack.c.l.b16 %v733
    %v1054 = vunpack.c.l.b16 %v734
    %v1055 = vunpack.c.l.b16 %v735
    %v1056 = vunpack.c.l.b16 %v736
    %v1057 = vunpack.c.l.b16 %v737
    %v1058 = vunpack.c.l.b16 %v738
    %v1059 = vunpack.c.l.b16 %v739
    %v1060 = vunpack.c.l.b16 %v740
    %v1061 = vunpack.c.l.b16 %v741
    %v1062 = vunpack.c.l.b16 %v742
    %v1063 = vunpack.c.l.b16 %v743
    %v1064 = vunpack.c.l.b16 %v744
    %v1065 = vunpack.c.l.b16 %v745
    %v1066 = vunpack.c.l.b16 %v746
    %v1067 = vunpack.c.l.b16 %v747
    %v1068 = vunpack.c.l.b16 %v748
    %v1069 = vunpack.c.l.b16 %v749
    %v1070 = vunpack.c.l.b16 %v750
    %v1071 = vunpack.c.l.b16 %v751
    %v1072 = vunpack.c.l.b16 %v752
    %v1073 = vpack.c.b16 %v946, %v945
    %v1074 = vpack.c.b16 %v948, %v947
    %v1075 = vpack.c.b16 %v950, %v949
    %v1076 = vpack.c.b16 %v952, %v951
    %v1077 = vpack.c.b16 %v954, %v953
    %v1078 = vpack.c.b16 %v956, %v955
    %v1079 = vpack.c.b16 %v958, %v957
    %v1080 = vpack.c.b16 %v960, %v959
    %v1081 = vpack.c.b16 %v962, %v961
    %v1082 = vpack.c.b16 %v964, %v963
    %v1083 = vpack.c.b16 %v966, %v965
    %v1084 = vpack.c.b16 %v968, %v967
    %v1085 = vpack.c.b16 %v970, %v969
    %v1086 = vpack.c.b16 %v972, %v971
    %v1087 = vpack.c.b16 %v974, %v973
    %v1088 = vpack.c.b16 %v976, %v975
    %v1089 = vpack.c.b16 %v978, %v977
    %v1090 = vpack.c.b16 %v980, %v979
    %v1091 = vpack.c.b16 %v982, %v981
    %v1092 = vpack.c.b16 %v984, %v983
    %v1093 = vpack.c.b16 %v986, %v985
    %v1094 = vpack.c.b16 %v988, %v987
    %v1095 = vpack.c.b16 %v990, %v989
    %v1096 = vpack.c.b16 %v992, %v991
    %v1097 = vpack.c.b16 %v994, %v993
    %v1098 = vpack.c.b16 %v996, %v995
    %v1099 = vpack.c.b16 %v998, %v997
    %v1100 = vpack.c.b16 %v1000, %v999
    %v1101 = vpack.c.b16 %v1002, %v1001
    %v1102 = vpack.c.b16 %v1004, %v1003
    %v1103 = vpack.c.b16 %v1006, %v1005
    %v1104 = vpack.c.b16 %v1008, %v1007
    %v1105 = vpack.c.b16 %v1010, %v1009
    %v1106 = vpack.c.b16 %v1012, %v1011
    %v1107 = vpack.c.b16 %v1014, %v1013
    %v1108 = vpack.c.b16 %v1016, %v1015
    %v1109 = vpack.c.b16 %v1018, %v1017
    %v1110 = vpack.c.b16 %v1020, %v1019
    %v1111 = vpack.c.b16 %v1022, %v1021
    %v1112 = vpack.c.b16 %v1024, %v1023
    %v1113 = vpack.c.b16 %v1026, %v1025
    %v1114 = vpack.c.b16 %v1028, %v1027
    %v1115 = vpack.c.b16 %v1030, %v1029
    %v1116 = vpack.c.b16 %v1032, %v1031
    %v1117 = vpack.c.b16 %v1034, %v1033
    %v1118 = vpack.c.b16 %v1036, %v1035
    %v1119 = vpack.c.b16 %v1038, %v1037
    %v1120 = vpack.c.b16 %v1040, %v1039
    %v1121 = vpack.c.b16 %v1042, %v1041
    %v1122 = vpack.c.b16 %v1044, %v1043
    %v1123 = vpack.c.b16 %v1046, %v1045
    %v1124 = vpack.c.b16 %v1048, %v1047
    %v1125 = vpack.c.b16 %v1050, %v1049
    %v1126 = vpack.c.b16 %v1052, %v1051
    %v1127 = vpack.c.b16 %v1054, %v1053
    %v1128 = vpack.c.b16 %v1056, %v1055
    %v1129 = vpack.c.b16 %v1058, %v1057
    %v1130 = vpack.c.b16 %v1060, %v1059
    %v1131 = vpack.c.b16 %v1062, %v1061
    %v1132 = vpack.c.b16 %v1064, %v1063
    %v1133 = vpack.c.b16 %v1066, %v1065
    %v1134 = vpack.c.b16 %v1068, %v1067
    %v1135 = vpack.c.b16 %v1070, %v1069
    %v1136 = vpack.c.b16 %v1072, %v1071
    %1201 = vmatprep.subr.bf16.mxu0 0
    %1202 = vmatpush1.bf16.msra.mxu0 %v1080
    %1203 = vmatprep.subr.bf16.mxu0 0
    %1204 = vmatpush1.bf16.msra.mxu0 %v1079
    %1205 = vmatprep.subr.bf16.mxu0 0
    %1206 = vmatpush1.bf16.msra.mxu0 %v1078
    %1207 = vmatprep.subr.bf16.mxu0 0
    %1208 = vmatpush1.bf16.msra.mxu0 %v1077
    %1209 = vmatprep.subr.bf16.mxu0 0
    %1210 = vmatpush1.bf16.msra.mxu0 %v1076
    %1211 = vmatprep.subr.bf16.mxu0 0
    %1212 = vmatpush1.bf16.msra.mxu0 %v1075
    %1213 = vmatprep.subr.bf16.mxu0 0
    %1214 = vmatpush1.bf16.msra.mxu0 %v1074
    %1215 = vmatprep.subr.bf16.mxu0 0
    %1216 = vmatpush1.bf16.msra.mxu0 %v1073
    %1217 = vmatprep.subr.bf16.mxu0 0
    %1218 = vmatpush2.bf16.msra.mxu0 %v1088
    %1219 = vmatprep.subr.bf16.mxu0 0
    %1220 = vmatpush2.bf16.msra.mxu0 %v1087
    %1221 = vmatprep.subr.bf16.mxu0 0
    %1222 = vmatpush2.bf16.msra.mxu0 %v1086
    %1223 = vmatprep.subr.bf16.mxu0 0
    %1224 = vmatpush2.bf16.msra.mxu0 %v1085
    %1225 = vmatprep.subr.bf16.mxu0 0
    %1226 = vmatpush2.bf16.msra.mxu0 %v1084
    %1227 = vmatprep.subr.bf16.mxu0 0
    %1228 = vmatpush2.bf16.msra.mxu0 %v1083
    %1229 = vmatprep.subr.bf16.mxu0 0
    %1230 = vmatpush2.bf16.msra.mxu0 %v1082
    %1231 = vmatprep.subr.bf16.mxu0 0
    %1232 = vmatpush2.bf16.msra.mxu0 %v1081
    %1233 = vmatprep.mubr.bf16.mxu0 %v797
    %1234 = vmatmul.mubr.bf16.gmra.mxu0 %v783
    %v1235 = vpop.f32.mrf.mxu0
    %v1236 = vadd.f32 %v758, %v1235
    %v1237 = vpop.f32.mrf.mxu0
    %v1238 = vpop.f32.mrf.mxu0
    %v1239 = vpop.f32.mrf.mxu0
    %1240 = vdwg.mxu0
    %1241 = vmatprep.subr.bf16.mxu0 0
    %1242 = vmatpush1.bf16.msra.mxu0 %v1096
    %1243 = vmatprep.subr.bf16.mxu0 0
    %1244 = vmatpush1.bf16.msra.mxu0 %v1095
    %1245 = vmatprep.subr.bf16.mxu0 0
    %1246 = vmatpush1.bf16.msra.mxu0 %v1094
    %1247 = vmatprep.subr.bf16.mxu0 0
    %1248 = vmatpush1.bf16.msra.mxu0 %v1093
    %1249 = vmatprep.subr.bf16.mxu0 0
    %1250 = vmatpush1.bf16.msra.mxu0 %v1092
    %1251 = vmatprep.subr.bf16.mxu0 0
    %1252 = vmatpush1.bf16.msra.mxu0 %v1091
    %1253 = vmatprep.subr.bf16.mxu0 0
    %1254 = vmatpush1.bf16.msra.mxu0 %v1090
    %1255 = vmatprep.subr.bf16.mxu0 0
    %1256 = vmatpush1.bf16.msra.mxu0 %v1089
    %1257 = vmatprep.subr.bf16.mxu0 0
    %1258 = vmatpush2.bf16.msra.mxu0 %v1104
    %1259 = vmatprep.subr.bf16.mxu0 0
    %1260 = vmatpush2.bf16.msra.mxu0 %v1103
    %1261 = vmatprep.subr.bf16.mxu0 0
    %1262 = vmatpush2.bf16.msra.mxu0 %v1102
    %1263 = vmatprep.subr.bf16.mxu0 0
    %1264 = vmatpush2.bf16.msra.mxu0 %v1101
    %1265 = vmatprep.subr.bf16.mxu0 0
    %1266 = vmatpush2.bf16.msra.mxu0 %v1100
    %1267 = vmatprep.subr.bf16.mxu0 0
    %1268 = vmatpush2.bf16.msra.mxu0 %v1099
    %1269 = vmatprep.subr.bf16.mxu0 0
    %1270 = vmatpush2.bf16.msra.mxu0 %v1098
    %1271 = vmatprep.subr.bf16.mxu0 0
    %1272 = vmatpush2.bf16.msra.mxu0 %v1097
    %1273 = vmatprep.mubr.bf16.mxu0 %v807
    %1274 = vmatmul.mubr.bf16.gmra.mxu0 %v805
    %v1275 = vpop.f32.mrf.mxu0
    %v1276 = vadd.f32 %v1236, %v1275
    %v1277 = vpop.f32.mrf.mxu0
    %v1278 = vpop.f32.mrf.mxu0
    %v1279 = vpop.f32.mrf.mxu0
    %1280 = vdwg.mxu0
    %1281 = vmatprep.subr.bf16.mxu0 0
    %1282 = vmatpush1.bf16.msra.mxu0 %v1112
    %1283 = vmatprep.subr.bf16.mxu0 0
    %1284 = vmatpush1.bf16.msra.mxu0 %v1111
    %1285 = vmatprep.subr.bf16.mxu0 0
    %1286 = vmatpush1.bf16.msra.mxu0 %v1110
    %1287 = vmatprep.subr.bf16.mxu0 0
    %1288 = vmatpush1.bf16.msra.mxu0 %v1109
    %1289 = vmatprep.subr.bf16.mxu0 0
    %1290 = vmatpush1.bf16.msra.mxu0 %v1108
    %1291 = vmatprep.subr.bf16.mxu0 0
    %1292 = vmatpush1.bf16.msra.mxu0 %v1107
    %1293 = vmatprep.subr.bf16.mxu0 0
    %1294 = vmatpush1.bf16.msra.mxu0 %v1106
    %1295 = vmatprep.subr.bf16.mxu0 0
    %1296 = vmatpush1.bf16.msra.mxu0 %v1105
    %1297 = vmatprep.subr.bf16.mxu0 0
    %1298 = vmatpush2.bf16.msra.mxu0 %v1120
    %1299 = vmatprep.subr.bf16.mxu0 0
    %1300 = vmatpush2.bf16.msra.mxu0 %v1119
    %1301 = vmatprep.subr.bf16.mxu0 0
    %1302 = vmatpush2.bf16.msra.mxu0 %v1118
    %1303 = vmatprep.subr.bf16.mxu0 0
    %1304 = vmatpush2.bf16.msra.mxu0 %v1117
    %1305 = vmatprep.subr.bf16.mxu0 0
    %1306 = vmatpush2.bf16.msra.mxu0 %v1116
    %1307 = vmatprep.subr.bf16.mxu0 0
    %1308 = vmatpush2.bf16.msra.mxu0 %v1115
    %1309 = vmatprep.subr.bf16.mxu0 0
    %1310 = vmatpush2.bf16.msra.mxu0 %v1114
    %1311 = vmatprep.subr.bf16.mxu0 0
    %1312 = vmatpush2.bf16.msra.mxu0 %v1113
    %1313 = vmatprep.mubr.bf16.mxu0 %v804
    %1314 = vmatmul.mubr.bf16.gmra.mxu0 %v790
    %v1315 = vpop.f32.mrf.mxu0
    %v1316 = vadd.f32 %v1276, %v1315
    %v1317 = vpop.f32.mrf.mxu0
    %v1318 = vpop.f32.mrf.mxu0
    %v1319 = vpop.f32.mrf.mxu0
    %1320 = vdwg.mxu0
    %1321 = vmatprep.subr.bf16.mxu0 0
    %1322 = vmatpush1.bf16.msra.mxu0 %v1128
    %1323 = vmatprep.subr.bf16.mxu0 0
    %1324 = vmatpush1.bf16.msra.mxu0 %v1127
    %1325 = vmatprep.subr.bf16.mxu0 0
    %1326 = vmatpush1.bf16.msra.mxu0 %v1126
    %1327 = vmatprep.subr.bf16.mxu0 0
    %1328 = vmatpush1.bf16.msra.mxu0 %v1125
    %1329 = vmatprep.subr.bf16.mxu0 0
    %1330 = vmatpush1.bf16.msra.mxu0 %v1124
    %1331 = vmatprep.subr.bf16.mxu0 0
    %1332 = vmatpush1.bf16.msra.mxu0 %v1123
    %1333 = vmatprep.subr.bf16.mxu0 0
    %1334 = vmatpush1.bf16.msra.mxu0 %v1122
    %1335 = vmatprep.subr.bf16.mxu0 0
    %1336 = vmatpush1.bf16.msra.mxu0 %v1121
    %1337 = vmatprep.subr.bf16.mxu0 0
    %1338 = vmatpush2.bf16.msra.mxu0 %v1136
    %1339 = vmatprep.subr.bf16.mxu0 0
    %1340 = vmatpush2.bf16.msra.mxu0 %v1135
    %1341 = vmatprep.subr.bf16.mxu0 0
    %1342 = vmatpush2.bf16.msra.mxu0 %v1134
    %1343 = vmatprep.subr.bf16.mxu0 0
    %1344 = vmatpush2.bf16.msra.mxu0 %v1133
    %1345 = vmatprep.subr.bf16.mxu0 0
    %1346 = vmatpush2.bf16.msra.mxu0 %v1132
    %1347 = vmatprep.subr.bf16.mxu0 0
    %1348 = vmatpush2.bf16.msra.mxu0 %v1131
    %1349 = vmatprep.subr.bf16.mxu0 0
    %1350 = vmatpush2.bf16.msra.mxu0 %v1130
    %1351 = vmatprep.subr.bf16.mxu0 0
    %1352 = vmatpush2.bf16.msra.mxu0 %v1129
    %1353 = vmatprep.mubr.bf16.mxu0 %v808
    %1354 = vmatmul.mubr.bf16.gmra.mxu0 %v806
    %v1355 = vpop.f32.mrf.mxu0
    %v1356 = vadd.f32 %v1316, %v1355
    %v1357 = vpop.f32.mrf.mxu0
    %v1358 = vpop.f32.mrf.mxu0
    %v1359 = vpop.f32.mrf.mxu0
    %1360 = vdwg.mxu0
    %v1363 = vunpack.c.l.s4 1966171168
    %v1364 = vunpack.c.0.s8 %v1363
    %v1365 = vlaneseq
    %v1366 = vshrl.u32 %v1365, 7
    %v1367 = vsub.s32 %v1364, %v1366
    %v1368 = vrot.slane %v1356, %v1367
    %v1369 = vcombine.high %v1368, %v1368
    %v1371 = vunpack.c.l.s4 1966171168
    %v1372 = vunpack.c.0.s8 %v1371
    %v1373 = vlaneseq
    %v1374 = vshrl.u32 %v1373, 7
    %v1375 = vsub.s32 %v1372, %v1374
    %v1376 = vrot.slane %v1368, %v1375
    %v1378 = vunpack.c.l.s4 1966171168
    %v1379 = vunpack.c.0.s8 %v1378
    %v1380 = vlaneseq
    %v1381 = vshrl.u32 %v1380, 7
    %v1382 = vsub.s32 %v1379, %v1381
    %v1383 = vrot.slane %v1369, %v1382
    %1386 = vst [vmem:[#allocation7] sm:$0x1] %v1376
    %1387 = vst [vmem:[#allocation7 + $0x1] sm:$0x1] %v1383
    // Predicated region
    $region38: #{_lambda_.3} parent=1 // pred_check
      _
    $region39: #{_lambda_.3} parent=1 // pred_check_branch
      %1389 = sbr.rel (0) target = $region41
    $region40: #{_lambda_.3} parent=1 // pred_region
      %s1391 = ssub.s32 32, 32
      %1392 = vsyncadd [#allocation4], %s1391
      %s1393 = sshll.u32 [#allocation7], 4
      %s1394 = int_to_ptr.vmem [resolvable:$true] %s1393
      %1399 = dma.vmem_to_hbm [thread:$0]  %s1394, 32, %s7, [#allocation4], 16, 16, 1
    $region41: #{_lambda_.3} parent=1 // pred_fallthru
      _
    // Predicated region
    $region42: #{_lambda_.3} parent=1 // pred_check
      _
    $region43: #{_lambda_.3} parent=1 // pred_check_branch
      %1401 = sbr.rel (0) target = $region45
    $region44: #{_lambda_.3} parent=1 // pred_region
      %1402 = dma.done [#allocation4], 32
    $region45: #{_lambda_.3} parent=1 // pred_fallthru
      _
    %1403 = vsyncpa [#allocation3], 1
    %1404 = vsyncpa [#allocation6], 1
    %1405 = vsyncpa [#allocation4], 1

// kernel: _lambda_.2
$region0: #{_lambda_.2}
  #allocation0 [shape = 'u32[]', space=smem, size = 0x4, offset = 0x4, fixed_abs, tag = 'smem constant byte address 0x4 - core index']
  #allocation1 [shape = 'u32[144,128]{1,0:T(1,128)}', space=vmem, size = 0x12000, scoped, tag = 'internal scratch']
  %s0 = inlined_call_operand.vmem [shape: bf16[2,16,64], index: 0, kind: input, shape index: {}]
  %s1 = inlined_call_operand.hbm [shape: bf16[192,128], index: 1, kind: input, shape index: {}]
  %s2 = inlined_call_operand.vmem [shape: f32[1,128], index: 2, kind: input, shape index: {}]
  %s3 = inlined_call_operand.vmem [shape: bf16[384,128], index: 3, kind: input, shape index: {}]
  %s4 = inlined_call_operand.vmem [shape: f32[1,128], index: 4, kind: input, shape index: {}]
  %s5 = inlined_call_operand.vmem [shape: bf16[2,8,64], index: 5, kind: output, shape index: {}]
  %s6 = sld [smem:[#allocation0]]
  $region34: #{_lambda_.2} parent=0
    _
  %s8 = ssub.s32 1, %s6
  %s9 = scalar_select 0, %s8, %s6
  $region1: #{_lambda_.2} parent=0
    #allocation2 [shape = 'u8[49152]{0}', space=vmem, size = 0xc000, scoped, tag = 'input window, operand 1, single buffered']
    #allocation3 [shape = 's32[1]{0}', space=sflag, size = 0x4, scoped, tag = 'scoped memory for _lambda_.2']
    %10 = vsyncpa [#allocation3], 0
    // Predicated region
    $region2: #{_lambda_.2} parent=1 // pred_check
      _
    $region3: #{_lambda_.2} parent=1 // pred_check_branch
      %12 = sbr.rel (0) target = $region5
    $region4: #{_lambda_.2} parent=1 // pred_region
      _
    $region5: #{_lambda_.2} parent=1 // pred_fallthru
      _
    // Predicated region
    $region6: #{_lambda_.2} parent=1 // pred_check
      _
    $region7: #{_lambda_.2} parent=1 // pred_check_branch
      %14 = sbr.rel (0) target = $region9
    $region8: #{_lambda_.2} parent=1 // pred_region
      %s16 = ssub.s32 1536, 1536
      %17 = vsyncadd [#allocation3], %s16
      %s18 = sshll.u32 [#allocation2], 4
      %s19 = int_to_ptr.vmem [resolvable:$true] %s18
      %24 = dma.hbm_to_vmem [thread:$0]  %s1, 1536, %s19, [#allocation3], 64, 64, 4
    $region9: #{_lambda_.2} parent=1 // pred_fallthru
      _
    // Predicated region
    $region10: #{_lambda_.2} parent=1 // pred_check
      _
    $region11: #{_lambda_.2} parent=1 // pred_check_branch
      %26 = sbr.rel (0) target = $region13
    $region12: #{_lambda_.2} parent=1 // pred_region
      _
    $region13: #{_lambda_.2} parent=1 // pred_fallthru
      _
    // Predicated region
    $region14: #{_lambda_.2} parent=1 // pred_check
      _
    $region15: #{_lambda_.2} parent=1 // pred_check_branch
      %28 = sbr.rel (0) target = $region17
    $region16: #{_lambda_.2} parent=1 // pred_region
      _
    $region17: #{_lambda_.2} parent=1 // pred_fallthru
      _
    // Predicated region
    $region18: #{_lambda_.2} parent=1 // pred_check
      _
    $region19: #{_lambda_.2} parent=1 // pred_check_branch
      %30 = sbr.rel (0) target = $region21
    $region20: #{_lambda_.2} parent=1 // pred_region
      _
    $region21: #{_lambda_.2} parent=1 // pred_fallthru
      _
    // Predicated region
    $region22: #{_lambda_.2} parent=1 // pred_check
      _
    $region23: #{_lambda_.2} parent=1 // pred_check_branch
      %32 = sbr.rel (0) target = $region25
    $region24: #{_lambda_.2} parent=1 // pred_region
      %33 = dma.done [#allocation3], 1536
    $region25: #{_lambda_.2} parent=1 // pred_fallthru
      _
    %v35 = vld [vmem:[%s0] sm:$0xf]
    %v36 = vld [vmem:[%s0 + $0x4] sm:$0xf]
    %v37 = vld [vmem:[%s0 + $0x8] sm:$0xf]
    %v38 = vld [vmem:[%s0 + $0xc] sm:$0xf]
    %v43 = vunpack.c.l.b16 %v35
    %v44 = vunpack.c.l.b16 %v36
    %v45 = vunpack.c.l.b16 %v37
    %v46 = vunpack.c.l.b16 %v38
    %v47 = vpack.c.b16 %v44, %v43
    %v48 = vpack.c.b16 %v46, %v45
    %v50 = vshrl.u32 %v47, 16
    %v52 = vrot.slane %v50, 7
    %v53 = vshll.u32 %v47, 16
    %v55 = vor.u32 %v52, %v53
    %v57 = vshrl.u32 %v48, 16
    %v59 = vrot.slane %v57, 7
    %v60 = vshll.u32 %v48, 16
    %v62 = vor.u32 %v59, %v60
    %vm67 = vcmask 1040384
    %vm68 = vsmask.f32 256
    %vm69 = vmand %vm67, %vm68
    %v70 = vsel %vm69, 0, %v55
    %v71 = vsel %vm69, 0, %v62
    %v72 = vsel %vm69, %v52, 0
    %v73 = vsel %vm69, %v59, 0
    %vm74 = vsmask.f32 7424
    %v76 = vshrl.u32 %v70, 16
    %v78 = vshll.u32 %v70, 16
    %v80 = vrot.slane %v78, 1
    %v81 = vor.u32 %v76, %v80
    %v83 = vshll.u32 %v72, 16
    %v85 = vrot.slane %v83, 1
    %v86 = vsel %vm74, %v81, %v85
    %v88 = vshrl.u32 %v71, 16
    %v90 = vshll.u32 %v71, 16
    %v92 = vrot.slane %v90, 1
    %v93 = vor.u32 %v88, %v92
    %v95 = vshll.u32 %v73, 16
    %v97 = vrot.slane %v95, 1
    %v98 = vsel %vm74, %v93, %v97
    %99 = vrot.lane.b32.xlu0 %v86, 64
    %v100 = vpop.permute.xlu0 %99
    %101 = vrot.lane.b32.xlu0 %v98, 64
    %v102 = vpop.permute.xlu0 %101
    %vm107 = vcmask 1046528
    %v108 = vrot.slane %v70, 1
    %v109 = vrot.slane %v72, 1
    %v110 = vsel %vm107, %v108, %v109
    %v111 = vrot.slane %v71, 1
    %v112 = vrot.slane %v73, 1
    %v113 = vsel %vm107, %v111, %v112
    %vm114 = vcmask 523264
    %v116 = vsel %vm114, %v70, %v100
    %v119 = vsel %vm114, %v71, %v102
    %v121 = vld [vmem:[#allocation2] sm:$0xf]
    %v122 = vld [vmem:[#allocation2 + $0x4] sm:$0xf]
    %v123 = vld [vmem:[#allocation2 + $0x8] sm:$0xf]
    %v124 = vld [vmem:[#allocation2 + $0xc] sm:$0xf]
    %v125 = vld [vmem:[#allocation2 + $0x10] sm:$0xf]
    %v126 = vld [vmem:[#allocation2 + $0x14] sm:$0xf]
    %v127 = vld [vmem:[#allocation2 + $0x18] sm:$0xf]
    %v128 = vld [vmem:[#allocation2 + $0x1c] sm:$0xf]
    %v129 = vld [vmem:[#allocation2 + $0x20] sm:$0xf]
    %v130 = vld [vmem:[#allocation2 + $0x24] sm:$0xf]
    %v131 = vld [vmem:[#allocation2 + $0x28] sm:$0xf]
    %v132 = vld [vmem:[#allocation2 + $0x2c] sm:$0xf]
    %v133 = vld [vmem:[#allocation2 + $0x30] sm:$0xf]
    %v134 = vld [vmem:[#allocation2 + $0x34] sm:$0xf]
    %v135 = vld [vmem:[#allocation2 + $0x38] sm:$0xf]
    %v136 = vld [vmem:[#allocation2 + $0x3c] sm:$0xf]
    %v137 = vld [vmem:[#allocation2 + $0x40] sm:$0xf]
    %v138 = vld [vmem:[#allocation2 + $0x44] sm:$0xf]
    %v139 = vld [vmem:[#allocation2 + $0x48] sm:$0xf]
    %v140 = vld [vmem:[#allocation2 + $0x4c] sm:$0xf]
    %v141 = vld [vmem:[#allocation2 + $0x50] sm:$0xf]
    %v142 = vld [vmem:[#allocation2 + $0x54] sm:$0xf]
    %v143 = vld [vmem:[#allocation2 + $0x58] sm:$0xf]
    %v144 = vld [vmem:[#allocation2 + $0x5c] sm:$0xf]
    %v145 = vld [vmem:[%s2] sm:$0x1]
    %v147 = vlaneseq
    %v148 = vshrl.u32 %v147, 7
    %v149 = vsub.s32 0, %v148
    %v150 = vrot.slane %v145, %v149
    %v176 = vunpack.c.l.b16 %v121
    %v177 = vunpack.c.l.b16 %v122
    %v178 = vunpack.c.l.b16 %v123
    %v179 = vunpack.c.l.b16 %v124
    %v180 = vunpack.c.l.b16 %v125
    %v181 = vunpack.c.l.b16 %v126
    %v182 = vunpack.c.l.b16 %v127
    %v183 = vunpack.c.l.b16 %v128
    %v184 = vunpack.c.l.b16 %v129
    %v185 = vunpack.c.l.b16 %v130
    %v186 = vunpack.c.l.b16 %v131
    %v187 = vunpack.c.l.b16 %v132
    %v188 = vunpack.c.l.b16 %v133
    %v189 = vunpack.c.l.b16 %v134
    %v190 = vunpack.c.l.b16 %v135
    %v191 = vunpack.c.l.b16 %v136
    %v192 = vunpack.c.l.b16 %v137
    %v193 = vunpack.c.l.b16 %v138
    %v194 = vunpack.c.l.b16 %v139
    %v195 = vunpack.c.l.b16 %v140
    %v196 = vunpack.c.l.b16 %v141
    %v197 = vunpack.c.l.b16 %v142
    %v198 = vunpack.c.l.b16 %v143
    %v199 = vunpack.c.l.b16 %v144
    %v200 = vpack.c.b16 %v177, %v176
    %v201 = vpack.c.b16 %v179, %v178
    %v202 = vpack.c.b16 %v181, %v180
    %v203 = vpack.c.b16 %v183, %v182
    %v204 = vpack.c.b16 %v185, %v184
    %v205 = vpack.c.b16 %v187, %v186
    %v206 = vpack.c.b16 %v189, %v188
    %v207 = vpack.c.b16 %v191, %v190
    %v208 = vpack.c.b16 %v193, %v192
    %v209 = vpack.c.b16 %v195, %v194
    %v210 = vpack.c.b16 %v197, %v196
    %v211 = vpack.c.b16 %v199, %v198
    %v225 = vsel %vm114, %v110, 0
    %v228 = vsel %vm114, %v113, 0
    %230 = vmatprep.subr.bf16.mxu0 0
    %231 = vmatpush1.bf16.msra.mxu0 %v207
    %232 = vmatprep.subr.bf16.mxu0 0
    %233 = vmatpush1.bf16.msra.mxu0 %v206
    %234 = vmatprep.subr.bf16.mxu0 0
    %235 = vmatpush1.bf16.msra.mxu0 %v205
    %236 = vmatprep.subr.bf16.mxu0 0
    %237 = vmatpush1.bf16.msra.mxu0 %v204
    %238 = vmatprep.subr.bf16.mxu0 0
    %239 = vmatpush1.bf16.msra.mxu0 %v203
    %240 = vmatprep.subr.bf16.mxu0 0
    %241 = vmatpush1.bf16.msra.mxu0 %v202
    %242 = vmatprep.subr.bf16.mxu0 0
    %243 = vmatpush1.bf16.msra.mxu0 %v201
    %244 = vmatprep.subr.bf16.mxu0 0
    %245 = vmatpush1.bf16.msra.mxu0 %v200
    %246 = vmatprep.subr.bf16.mxu0 0
    %247 = vmatpush2.bf16.msra.mxu0 0
    %248 = vmatprep.subr.bf16.mxu0 0
    %249 = vmatpush2.bf16.msra.mxu0 0
    %250 = vmatprep.subr.bf16.mxu0 0
    %251 = vmatpush2.bf16.msra.mxu0 0
    %252 = vmatprep.subr.bf16.mxu0 0
    %253 = vmatpush2.bf16.msra.mxu0 0
    %254 = vmatprep.subr.bf16.mxu0 0
    %255 = vmatpush2.bf16.msra.mxu0 %v211
    %256 = vmatprep.subr.bf16.mxu0 0
    %257 = vmatpush2.bf16.msra.mxu0 %v210
    %258 = vmatprep.subr.bf16.mxu0 0
    %259 = vmatpush2.bf16.msra.mxu0 %v209
    %260 = vmatprep.subr.bf16.mxu0 0
    %261 = vmatpush2.bf16.msra.mxu0 %v208
    %262 = vmatprep.mubr.bf16.mxu0 %v225
    %263 = vmatmul.mubr.bf16.gmra.mxu0 %v116
    %v264 = vpop.f32.mrf.mxu0
    %v265 = vadd.f32 %v150, %v264
    %v266 = vpop.f32.mrf.mxu0
    %v267 = vpop.f32.mrf.mxu0
    %v268 = vadd.f32 %v150, %v267
    %v269 = vpop.f32.mrf.mxu0
    %270 = vmatprep.mubr.bf16.mxu0 %v228
    %271 = vmatmul.mubr.bf16.gmra.mxu0 %v119
    %v272 = vpop.f32.mrf.mxu0
    %v273 = vadd.f32 %v150, %v272
    %v274 = vpop.f32.mrf.mxu0
    %v275 = vpop.f32.mrf.mxu0
    %v276 = vadd.f32 %v150, %v275
    %v277 = vpop.f32.mrf.mxu0
    %278 = vdwg.mxu0
    %v279 = vmax.f32 %v265, 0.0
    %v280 = vmax.f32 %v268, 0.0
    %v281 = vmax.f32 %v273, 0.0
    %v282 = vmax.f32 %v276, 0.0
    %v283 = vpack.c.bf16 %v280, %v279
    %v284 = vpack.c.bf16 %v282, %v281
    %v286 = vshrl.u32 %v283, 16
    %v288 = vrot.slane %v286, 7
    %v289 = vshll.u32 %v283, 16
    %v291 = vor.u32 %v288, %v289
    %v293 = vshrl.u32 %v284, 16
    %v295 = vrot.slane %v293, 7
    %v296 = vshll.u32 %v284, 16
    %v298 = vor.u32 %v295, %v296
    %v303 = vsel %vm69, 0, %v291
    %v304 = vsel %vm69, 0, %v298
    %v305 = vsel %vm69, %v288, 0
    %v306 = vsel %vm69, %v295, 0
    %v308 = vshrl.u32 %v303, 16
    %v310 = vshll.u32 %v303, 16
    %v312 = vrot.slane %v310, 1
    %v313 = vor.u32 %v308, %v312
    %v315 = vshll.u32 %v305, 16
    %v317 = vrot.slane %v315, 1
    %v318 = vsel %vm74, %v313, %v317
    %v320 = vshrl.u32 %v304, 16
    %v322 = vshll.u32 %v304, 16
    %v324 = vrot.slane %v322, 1
    %v325 = vor.u32 %v320, %v324
    %v327 = vshll.u32 %v306, 16
    %v329 = vrot.slane %v327, 1
    %v330 = vsel %vm74, %v325, %v329
    %v337 = vrot.slane %v303, 1
    %v338 = vrot.slane %v305, 1
    %v339 = vsel %vm107, %v337, %v338
    %v340 = vrot.slane %v304, 1
    %v341 = vrot.slane %v306, 1
    %v342 = vsel %vm107, %v340, %v341
    %v345 = vld [vmem:[%s3] sm:$0xf]
    %v346 = vld [vmem:[%s3 + $0x4] sm:$0xf]
    %v347 = vld [vmem:[%s3 + $0x8] sm:$0xf]
    %v348 = vld [vmem:[%s3 + $0xc] sm:$0xf]
    %v349 = vld [vmem:[%s3 + $0x10] sm:$0xf]
    %v350 = vld [vmem:[%s3 + $0x14] sm:$0xf]
    %v351 = vld [vmem:[%s3 + $0x18] sm:$0xf]
    %v352 = vld [vmem:[%s3 + $0x1c] sm:$0xf]
    %v353 = vld [vmem:[%s3 + $0x20] sm:$0xf]
    %v354 = vld [vmem:[%s3 + $0x24] sm:$0xf]
    %v355 = vld [vmem:[%s3 + $0x28] sm:$0xf]
    %v356 = vld [vmem:[%s3 + $0x2c] sm:$0xf]
    %v357 = vld [vmem:[%s3 + $0x30] sm:$0xf]
    %v358 = vld [vmem:[%s3 + $0x34] sm:$0xf]
    %v359 = vld [vmem:[%s3 + $0x38] sm:$0xf]
    %v360 = vld [vmem:[%s3 + $0x3c] sm:$0xf]
    %v361 = vld [vmem:[%s3 + $0x40] sm:$0xf]
    %v362 = vld [vmem:[%s3 + $0x44] sm:$0xf]
    %v363 = vld [vmem:[%s3 + $0x48] sm:$0xf]
    %v364 = vld [vmem:[%s3 + $0x4c] sm:$0xf]
    %v365 = vld [vmem:[%s3 + $0x50] sm:$0xf]
    %v366 = vld [vmem:[%s3 + $0x54] sm:$0xf]
    %v367 = vld [vmem:[%s3 + $0x58] sm:$0xf]
    %v368 = vld [vmem:[%s3 + $0x5c] sm:$0xf]
    %v369 = vld [vmem:[%s3 + $0x60] sm:$0xf]
    %v370 = vld [vmem:[%s3 + $0x64] sm:$0xf]
    %v371 = vld [vmem:[%s3 + $0x68] sm:$0xf]
    %v372 = vld [vmem:[%s3 + $0x6c] sm:$0xf]
    %v373 = vld [vmem:[%s3 + $0x70] sm:$0xf]
    %v374 = vld [vmem:[%s3 + $0x74] sm:$0xf]
    %v375 = vld [vmem:[%s3 + $0x78] sm:$0xf]
    %v376 = vld [vmem:[%s3 + $0x7c] sm:$0xf]
    %v377 = vld [vmem:[%s3 + $0x80] sm:$0xf]
    %v378 = vld [vmem:[%s3 + $0x84] sm:$0xf]
    %v379 = vld [vmem:[%s3 + $0x88] sm:$0xf]
    %v380 = vld [vmem:[%s3 + $0x8c] sm:$0xf]
    %v381 = vld [vmem:[%s3 + $0x90] sm:$0xf]
    %v382 = vld [vmem:[%s3 + $0x94] sm:$0xf]
    %v383 = vld [vmem:[%s3 + $0x98] sm:$0xf]
    %v384 = vld [vmem:[%s3 + $0x9c] sm:$0xf]
    %v385 = vld [vmem:[%s3 + $0xa0] sm:$0xf]
    %v386 = vld [vmem:[%s3 + $0xa4] sm:$0xf]
    %v387 = vld [vmem:[%s3 + $0xa8] sm:$0xf]
    %v388 = vld [vmem:[%s3 + $0xac] sm:$0xf]
    %v389 = vld [vmem:[%s3 + $0xb0] sm:$0xf]
    %v390 = vld [vmem:[%s3 + $0xb4] sm:$0xf]
    %v391 = vld [vmem:[%s3 + $0xb8] sm:$0xf]
    %v392 = vld [vmem:[%s3 + $0xbc] sm:$0xf]
    %v393 = vld [vmem:[%s4] sm:$0x1]
    %v395 = vlaneseq
    %v396 = vshrl.u32 %v395, 7
    %v397 = vsub.s32 0, %v396
    %v398 = vrot.slane %v393, %v397
    %v448 = vunpack.c.l.b16 %v345
    %v449 = vunpack.c.l.b16 %v346
    %v450 = vunpack.c.l.b16 %v347
    %v451 = vunpack.c.l.b16 %v348
    %v452 = vunpack.c.l.b16 %v349
    %v453 = vunpack.c.l.b16 %v350
    %v454 = vunpack.c.l.b16 %v351
    %v455 = vunpack.c.l.b16 %v352
    %v456 = vunpack.c.l.b16 %v353
    %v457 = vunpack.c.l.b16 %v354
    %v458 = vunpack.c.l.b16 %v355
    %v459 = vunpack.c.l.b16 %v356
    %v460 = vunpack.c.l.b16 %v357
    %v461 = vunpack.c.l.b16 %v358
    %v462 = vunpack.c.l.b16 %v359
    %v463 = vunpack.c.l.b16 %v360
    %v464 = vunpack.c.l.b16 %v361
    %v465 = vunpack.c.l.b16 %v362
    %v466 = vunpack.c.l.b16 %v363
    %v467 = vunpack.c.l.b16 %v364
    %v468 = vunpack.c.l.b16 %v365
    %v469 = vunpack.c.l.b16 %v366
    %v470 = vunpack.c.l.b16 %v367
    %v471 = vunpack.c.l.b16 %v368
    %v472 = vunpack.c.l.b16 %v369
    %v473 = vunpack.c.l.b16 %v370
    %v474 = vunpack.c.l.b16 %v371
    %v475 = vunpack.c.l.b16 %v372
    %v476 = vunpack.c.l.b16 %v373
    %v477 = vunpack.c.l.b16 %v374
    %v478 = vunpack.c.l.b16 %v375
    %v479 = vunpack.c.l.b16 %v376
    %v480 = vunpack.c.l.b16 %v377
    %v481 = vunpack.c.l.b16 %v378
    %v482 = vunpack.c.l.b16 %v379
    %v483 = vunpack.c.l.b16 %v380
    %v484 = vunpack.c.l.b16 %v381
    %v485 = vunpack.c.l.b16 %v382
    %v486 = vunpack.c.l.b16 %v383
    %v487 = vunpack.c.l.b16 %v384
    %v488 = vunpack.c.l.b16 %v385
    %v489 = vunpack.c.l.b16 %v386
    %v490 = vunpack.c.l.b16 %v387
    %v491 = vunpack.c.l.b16 %v388
    %v492 = vunpack.c.l.b16 %v389
    %v493 = vunpack.c.l.b16 %v390
    %v494 = vunpack.c.l.b16 %v391
    %v495 = vunpack.c.l.b16 %v392
    %v496 = vpack.c.b16 %v449, %v448
    %v497 = vpack.c.b16 %v451, %v450
    %v498 = vpack.c.b16 %v453, %v452
    %v499 = vpack.c.b16 %v455, %v454
    %v500 = vpack.c.b16 %v457, %v456
    %v501 = vpack.c.b16 %v459, %v458
    %v502 = vpack.c.b16 %v461, %v460
    %v503 = vpack.c.b16 %v463, %v462
    %v504 = vpack.c.b16 %v465, %v464
    %v505 = vpack.c.b16 %v467, %v466
    %v506 = vpack.c.b16 %v469, %v468
    %v507 = vpack.c.b16 %v471, %v470
    %v508 = vpack.c.b16 %v473, %v472
    %v509 = vpack.c.b16 %v475, %v474
    %v510 = vpack.c.b16 %v477, %v476
    %v511 = vpack.c.b16 %v479, %v478
    %v512 = vpack.c.b16 %v481, %v480
    %v513 = vpack.c.b16 %v483, %v482
    %v514 = vpack.c.b16 %v485, %v484
    %v515 = vpack.c.b16 %v487, %v486
    %v516 = vpack.c.b16 %v489, %v488
    %v517 = vpack.c.b16 %v491, %v490
    %v518 = vpack.c.b16 %v493, %v492
    %v519 = vpack.c.b16 %v495, %v494
    %544 = vmatprep.subr.bf16.mxu0 0
    %545 = vmatpush1.bf16.msra.mxu0 %v503
    %546 = vmatprep.subr.bf16.mxu0 0
    %547 = vmatpush1.bf16.msra.mxu0 %v502
    %548 = vmatprep.subr.bf16.mxu0 0
    %549 = vmatpush1.bf16.msra.mxu0 %v501
    %550 = vmatprep.subr.bf16.mxu0 0
    %551 = vmatpush1.bf16.msra.mxu0 %v500
    %552 = vmatprep.subr.bf16.mxu0 0
    %553 = vmatpush1.bf16.msra.mxu0 %v499
    %554 = vmatprep.subr.bf16.mxu0 0
    %555 = vmatpush1.bf16.msra.mxu0 %v498
    %556 = vmatprep.subr.bf16.mxu0 0
    %557 = vmatpush1.bf16.msra.mxu0 %v497
    %558 = vmatprep.subr.bf16.mxu0 0
    %559 = vmatpush1.bf16.msra.mxu0 %v496
    %560 = vmatprep.subr.bf16.mxu0 0
    %561 = vmatpush2.bf16.msra.mxu0 %v511
    %562 = vmatprep.subr.bf16.mxu0 0
    %563 = vmatpush2.bf16.msra.mxu0 %v510
    %564 = vmatprep.subr.bf16.mxu0 0
    %565 = vmatpush2.bf16.msra.mxu0 %v509
    %566 = vmatprep.subr.bf16.mxu0 0
    %567 = vmatpush2.bf16.msra.mxu0 %v508
    %568 = vmatprep.subr.bf16.mxu0 0
    %569 = vmatpush2.bf16.msra.mxu0 %v507
    %570 = vmatprep.subr.bf16.mxu0 0
    %571 = vmatpush2.bf16.msra.mxu0 %v506
    %572 = vmatprep.subr.bf16.mxu0 0
    %573 = vmatpush2.bf16.msra.mxu0 %v505
    %574 = vmatprep.subr.bf16.mxu0 0
    %575 = vmatpush2.bf16.msra.mxu0 %v504
    %576 = vmatprep.mubr.bf16.mxu0 %v318
    %577 = vmatmul.mubr.bf16.gmra.mxu0 %v303
    %v578 = vpop.f32.mrf.mxu0
    %v579 = vadd.f32 %v398, %v578
    %v580 = vpop.f32.mrf.mxu0
    %v581 = vpop.f32.mrf.mxu0
    %v582 = vadd.f32 %v398, %v581
    %v583 = vpop.f32.mrf.mxu0
    %584 = vmatprep.mubr.bf16.mxu0 %v330
    %585 = vmatmul.mubr.bf16.gmra.mxu0 %v304
    %v586 = vpop.f32.mrf.mxu0
    %v587 = vadd.f32 %v398, %v586
    %v588 = vpop.f32.mrf.mxu0
    %v589 = vpop.f32.mrf.mxu0
    %v590 = vadd.f32 %v398, %v589
    %v591 = vpop.f32.mrf.mxu0
    %592 = vdwg.mxu0
    %593 = vmatprep.subr.bf16.mxu0 0
    %594 = vmatpush1.bf16.msra.mxu0 %v519
    %595 = vmatprep.subr.bf16.mxu0 0
    %596 = vmatpush1.bf16.msra.mxu0 %v518
    %597 = vmatprep.subr.bf16.mxu0 0
    %598 = vmatpush1.bf16.msra.mxu0 %v517
    %599 = vmatprep.subr.bf16.mxu0 0
    %600 = vmatpush1.bf16.msra.mxu0 %v516
    %601 = vmatprep.subr.bf16.mxu0 0
    %602 = vmatpush1.bf16.msra.mxu0 %v515
    %603 = vmatprep.subr.bf16.mxu0 0
    %604 = vmatpush1.bf16.msra.mxu0 %v514
    %605 = vmatprep.subr.bf16.mxu0 0
    %606 = vmatpush1.bf16.msra.mxu0 %v513
    %607 = vmatprep.subr.bf16.mxu0 0
    %608 = vmatpush1.bf16.msra.mxu0 %v512
    %609 = vmatprep.subr.bf16.mxu0 0
    %610 = vmatpush2.bf16.msra.mxu0 0
    %611 = vmatprep.subr.bf16.mxu0 0
    %612 = vmatpush2.bf16.msra.mxu0 0
    %613 = vmatprep.subr.bf16.mxu0 0
    %614 = vmatpush2.bf16.msra.mxu0 0
    %615 = vmatprep.subr.bf16.mxu0 0
    %616 = vmatpush2.bf16.msra.mxu0 0
    %617 = vmatprep.subr.bf16.mxu0 0
    %618 = vmatpush2.bf16.msra.mxu0 0
    %619 = vmatprep.subr.bf16.mxu0 0
    %620 = vmatpush2.bf16.msra.mxu0 0
    %621 = vmatprep.subr.bf16.mxu0 0
    %622 = vmatpush2.bf16.msra.mxu0 0
    %623 = vmatprep.subr.bf16.mxu0 0
    %624 = vmatpush2.bf16.msra.mxu0 0
    %625 = vmatprep.mubr.bf16.mxu0 0
    %626 = vmatmul.mubr.bf16.gmra.mxu0 %v339
    %v627 = vpop.f32.mrf.mxu0
    %v628 = vadd.f32 %v579, %v627
    %v629 = vpop.f32.mrf.mxu0
    %v630 = vpop.f32.mrf.mxu0
    %v631 = vadd.f32 %v582, %v630
    %v632 = vpop.f32.mrf.mxu0
    %633 = vmatprep.mubr.bf16.mxu0 0
    %634 = vmatmul.mubr.bf16.gmra.mxu0 %v342
    %v635 = vpop.f32.mrf.mxu0
    %v636 = vadd.f32 %v587, %v635
    %v637 = vpop.f32.mrf.mxu0
    %v638 = vpop.f32.mrf.mxu0
    %v639 = vadd.f32 %v590, %v638
    %v640 = vpop.f32.mrf.mxu0
    %641 = vdwg.mxu0
    %v642 = vmax.f32 %v628, 0.0
    %v643 = vmax.f32 %v631, 0.0
    %v644 = vmax.f32 %v636, 0.0
    %v645 = vmax.f32 %v639, 0.0
    %650 = vrot.lane.b32.xlu0 %v642, 112
    %v651 = vpop.permute.xlu0 %650
    %652 = vrot.lane.b32.xlu0 %v643, 112
    %v653 = vpop.permute.xlu0 %652
    %654 = vrot.lane.b32.xlu0 %v644, 112
    %v655 = vpop.permute.xlu0 %654
    %656 = vrot.lane.b32.xlu0 %v645, 112
    %v657 = vpop.permute.xlu0 %656
    %662 = vrot.lane.b32.xlu0 %v642, 96
    %v663 = vpop.permute.xlu0 %662
    %664 = vrot.lane.b32.xlu0 %v643, 96
    %v665 = vpop.permute.xlu0 %664
    %666 = vrot.lane.b32.xlu0 %v644, 96
    %v667 = vpop.permute.xlu0 %666
    %668 = vrot.lane.b32.xlu0 %v645, 96
    %v669 = vpop.permute.xlu0 %668
    %674 = vrot.lane.b32.xlu0 %v642, 80
    %v675 = vpop.permute.xlu0 %674
    %676 = vrot.lane.b32.xlu0 %v643, 80
    %v677 = vpop.permute.xlu0 %676
    %678 = vrot.lane.b32.xlu0 %v644, 80
    %v679 = vpop.permute.xlu0 %678
    %680 = vrot.lane.b32.xlu0 %v645, 80
    %v681 = vpop.permute.xlu0 %680
    %686 = vrot.lane.b32.xlu0 %v642, 64
    %v687 = vpop.permute.xlu0 %686
    %688 = vrot.lane.b32.xlu0 %v643, 64
    %v689 = vpop.permute.xlu0 %688
    %690 = vrot.lane.b32.xlu0 %v644, 64
    %v691 = vpop.permute.xlu0 %690
    %692 = vrot.lane.b32.xlu0 %v645, 64
    %v693 = vpop.permute.xlu0 %692
    %698 = vrot.lane.b32.xlu0 %v642, 48
    %v699 = vpop.permute.xlu0 %698
    %700 = vrot.lane.b32.xlu0 %v643, 48
    %v701 = vpop.permute.xlu0 %700
    %702 = vrot.lane.b32.xlu0 %v644, 48
    %v703 = vpop.permute.xlu0 %702
    %704 = vrot.lane.b32.xlu0 %v645, 48
    %v705 = vpop.permute.xlu0 %704
    %710 = vrot.lane.b32.xlu0 %v642, 32
    %v711 = vpop.permute.xlu0 %710
    %712 = vrot.lane.b32.xlu0 %v643, 32
    %v713 = vpop.permute.xlu0 %712
    %714 = vrot.lane.b32.xlu0 %v644, 32
    %v715 = vpop.permute.xlu0 %714
    %716 = vrot.lane.b32.xlu0 %v645, 32
    %v717 = vpop.permute.xlu0 %716
    %722 = vrot.lane.b32.xlu0 %v642, 16
    %v723 = vpop.permute.xlu0 %722
    %724 = vrot.lane.b32.xlu0 %v643, 16
    %v725 = vpop.permute.xlu0 %724
    %726 = vrot.lane.b32.xlu0 %v644, 16
    %v727 = vpop.permute.xlu0 %726
    %728 = vrot.lane.b32.xlu0 %v645, 16
    %v729 = vpop.permute.xlu0 %728
    %v734 = vcombine.low %v642, %v663
    %v735 = vcombine.high %v642, %v663
    %v737 = vunpack.c.l.s4 1983009808
    %v738 = vunpack.c.0.s8 %v737
    %v739 = vlaneseq
    %v740 = vshrl.u32 %v739, 7
    %v741 = vsub.s32 %v738, %v740
    %v742 = vrot.slane %v734, %v741
    %v744 = vunpack.c.l.s4 1983009808
    %v745 = vunpack.c.0.s8 %v744
    %v746 = vlaneseq
    %v747 = vshrl.u32 %v746, 7
    %v748 = vsub.s32 %v745, %v747
    %v749 = vrot.slane %v735, %v748
    %v750 = vcombine.low %v651, %v675
    %v751 = vcombine.high %v651, %v675
    %v753 = vunpack.c.l.s4 1983009808
    %v754 = vunpack.c.0.s8 %v753
    %v755 = vlaneseq
    %v756 = vshrl.u32 %v755, 7
    %v757 = vsub.s32 %v754, %v756
    %v758 = vrot.slane %v750, %v757
    %v760 = vunpack.c.l.s4 1983009808
    %v761 = vunpack.c.0.s8 %v760
    %v762 = vlaneseq
    %v763 = vshrl.u32 %v762, 7
    %v764 = vsub.s32 %v761, %v763
    %v765 = vrot.slane %v751, %v764
    %v766 = vcombine.low %v687, %v711
    %v767 = vcombine.high %v687, %v711
    %v769 = vunpack.c.l.s4 1983009808
    %v770 = vunpack.c.0.s8 %v769
    %v771 = vlaneseq
    %v772 = vshrl.u32 %v771, 7
    %v773 = vsub.s32 %v770, %v772
    %v774 = vrot.slane %v766, %v773
    %v776 = vunpack.c.l.s4 1983009808
    %v777 = vunpack.c.0.s8 %v776
    %v778 = vlaneseq
    %v779 = vshrl.u32 %v778, 7
    %v780 = vsub.s32 %v777, %v779
    %v781 = vrot.slane %v767, %v780
    %v782 = vcombine.low %v699, %v723
    %v783 = vcombine.high %v699, %v723
    %v785 = vunpack.c.l.s4 1983009808
    %v786 = vunpack.c.0.s8 %v785
    %v787 = vlaneseq
    %v788 = vshrl.u32 %v787, 7
    %v789 = vsub.s32 %v786, %v788
    %v790 = vrot.slane %v782, %v789
    %v792 = vunpack.c.l.s4 1983009808
    %v793 = vunpack.c.0.s8 %v792
    %v794 = vlaneseq
    %v795 = vshrl.u32 %v794, 7
    %v796 = vsub.s32 %v793, %v795
    %v797 = vrot.slane %v783, %v796
    %v798 = vcombine.low %v742, %v758
    %v799 = vcombine.high %v742, %v758
    %v801 = vunpack.c.l.s4 1934713408
    %v802 = vunpack.c.0.s8 %v801
    %v803 = vlaneseq
    %v804 = vshrl.u32 %v803, 7
    %v805 = vsub.s32 %v802, %v804
    %v806 = vrot.slane %v798, %v805
    %v808 = vunpack.c.l.s4 1934713408
    %v809 = vunpack.c.0.s8 %v808
    %v810 = vlaneseq
    %v811 = vshrl.u32 %v810, 7
    %v812 = vsub.s32 %v809, %v811
    %v813 = vrot.slane %v799, %v812
    %v814 = vcombine.low %v749, %v765
    %v815 = vcombine.high %v749, %v765
    %v817 = vunpack.c.l.s4 1934713408
    %v818 = vunpack.c.0.s8 %v817
    %v819 = vlaneseq
    %v820 = vshrl.u32 %v819, 7
    %v821 = vsub.s32 %v818, %v820
    %v822 = vrot.slane %v814, %v821
    %v824 = vunpack.c.l.s4 1934713408
    %v825 = vunpack.c.0.s8 %v824
    %v826 = vlaneseq
    %v827 = vshrl.u32 %v826, 7
    %v828 = vsub.s32 %v825, %v827
    %v829 = vrot.slane %v815, %v828
    %v830 = vcombine.low %v774, %v790
    %v831 = vcombine.high %v774, %v790
    %v833 = vunpack.c.l.s4 1934713408
    %v834 = vunpack.c.0.s8 %v833
    %v835 = vlaneseq
    %v836 = vshrl.u32 %v835, 7
    %v837 = vsub.s32 %v834, %v836
    %v838 = vrot.slane %v830, %v837
    %v840 = vunpack.c.l.s4 1934713408
    %v841 = vunpack.c.0.s8 %v840
    %v842 = vlaneseq
    %v843 = vshrl.u32 %v842, 7
    %v844 = vsub.s32 %v841, %v843
    %v845 = vrot.slane %v831, %v844
    %v846 = vcombine.low %v781, %v797
    %v847 = vcombine.high %v781, %v797
    %v849 = vunpack.c.l.s4 1934713408
    %v850 = vunpack.c.0.s8 %v849
    %v851 = vlaneseq
    %v852 = vshrl.u32 %v851, 7
    %v853 = vsub.s32 %v850, %v852
    %v854 = vrot.slane %v846, %v853
    %v856 = vunpack.c.l.s4 1934713408
    %v857 = vunpack.c.0.s8 %v856
    %v858 = vlaneseq
    %v859 = vshrl.u32 %v858, 7
    %v860 = vsub.s32 %v857, %v859
    %v861 = vrot.slane %v847, %v860
    %v862 = vcombine.low %v806, %v838
    %v863 = vcombine.high %v806, %v838
    %v864 = vcombine.low %v813, %v845
    %v865 = vcombine.high %v813, %v845
    %v866 = vcombine.low %v822, %v854
    %v867 = vcombine.high %v822, %v854
    %v868 = vcombine.low %v829, %v861
    %v869 = vcombine.high %v829, %v861
    %v870 = vcombine.low %v643, %v665
    %v871 = vcombine.high %v643, %v665
    %v873 = vunpack.c.l.s4 1983009808
    %v874 = vunpack.c.0.s8 %v873
    %v875 = vlaneseq
    %v876 = vshrl.u32 %v875, 7
    %v877 = vsub.s32 %v874, %v876
    %v878 = vrot.slane %v870, %v877
    %v880 = vunpack.c.l.s4 1983009808
    %v881 = vunpack.c.0.s8 %v880
    %v882 = vlaneseq
    %v883 = vshrl.u32 %v882, 7
    %v884 = vsub.s32 %v881, %v883
    %v885 = vrot.slane %v871, %v884
    %v886 = vcombine.low %v653, %v677
    %v887 = vcombine.high %v653, %v677
    %v889 = vunpack.c.l.s4 1983009808
    %v890 = vunpack.c.0.s8 %v889
    %v891 = vlaneseq
    %v892 = vshrl.u32 %v891, 7
    %v893 = vsub.s32 %v890, %v892
    %v894 = vrot.slane %v886, %v893
    %v896 = vunpack.c.l.s4 1983009808
    %v897 = vunpack.c.0.s8 %v896
    %v898 = vlaneseq
    %v899 = vshrl.u32 %v898, 7
    %v900 = vsub.s32 %v897, %v899
    %v901 = vrot.slane %v887, %v900
    %v902 = vcombine.low %v689, %v713
    %v903 = vcombine.high %v689, %v713
    %v905 = vunpack.c.l.s4 1983009808
    %v906 = vunpack.c.0.s8 %v905
    %v907 = vlaneseq
    %v908 = vshrl.u32 %v907, 7
    %v909 = vsub.s32 %v906, %v908
    %v910 = vrot.slane %v902, %v909
    %v912 = vunpack.c.l.s4 1983009808
    %v913 = vunpack.c.0.s8 %v912
    %v914 = vlaneseq
    %v915 = vshrl.u32 %v914, 7
    %v916 = vsub.s32 %v913, %v915
    %v917 = vrot.slane %v903, %v916
    %v918 = vcombine.low %v701, %v725
    %v919 = vcombine.high %v701, %v725
    %v921 = vunpack.c.l.s4 1983009808
    %v922 = vunpack.c.0.s8 %v921
    %v923 = vlaneseq
    %v924 = vshrl.u32 %v923, 7
    %v925 = vsub.s32 %v922, %v924
    %v926 = vrot.slane %v918, %v925
    %v928 = vunpack.c.l.s4 1983009808
    %v929 = vunpack.c.0.s8 %v928
    %v930 = vlaneseq
    %v931 = vshrl.u32 %v930, 7
    %v932 = vsub.s32 %v929, %v931
    %v933 = vrot.slane %v919, %v932
    %v934 = vcombine.low %v878, %v894
    %v935 = vcombine.high %v878, %v894
    %v937 = vunpack.c.l.s4 1934713408
    %v938 = vunpack.c.0.s8 %v937
    %v939 = vlaneseq
    %v940 = vshrl.u32 %v939, 7
    %v941 = vsub.s32 %v938, %v940
    %v942 = vrot.slane %v934, %v941
    %v944 = vunpack.c.l.s4 1934713408
    %v945 = vunpack.c.0.s8 %v944
    %v946 = vlaneseq
    %v947 = vshrl.u32 %v946, 7
    %v948 = vsub.s32 %v945, %v947
    %v949 = vrot.slane %v935, %v948
    %v950 = vcombine.low %v885, %v901
    %v951 = vcombine.high %v885, %v901
    %v953 = vunpack.c.l.s4 1934713408
    %v954 = vunpack.c.0.s8 %v953
    %v955 = vlaneseq
    %v956 = vshrl.u32 %v955, 7
    %v957 = vsub.s32 %v954, %v956
    %v958 = vrot.slane %v950, %v957
    %v960 = vunpack.c.l.s4 1934713408
    %v961 = vunpack.c.0.s8 %v960
    %v962 = vlaneseq
    %v963 = vshrl.u32 %v962, 7
    %v964 = vsub.s32 %v961, %v963
    %v965 = vrot.slane %v951, %v964
    %v966 = vcombine.low %v910, %v926
    %v967 = vcombine.high %v910, %v926
    %v969 = vunpack.c.l.s4 1934713408
    %v970 = vunpack.c.0.s8 %v969
    %v971 = vlaneseq
    %v972 = vshrl.u32 %v971, 7
    %v973 = vsub.s32 %v970, %v972
    %v974 = vrot.slane %v966, %v973
    %v976 = vunpack.c.l.s4 1934713408
    %v977 = vunpack.c.0.s8 %v976
    %v978 = vlaneseq
    %v979 = vshrl.u32 %v978, 7
    %v980 = vsub.s32 %v977, %v979
    %v981 = vrot.slane %v967, %v980
    %v982 = vcombine.low %v917, %v933
    %v983 = vcombine.high %v917, %v933
    %v985 = vunpack.c.l.s4 1934713408
    %v986 = vunpack.c.0.s8 %v985
    %v987 = vlaneseq
    %v988 = vshrl.u32 %v987, 7
    %v989 = vsub.s32 %v986, %v988
    %v990 = vrot.slane %v982, %v989
    %v992 = vunpack.c.l.s4 1934713408
    %v993 = vunpack.c.0.s8 %v992
    %v994 = vlaneseq
    %v995 = vshrl.u32 %v994, 7
    %v996 = vsub.s32 %v993, %v995
    %v997 = vrot.slane %v983, %v996
    %v998 = vcombine.low %v942, %v974
    %v999 = vcombine.high %v942, %v974
    %v1000 = vcombine.low %v949, %v981
    %v1001 = vcombine.high %v949, %v981
    %v1002 = vcombine.low %v958, %v990
    %v1003 = vcombine.high %v958, %v990
    %v1004 = vcombine.low %v965, %v997
    %v1005 = vcombine.high %v965, %v997
    %v1006 = vcombine.low %v644, %v667
    %v1007 = vcombine.high %v644, %v667
    %v1009 = vunpack.c.l.s4 1983009808
    %v1010 = vunpack.c.0.s8 %v1009
    %v1011 = vlaneseq
    %v1012 = vshrl.u32 %v1011, 7
    %v1013 = vsub.s32 %v1010, %v1012
    %v1014 = vrot.slane %v1006, %v1013
    %v1016 = vunpack.c.l.s4 1983009808
    %v1017 = vunpack.c.0.s8 %v1016
    %v1018 = vlaneseq
    %v1019 = vshrl.u32 %v1018, 7
    %v1020 = vsub.s32 %v1017, %v1019
    %v1021 = vrot.slane %v1007, %v1020
    %v1022 = vcombine.low %v655, %v679
    %v1023 = vcombine.high %v655, %v679
    %v1025 = vunpack.c.l.s4 1983009808
    %v1026 = vunpack.c.0.s8 %v1025
    %v1027 = vlaneseq
    %v1028 = vshrl.u32 %v1027, 7
    %v1029 = vsub.s32 %v1026, %v1028
    %v1030 = vrot.slane %v1022, %v1029
    %v1032 = vunpack.c.l.s4 1983009808
    %v1033 = vunpack.c.0.s8 %v1032
    %v1034 = vlaneseq
    %v1035 = vshrl.u32 %v1034, 7
    %v1036 = vsub.s32 %v1033, %v1035
    %v1037 = vrot.slane %v1023, %v1036
    %v1038 = vcombine.low %v691, %v715
    %v1039 = vcombine.high %v691, %v715
    %v1041 = vunpack.c.l.s4 1983009808
    %v1042 = vunpack.c.0.s8 %v1041
    %v1043 = vlaneseq
    %v1044 = vshrl.u32 %v1043, 7
    %v1045 = vsub.s32 %v1042, %v1044
    %v1046 = vrot.slane %v1038, %v1045
    %v1048 = vunpack.c.l.s4 1983009808
    %v1049 = vunpack.c.0.s8 %v1048
    %v1050 = vlaneseq
    %v1051 = vshrl.u32 %v1050, 7
    %v1052 = vsub.s32 %v1049, %v1051
    %v1053 = vrot.slane %v1039, %v1052
    %v1054 = vcombine.low %v703, %v727
    %v1055 = vcombine.high %v703, %v727
    %v1057 = vunpack.c.l.s4 1983009808
    %v1058 = vunpack.c.0.s8 %v1057
    %v1059 = vlaneseq
    %v1060 = vshrl.u32 %v1059, 7
    %v1061 = vsub.s32 %v1058, %v1060
    %v1062 = vrot.slane %v1054, %v1061
    %v1064 = vunpack.c.l.s4 1983009808
    %v1065 = vunpack.c.0.s8 %v1064
    %v1066 = vlaneseq
    %v1067 = vshrl.u32 %v1066, 7
    %v1068 = vsub.s32 %v1065, %v1067
    %v1069 = vrot.slane %v1055, %v1068
    %v1070 = vcombine.low %v1014, %v1030
    %v1071 = vcombine.high %v1014, %v1030
    %v1073 = vunpack.c.l.s4 1934713408
    %v1074 = vunpack.c.0.s8 %v1073
    %v1075 = vlaneseq
    %v1076 = vshrl.u32 %v1075, 7
    %v1077 = vsub.s32 %v1074, %v1076
    %v1078 = vrot.slane %v1070, %v1077
    %v1080 = vunpack.c.l.s4 1934713408
    %v1081 = vunpack.c.0.s8 %v1080
    %v1082 = vlaneseq
    %v1083 = vshrl.u32 %v1082, 7
    %v1084 = vsub.s32 %v1081, %v1083
    %v1085 = vrot.slane %v1071, %v1084
    %v1086 = vcombine.low %v1021, %v1037
    %v1087 = vcombine.high %v1021, %v1037
    %v1089 = vunpack.c.l.s4 1934713408
    %v1090 = vunpack.c.0.s8 %v1089
    %v1091 = vlaneseq
    %v1092 = vshrl.u32 %v1091, 7
    %v1093 = vsub.s32 %v1090, %v1092
    %v1094 = vrot.slane %v1086, %v1093
    %v1096 = vunpack.c.l.s4 1934713408
    %v1097 = vunpack.c.0.s8 %v1096
    %v1098 = vlaneseq
    %v1099 = vshrl.u32 %v1098, 7
    %v1100 = vsub.s32 %v1097, %v1099
    %v1101 = vrot.slane %v1087, %v1100
    %v1102 = vcombine.low %v1046, %v1062
    %v1103 = vcombine.high %v1046, %v1062
    %v1105 = vunpack.c.l.s4 1934713408
    %v1106 = vunpack.c.0.s8 %v1105
    %v1107 = vlaneseq
    %v1108 = vshrl.u32 %v1107, 7
    %v1109 = vsub.s32 %v1106, %v1108
    %v1110 = vrot.slane %v1102, %v1109
    %v1112 = vunpack.c.l.s4 1934713408
    %v1113 = vunpack.c.0.s8 %v1112
    %v1114 = vlaneseq
    %v1115 = vshrl.u32 %v1114, 7
    %v1116 = vsub.s32 %v1113, %v1115
    %v1117 = vrot.slane %v1103, %v1116
    %v1118 = vcombine.low %v1053, %v1069
    %v1119 = vcombine.high %v1053, %v1069
    %v1121 = vunpack.c.l.s4 1934713408
    %v1122 = vunpack.c.0.s8 %v1121
    %v1123 = vlaneseq
    %v1124 = vshrl.u32 %v1123, 7
    %v1125 = vsub.s32 %v1122, %v1124
    %v1126 = vrot.slane %v1118, %v1125
    %v1128 = vunpack.c.l.s4 1934713408
    %v1129 = vunpack.c.0.s8 %v1128
    %v1130 = vlaneseq
    %v1131 = vshrl.u32 %v1130, 7
    %v1132 = vsub.s32 %v1129, %v1131
    %v1133 = vrot.slane %v1119, %v1132
    %v1134 = vcombine.low %v1078, %v1110
    %v1135 = vcombine.high %v1078, %v1110
    %v1136 = vcombine.low %v1085, %v1117
    %v1137 = vcombine.high %v1085, %v1117
    %v1138 = vcombine.low %v1094, %v1126
    %v1139 = vcombine.high %v1094, %v1126
    %v1140 = vcombine.low %v1101, %v1133
    %v1141 = vcombine.high %v1101, %v1133
    %v1142 = vcombine.low %v645, %v669
    %v1143 = vcombine.high %v645, %v669
    %v1145 = vunpack.c.l.s4 1983009808
    %v1146 = vunpack.c.0.s8 %v1145
    %v1147 = vlaneseq
    %v1148 = vshrl.u32 %v1147, 7
    %v1149 = vsub.s32 %v1146, %v1148
    %v1150 = vrot.slane %v1142, %v1149
    %v1152 = vunpack.c.l.s4 1983009808
    %v1153 = vunpack.c.0.s8 %v1152
    %v1154 = vlaneseq
    %v1155 = vshrl.u32 %v1154, 7
    %v1156 = vsub.s32 %v1153, %v1155
    %v1157 = vrot.slane %v1143, %v1156
    %v1158 = vcombine.low %v657, %v681
    %v1159 = vcombine.high %v657, %v681
    %v1161 = vunpack.c.l.s4 1983009808
    %v1162 = vunpack.c.0.s8 %v1161
    %v1163 = vlaneseq
    %v1164 = vshrl.u32 %v1163, 7
    %v1165 = vsub.s32 %v1162, %v1164
    %v1166 = vrot.slane %v1158, %v1165
    %v1168 = vunpack.c.l.s4 1983009808
    %v1169 = vunpack.c.0.s8 %v1168
    %v1170 = vlaneseq
    %v1171 = vshrl.u32 %v1170, 7
    %v1172 = vsub.s32 %v1169, %v1171
    %v1173 = vrot.slane %v1159, %v1172
    %v1174 = vcombine.low %v693, %v717
    %v1175 = vcombine.high %v693, %v717
    %v1177 = vunpack.c.l.s4 1983009808
    %v1178 = vunpack.c.0.s8 %v1177
    %v1179 = vlaneseq
    %v1180 = vshrl.u32 %v1179, 7
    %v1181 = vsub.s32 %v1178, %v1180
    %v1182 = vrot.slane %v1174, %v1181
    %v1184 = vunpack.c.l.s4 1983009808
    %v1185 = vunpack.c.0.s8 %v1184
    %v1186 = vlaneseq
    %v1187 = vshrl.u32 %v1186, 7
    %v1188 = vsub.s32 %v1185, %v1187
    %v1189 = vrot.slane %v1175, %v1188
    %v1190 = vcombine.low %v705, %v729
    %v1191 = vcombine.high %v705, %v729
    %v1193 = vunpack.c.l.s4 1983009808
    %v1194 = vunpack.c.0.s8 %v1193
    %v1195 = vlaneseq
    %v1196 = vshrl.u32 %v1195, 7
    %v1197 = vsub.s32 %v1194, %v1196
    %v1198 = vrot.slane %v1190, %v1197
    %v1200 = vunpack.c.l.s4 1983009808
    %v1201 = vunpack.c.0.s8 %v1200
    %v1202 = vlaneseq
    %v1203 = vshrl.u32 %v1202, 7
    %v1204 = vsub.s32 %v1201, %v1203
    %v1205 = vrot.slane %v1191, %v1204
    %v1206 = vcombine.low %v1150, %v1166
    %v1207 = vcombine.high %v1150, %v1166
    %v1209 = vunpack.c.l.s4 1934713408
    %v1210 = vunpack.c.0.s8 %v1209
    %v1211 = vlaneseq
    %v1212 = vshrl.u32 %v1211, 7
    %v1213 = vsub.s32 %v1210, %v1212
    %v1214 = vrot.slane %v1206, %v1213
    %v1216 = vunpack.c.l.s4 1934713408
    %v1217 = vunpack.c.0.s8 %v1216
    %v1218 = vlaneseq
    %v1219 = vshrl.u32 %v1218, 7
    %v1220 = vsub.s32 %v1217, %v1219
    %v1221 = vrot.slane %v1207, %v1220
    %v1222 = vcombine.low %v1157, %v1173
    %v1223 = vcombine.high %v1157, %v1173
    %v1225 = vunpack.c.l.s4 1934713408
    %v1226 = vunpack.c.0.s8 %v1225
    %v1227 = vlaneseq
    %v1228 = vshrl.u32 %v1227, 7
    %v1229 = vsub.s32 %v1226, %v1228
    %v1230 = vrot.slane %v1222, %v1229
    %v1232 = vunpack.c.l.s4 1934713408
    %v1233 = vunpack.c.0.s8 %v1232
    %v1234 = vlaneseq
    %v1235 = vshrl.u32 %v1234, 7
    %v1236 = vsub.s32 %v1233, %v1235
    %v1237 = vrot.slane %v1223, %v1236
    %v1238 = vcombine.low %v1182, %v1198
    %v1239 = vcombine.high %v1182, %v1198
    %v1241 = vunpack.c.l.s4 1934713408
    %v1242 = vunpack.c.0.s8 %v1241
    %v1243 = vlaneseq
    %v1244 = vshrl.u32 %v1243, 7
    %v1245 = vsub.s32 %v1242, %v1244
    %v1246 = vrot.slane %v1238, %v1245
    %v1248 = vunpack.c.l.s4 1934713408
    %v1249 = vunpack.c.0.s8 %v1248
    %v1250 = vlaneseq
    %v1251 = vshrl.u32 %v1250, 7
    %v1252 = vsub.s32 %v1249, %v1251
    %v1253 = vrot.slane %v1239, %v1252
    %v1254 = vcombine.low %v1189, %v1205
    %v1255 = vcombine.high %v1189, %v1205
    %v1257 = vunpack.c.l.s4 1934713408
    %v1258 = vunpack.c.0.s8 %v1257
    %v1259 = vlaneseq
    %v1260 = vshrl.u32 %v1259, 7
    %v1261 = vsub.s32 %v1258, %v1260
    %v1262 = vrot.slane %v1254, %v1261
    %v1264 = vunpack.c.l.s4 1934713408
    %v1265 = vunpack.c.0.s8 %v1264
    %v1266 = vlaneseq
    %v1267 = vshrl.u32 %v1266, 7
    %v1268 = vsub.s32 %v1265, %v1267
    %v1269 = vrot.slane %v1255, %v1268
    %v1270 = vcombine.low %v1214, %v1246
    %v1271 = vcombine.high %v1214, %v1246
    %v1272 = vcombine.low %v1221, %v1253
    %v1273 = vcombine.high %v1221, %v1253
    %v1274 = vcombine.low %v1230, %v1262
    %v1275 = vcombine.high %v1230, %v1262
    %v1276 = vcombine.low %v1237, %v1269
    %v1277 = vcombine.high %v1237, %v1269
    %1310 = vrot.lane.b32.xlu0 %v862, 120
    %v1311 = vpop.permute.xlu0 %1310
    %1312 = vrot.lane.b32.xlu0 %v863, 120
    %v1313 = vpop.permute.xlu0 %1312
    %1314 = vrot.lane.b32.xlu0 %v864, 120
    %v1315 = vpop.permute.xlu0 %1314
    %1316 = vrot.lane.b32.xlu0 %v865, 120
    %v1317 = vpop.permute.xlu0 %1316
    %1318 = vrot.lane.b32.xlu0 %v866, 120
    %v1319 = vpop.permute.xlu0 %1318
    %1320 = vrot.lane.b32.xlu0 %v867, 120
    %v1321 = vpop.permute.xlu0 %1320
    %1322 = vrot.lane.b32.xlu0 %v868, 120
    %v1323 = vpop.permute.xlu0 %1322
    %1324 = vrot.lane.b32.xlu0 %v869, 120
    %v1325 = vpop.permute.xlu0 %1324
    %1326 = vrot.lane.b32.xlu0 %v998, 120
    %v1327 = vpop.permute.xlu0 %1326
    %1328 = vrot.lane.b32.xlu0 %v999, 120
    %v1329 = vpop.permute.xlu0 %1328
    %1330 = vrot.lane.b32.xlu0 %v1000, 120
    %v1331 = vpop.permute.xlu0 %1330
    %1332 = vrot.lane.b32.xlu0 %v1001, 120
    %v1333 = vpop.permute.xlu0 %1332
    %1334 = vrot.lane.b32.xlu0 %v1002, 120
    %v1335 = vpop.permute.xlu0 %1334
    %1336 = vrot.lane.b32.xlu0 %v1003, 120
    %v1337 = vpop.permute.xlu0 %1336
    %1338 = vrot.lane.b32.xlu0 %v1004, 120
    %v1339 = vpop.permute.xlu0 %1338
    %1340 = vrot.lane.b32.xlu0 %v1005, 120
    %v1341 = vpop.permute.xlu0 %1340
    %1342 = vrot.lane.b32.xlu0 %v1134, 120
    %v1343 = vpop.permute.xlu0 %1342
    %1344 = vrot.lane.b32.xlu0 %v1135, 120
    %v1345 = vpop.permute.xlu0 %1344
    %1346 = vrot.lane.b32.xlu0 %v1136, 120
    %v1347 = vpop.permute.xlu0 %1346
    %1348 = vrot.lane.b32.xlu0 %v1137, 120
    %v1349 = vpop.permute.xlu0 %1348
    %1350 = vrot.lane.b32.xlu0 %v1138, 120
    %v1351 = vpop.permute.xlu0 %1350
    %1352 = vrot.lane.b32.xlu0 %v1139, 120
    %v1353 = vpop.permute.xlu0 %1352
    %1354 = vrot.lane.b32.xlu0 %v1140, 120
    %v1355 = vpop.permute.xlu0 %1354
    %1356 = vrot.lane.b32.xlu0 %v1141, 120
    %v1357 = vpop.permute.xlu0 %1356
    %1358 = vrot.lane.b32.xlu0 %v1270, 120
    %v1359 = vpop.permute.xlu0 %1358
    %1360 = vrot.lane.b32.xlu0 %v1271, 120
    %v1361 = vpop.permute.xlu0 %1360
    %1362 = vrot.lane.b32.xlu0 %v1272, 120
    %v1363 = vpop.permute.xlu0 %1362
    %1364 = vrot.lane.b32.xlu0 %v1273, 120
    %v1365 = vpop.permute.xlu0 %1364
    %1366 = vrot.lane.b32.xlu0 %v1274, 120
    %v1367 = vpop.permute.xlu0 %1366
    %1368 = vrot.lane.b32.xlu0 %v1275, 120
    %v1369 = vpop.permute.xlu0 %1368
    %1370 = vrot.lane.b32.xlu0 %v1276, 120
    %v1371 = vpop.permute.xlu0 %1370
    %1372 = vrot.lane.b32.xlu0 %v1277, 120
    %v1373 = vpop.permute.xlu0 %1372
    %v1406 = vmax.f32 %v862, %v1311
    %v1407 = vmax.f32 %v863, %v1313
    %v1408 = vmax.f32 %v864, %v1315
    %v1409 = vmax.f32 %v865, %v1317
    %v1410 = vmax.f32 %v866, %v1319
    %v1411 = vmax.f32 %v867, %v1321
    %v1412 = vmax.f32 %v868, %v1323
    %v1413 = vmax.f32 %v869, %v1325
    %v1414 = vmax.f32 %v998, %v1327
    %v1415 = vmax.f32 %v999, %v1329
    %v1416 = vmax.f32 %v1000, %v1331
    %v1417 = vmax.f32 %v1001, %v1333
    %v1418 = vmax.f32 %v1002, %v1335
    %v1419 = vmax.f32 %v1003, %v1337
    %v1420 = vmax.f32 %v1004, %v1339
    %v1421 = vmax.f32 %v1005, %v1341
    %v1422 = vmax.f32 %v1134, %v1343
    %v1423 = vmax.f32 %v1135, %v1345
    %v1424 = vmax.f32 %v1136, %v1347
    %v1425 = vmax.f32 %v1137, %v1349
    %v1426 = vmax.f32 %v1138, %v1351
    %v1427 = vmax.f32 %v1139, %v1353
    %v1428 = vmax.f32 %v1140, %v1355
    %v1429 = vmax.f32 %v1141, %v1357
    %v1430 = vmax.f32 %v1270, %v1359
    %v1431 = vmax.f32 %v1271, %v1361
    %v1432 = vmax.f32 %v1272, %v1363
    %v1433 = vmax.f32 %v1273, %v1365
    %v1434 = vmax.f32 %v1274, %v1367
    %v1435 = vmax.f32 %v1275, %v1369
    %v1436 = vmax.f32 %v1276, %v1371
    %v1437 = vmax.f32 %v1277, %v1373
    %v1438 = vcombine.high %v1406, 0.0
    %v1440 = vunpack.c.l.s4 1983009808
    %v1441 = vunpack.c.0.s8 %v1440
    %v1442 = vlaneseq
    %v1443 = vshrl.u32 %v1442, 7
    %v1444 = vsub.s32 %v1441, %v1443
    %v1445 = vrot.slane %v1406, %v1444
    %v1447 = vunpack.c.l.s4 1983009808
    %v1448 = vunpack.c.0.s8 %v1447
    %v1449 = vlaneseq
    %v1450 = vshrl.u32 %v1449, 7
    %v1451 = vsub.s32 %v1448, %v1450
    %v1452 = vrot.slane %v1438, %v1451
    %v1453 = vcombine.high %v1407, 0.0
    %v1455 = vunpack.c.l.s4 1983009808
    %v1456 = vunpack.c.0.s8 %v1455
    %v1457 = vlaneseq
    %v1458 = vshrl.u32 %v1457, 7
    %v1459 = vsub.s32 %v1456, %v1458
    %v1460 = vrot.slane %v1407, %v1459
    %v1462 = vunpack.c.l.s4 1983009808
    %v1463 = vunpack.c.0.s8 %v1462
    %v1464 = vlaneseq
    %v1465 = vshrl.u32 %v1464, 7
    %v1466 = vsub.s32 %v1463, %v1465
    %v1467 = vrot.slane %v1453, %v1466
    %v1468 = vcombine.low %v1445, %v1460
    %v1469 = vcombine.high %v1445, %v1460
    %v1471 = vunpack.c.l.s4 1934713408
    %v1472 = vunpack.c.0.s8 %v1471
    %v1473 = vlaneseq
    %v1474 = vshrl.u32 %v1473, 7
    %v1475 = vsub.s32 %v1472, %v1474
    %v1476 = vrot.slane %v1468, %v1475
    %v1478 = vunpack.c.l.s4 1934713408
    %v1479 = vunpack.c.0.s8 %v1478
    %v1480 = vlaneseq
    %v1481 = vshrl.u32 %v1480, 7
    %v1482 = vsub.s32 %v1479, %v1481
    %v1483 = vrot.slane %v1469, %v1482
    %v1484 = vcombine.low %v1452, %v1467
    %v1485 = vcombine.high %v1452, %v1467
    %v1487 = vunpack.c.l.s4 1934713408
    %v1488 = vunpack.c.0.s8 %v1487
    %v1489 = vlaneseq
    %v1490 = vshrl.u32 %v1489, 7
    %v1491 = vsub.s32 %v1488, %v1490
    %v1492 = vrot.slane %v1484, %v1491
    %v1494 = vunpack.c.l.s4 1934713408
    %v1495 = vunpack.c.0.s8 %v1494
    %v1496 = vlaneseq
    %v1497 = vshrl.u32 %v1496, 7
    %v1498 = vsub.s32 %v1495, %v1497
    %v1499 = vrot.slane %v1485, %v1498
    %v1500 = vcombine.high %v1476, 0.0
    %v1501 = vcombine.high %v1483, 0.0
    %v1502 = vcombine.high %v1492, 0.0
    %v1503 = vcombine.high %v1499, 0.0
    %v1504 = vcombine.high %v1408, 0.0
    %v1506 = vunpack.c.l.s4 1983009808
    %v1507 = vunpack.c.0.s8 %v1506
    %v1508 = vlaneseq
    %v1509 = vshrl.u32 %v1508, 7
    %v1510 = vsub.s32 %v1507, %v1509
    %v1511 = vrot.slane %v1408, %v1510
    %v1513 = vunpack.c.l.s4 1983009808
    %v1514 = vunpack.c.0.s8 %v1513
    %v1515 = vlaneseq
    %v1516 = vshrl.u32 %v1515, 7
    %v1517 = vsub.s32 %v1514, %v1516
    %v1518 = vrot.slane %v1504, %v1517
    %v1519 = vcombine.high %v1409, 0.0
    %v1521 = vunpack.c.l.s4 1983009808
    %v1522 = vunpack.c.0.s8 %v1521
    %v1523 = vlaneseq
    %v1524 = vshrl.u32 %v1523, 7
    %v1525 = vsub.s32 %v1522, %v1524
    %v1526 = vrot.slane %v1409, %v1525
    %v1528 = vunpack.c.l.s4 1983009808
    %v1529 = vunpack.c.0.s8 %v1528
    %v1530 = vlaneseq
    %v1531 = vshrl.u32 %v1530, 7
    %v1532 = vsub.s32 %v1529, %v1531
    %v1533 = vrot.slane %v1519, %v1532
    %v1534 = vcombine.low %v1511, %v1526
    %v1535 = vcombine.high %v1511, %v1526
    %v1537 = vunpack.c.l.s4 1934713408
    %v1538 = vunpack.c.0.s8 %v1537
    %v1539 = vlaneseq
    %v1540 = vshrl.u32 %v1539, 7
    %v1541 = vsub.s32 %v1538, %v1540
    %v1542 = vrot.slane %v1534, %v1541
    %v1544 = vunpack.c.l.s4 1934713408
    %v1545 = vunpack.c.0.s8 %v1544
    %v1546 = vlaneseq
    %v1547 = vshrl.u32 %v1546, 7
    %v1548 = vsub.s32 %v1545, %v1547
    %v1549 = vrot.slane %v1535, %v1548
    %v1550 = vcombine.low %v1518, %v1533
    %v1551 = vcombine.high %v1518, %v1533
    %v1553 = vunpack.c.l.s4 1934713408
    %v1554 = vunpack.c.0.s8 %v1553
    %v1555 = vlaneseq
    %v1556 = vshrl.u32 %v1555, 7
    %v1557 = vsub.s32 %v1554, %v1556
    %v1558 = vrot.slane %v1550, %v1557
    %v1560 = vunpack.c.l.s4 1934713408
    %v1561 = vunpack.c.0.s8 %v1560
    %v1562 = vlaneseq
    %v1563 = vshrl.u32 %v1562, 7
    %v1564 = vsub.s32 %v1561, %v1563
    %v1565 = vrot.slane %v1551, %v1564
    %v1566 = vcombine.high %v1542, 0.0
    %v1567 = vcombine.high %v1549, 0.0
    %v1568 = vcombine.high %v1558, 0.0
    %v1569 = vcombine.high %v1565, 0.0
    %v1570 = vcombine.high %v1410, 0.0
    %v1572 = vunpack.c.l.s4 1983009808
    %v1573 = vunpack.c.0.s8 %v1572
    %v1574 = vlaneseq
    %v1575 = vshrl.u32 %v1574, 7
    %v1576 = vsub.s32 %v1573, %v1575
    %v1577 = vrot.slane %v1410, %v1576
    %v1579 = vunpack.c.l.s4 1983009808
    %v1580 = vunpack.c.0.s8 %v1579
    %v1581 = vlaneseq
    %v1582 = vshrl.u32 %v1581, 7
    %v1583 = vsub.s32 %v1580, %v1582
    %v1584 = vrot.slane %v1570, %v1583
    %v1585 = vcombine.high %v1411, 0.0
    %v1587 = vunpack.c.l.s4 1983009808
    %v1588 = vunpack.c.0.s8 %v1587
    %v1589 = vlaneseq
    %v1590 = vshrl.u32 %v1589, 7
    %v1591 = vsub.s32 %v1588, %v1590
    %v1592 = vrot.slane %v1411, %v1591
    %v1594 = vunpack.c.l.s4 1983009808
    %v1595 = vunpack.c.0.s8 %v1594
    %v1596 = vlaneseq
    %v1597 = vshrl.u32 %v1596, 7
    %v1598 = vsub.s32 %v1595, %v1597
    %v1599 = vrot.slane %v1585, %v1598
    %v1600 = vcombine.low %v1577, %v1592
    %v1601 = vcombine.high %v1577, %v1592
    %v1603 = vunpack.c.l.s4 1934713408
    %v1604 = vunpack.c.0.s8 %v1603
    %v1605 = vlaneseq
    %v1606 = vshrl.u32 %v1605, 7
    %v1607 = vsub.s32 %v1604, %v1606
    %v1608 = vrot.slane %v1600, %v1607
    %v1610 = vunpack.c.l.s4 1934713408
    %v1611 = vunpack.c.0.s8 %v1610
    %v1612 = vlaneseq
    %v1613 = vshrl.u32 %v1612, 7
    %v1614 = vsub.s32 %v1611, %v1613
    %v1615 = vrot.slane %v1601, %v1614
    %v1616 = vcombine.low %v1584, %v1599
    %v1617 = vcombine.high %v1584, %v1599
    %v1619 = vunpack.c.l.s4 1934713408
    %v1620 = vunpack.c.0.s8 %v1619
    %v1621 = vlaneseq
    %v1622 = vshrl.u32 %v1621, 7
    %v1623 = vsub.s32 %v1620, %v1622
    %v1624 = vrot.slane %v1616, %v1623
    %v1626 = vunpack.c.l.s4 1934713408
    %v1627 = vunpack.c.0.s8 %v1626
    %v1628 = vlaneseq
    %v1629 = vshrl.u32 %v1628, 7
    %v1630 = vsub.s32 %v1627, %v1629
    %v1631 = vrot.slane %v1617, %v1630
    %v1632 = vcombine.high %v1608, 0.0
    %v1633 = vcombine.high %v1615, 0.0
    %v1634 = vcombine.high %v1624, 0.0
    %v1635 = vcombine.high %v1631, 0.0
    %v1636 = vcombine.high %v1412, 0.0
    %v1638 = vunpack.c.l.s4 1983009808
    %v1639 = vunpack.c.0.s8 %v1638
    %v1640 = vlaneseq
    %v1641 = vshrl.u32 %v1640, 7
    %v1642 = vsub.s32 %v1639, %v1641
    %v1643 = vrot.slane %v1412, %v1642
    %v1645 = vunpack.c.l.s4 1983009808
    %v1646 = vunpack.c.0.s8 %v1645
    %v1647 = vlaneseq
    %v1648 = vshrl.u32 %v1647, 7
    %v1649 = vsub.s32 %v1646, %v1648
    %v1650 = vrot.slane %v1636, %v1649
    %v1651 = vcombine.high %v1413, 0.0
    %v1653 = vunpack.c.l.s4 1983009808
    %v1654 = vunpack.c.0.s8 %v1653
    %v1655 = vlaneseq
    %v1656 = vshrl.u32 %v1655, 7
    %v1657 = vsub.s32 %v1654, %v1656
    %v1658 = vrot.slane %v1413, %v1657
    %v1660 = vunpack.c.l.s4 1983009808
    %v1661 = vunpack.c.0.s8 %v1660
    %v1662 = vlaneseq
    %v1663 = vshrl.u32 %v1662, 7
    %v1664 = vsub.s32 %v1661, %v1663
    %v1665 = vrot.slane %v1651, %v1664
    %v1666 = vcombine.low %v1643, %v1658
    %v1667 = vcombine.high %v1643, %v1658
    %v1669 = vunpack.c.l.s4 1934713408
    %v1670 = vunpack.c.0.s8 %v1669
    %v1671 = vlaneseq
    %v1672 = vshrl.u32 %v1671, 7
    %v1673 = vsub.s32 %v1670, %v1672
    %v1674 = vrot.slane %v1666, %v1673
    %v1676 = vunpack.c.l.s4 1934713408
    %v1677 = vunpack.c.0.s8 %v1676
    %v1678 = vlaneseq
    %v1679 = vshrl.u32 %v1678, 7
    %v1680 = vsub.s32 %v1677, %v1679
    %v1681 = vrot.slane %v1667, %v1680
    %v1682 = vcombine.low %v1650, %v1665
    %v1683 = vcombine.high %v1650, %v1665
    %v1685 = vunpack.c.l.s4 1934713408
    %v1686 = vunpack.c.0.s8 %v1685
    %v1687 = vlaneseq
    %v1688 = vshrl.u32 %v1687, 7
    %v1689 = vsub.s32 %v1686, %v1688
    %v1690 = vrot.slane %v1682, %v1689
    %v1692 = vunpack.c.l.s4 1934713408
    %v1693 = vunpack.c.0.s8 %v1692
    %v1694 = vlaneseq
    %v1695 = vshrl.u32 %v1694, 7
    %v1696 = vsub.s32 %v1693, %v1695
    %v1697 = vrot.slane %v1683, %v1696
    %v1698 = vcombine.high %v1674, 0.0
    %v1699 = vcombine.high %v1681, 0.0
    %v1700 = vcombine.high %v1690, 0.0
    %v1701 = vcombine.high %v1697, 0.0
    %v1702 = vcombine.high %v1414, 0.0
    %v1704 = vunpack.c.l.s4 1983009808
    %v1705 = vunpack.c.0.s8 %v1704
    %v1706 = vlaneseq
    %v1707 = vshrl.u32 %v1706, 7
    %v1708 = vsub.s32 %v1705, %v1707
    %v1709 = vrot.slane %v1414, %v1708
    %v1711 = vunpack.c.l.s4 1983009808
    %v1712 = vunpack.c.0.s8 %v1711
    %v1713 = vlaneseq
    %v1714 = vshrl.u32 %v1713, 7
    %v1715 = vsub.s32 %v1712, %v1714
    %v1716 = vrot.slane %v1702, %v1715
    %v1717 = vcombine.high %v1415, 0.0
    %v1719 = vunpack.c.l.s4 1983009808
    %v1720 = vunpack.c.0.s8 %v1719
    %v1721 = vlaneseq
    %v1722 = vshrl.u32 %v1721, 7
    %v1723 = vsub.s32 %v1720, %v1722
    %v1724 = vrot.slane %v1415, %v1723
    %v1726 = vunpack.c.l.s4 1983009808
    %v1727 = vunpack.c.0.s8 %v1726
    %v1728 = vlaneseq
    %v1729 = vshrl.u32 %v1728, 7
    %v1730 = vsub.s32 %v1727, %v1729
    %v1731 = vrot.slane %v1717, %v1730
    %v1732 = vcombine.low %v1709, %v1724
    %v1733 = vcombine.high %v1709, %v1724
    %v1735 = vunpack.c.l.s4 1934713408
    %v1736 = vunpack.c.0.s8 %v1735
    %v1737 = vlaneseq
    %v1738 = vshrl.u32 %v1737, 7
    %v1739 = vsub.s32 %v1736, %v1738
    %v1740 = vrot.slane %v1732, %v1739
    %v1742 = vunpack.c.l.s4 1934713408
    %v1743 = vunpack.c.0.s8 %v1742
    %v1744 = vlaneseq
    %v1745 = vshrl.u32 %v1744, 7
    %v1746 = vsub.s32 %v1743, %v1745
    %v1747 = vrot.slane %v1733, %v1746
    %v1748 = vcombine.low %v1716, %v1731
    %v1749 = vcombine.high %v1716, %v1731
    %v1751 = vunpack.c.l.s4 1934713408
    %v1752 = vunpack.c.0.s8 %v1751
    %v1753 = vlaneseq
    %v1754 = vshrl.u32 %v1753, 7
    %v1755 = vsub.s32 %v1752, %v1754
    %v1756 = vrot.slane %v1748, %v1755
    %v1758 = vunpack.c.l.s4 1934713408
    %v1759 = vunpack.c.0.s8 %v1758
    %v1760 = vlaneseq
    %v1761 = vshrl.u32 %v1760, 7
    %v1762 = vsub.s32 %v1759, %v1761
    %v1763 = vrot.slane %v1749, %v1762
    %v1764 = vcombine.high %v1740, 0.0
    %v1765 = vcombine.high %v1747, 0.0
    %v1766 = vcombine.high %v1756, 0.0
    %v1767 = vcombine.high %v1763, 0.0
    %v1768 = vcombine.high %v1416, 0.0
    %v1770 = vunpack.c.l.s4 1983009808
    %v1771 = vunpack.c.0.s8 %v1770
    %v1772 = vlaneseq
    %v1773 = vshrl.u32 %v1772, 7
    %v1774 = vsub.s32 %v1771, %v1773
    %v1775 = vrot.slane %v1416, %v1774
    %v1777 = vunpack.c.l.s4 1983009808
    %v1778 = vunpack.c.0.s8 %v1777
    %v1779 = vlaneseq
    %v1780 = vshrl.u32 %v1779, 7
    %v1781 = vsub.s32 %v1778, %v1780
    %v1782 = vrot.slane %v1768, %v1781
    %v1783 = vcombine.high %v1417, 0.0
    %v1785 = vunpack.c.l.s4 1983009808
    %v1786 = vunpack.c.0.s8 %v1785
    %v1787 = vlaneseq
    %v1788 = vshrl.u32 %v1787, 7
    %v1789 = vsub.s32 %v1786, %v1788
    %v1790 = vrot.slane %v1417, %v1789
    %v1792 = vunpack.c.l.s4 1983009808
    %v1793 = vunpack.c.0.s8 %v1792
    %v1794 = vlaneseq
    %v1795 = vshrl.u32 %v1794, 7
    %v1796 = vsub.s32 %v1793, %v1795
    %v1797 = vrot.slane %v1783, %v1796
    %v1798 = vcombine.low %v1775, %v1790
    %v1799 = vcombine.high %v1775, %v1790
    %v1801 = vunpack.c.l.s4 1934713408
    %v1802 = vunpack.c.0.s8 %v1801
    %v1803 = vlaneseq
    %v1804 = vshrl.u32 %v1803, 7
    %v1805 = vsub.s32 %v1802, %v1804
    %v1806 = vrot.slane %v1798, %v1805
    %v1808 = vunpack.c.l.s4 1934713408
    %v1809 = vunpack.c.0.s8 %v1808
    %v1810 = vlaneseq
    %v1811 = vshrl.u32 %v1810, 7
    %v1812 = vsub.s32 %v1809, %v1811
    %v1813 = vrot.slane %v1799, %v1812
    %v1814 = vcombine.low %v1782, %v1797
    %v1815 = vcombine.high %v1782, %v1797
    %v1817 = vunpack.c.l.s4 1934713408
    %v1818 = vunpack.c.0.s8 %v1817
    %v1819 = vlaneseq
    %v1820 = vshrl.u32 %v1819, 7
    %v1821 = vsub.s32 %v1818, %v1820
    %v1822 = vrot.slane %v1814, %v1821
    %v1824 = vunpack.c.l.s4 1934713408
    %v1825 = vunpack.c.0.s8 %v1824
    %v1826 = vlaneseq
    %v1827 = vshrl.u32 %v1826, 7
    %v1828 = vsub.s32 %v1825, %v1827
    %v1829 = vrot.slane %v1815, %v1828
    %v1830 = vcombine.high %v1806, 0.0
    %v1831 = vcombine.high %v1813, 0.0
    %v1832 = vcombine.high %v1822, 0.0
    %v1833 = vcombine.high %v1829, 0.0
    %v1834 = vcombine.high %v1418, 0.0
    %v1836 = vunpack.c.l.s4 1983009808
    %v1837 = vunpack.c.0.s8 %v1836
    %v1838 = vlaneseq
    %v1839 = vshrl.u32 %v1838, 7
    %v1840 = vsub.s32 %v1837, %v1839
    %v1841 = vrot.slane %v1418, %v1840
    %v1843 = vunpack.c.l.s4 1983009808
    %v1844 = vunpack.c.0.s8 %v1843
    %v1845 = vlaneseq
    %v1846 = vshrl.u32 %v1845, 7
    %v1847 = vsub.s32 %v1844, %v1846
    %v1848 = vrot.slane %v1834, %v1847
    %v1849 = vcombine.high %v1419, 0.0
    %v1851 = vunpack.c.l.s4 1983009808
    %v1852 = vunpack.c.0.s8 %v1851
    %v1853 = vlaneseq
    %v1854 = vshrl.u32 %v1853, 7
    %v1855 = vsub.s32 %v1852, %v1854
    %v1856 = vrot.slane %v1419, %v1855
    %v1858 = vunpack.c.l.s4 1983009808
    %v1859 = vunpack.c.0.s8 %v1858
    %v1860 = vlaneseq
    %v1861 = vshrl.u32 %v1860, 7
    %v1862 = vsub.s32 %v1859, %v1861
    %v1863 = vrot.slane %v1849, %v1862
    %v1864 = vcombine.low %v1841, %v1856
    %v1865 = vcombine.high %v1841, %v1856
    %v1867 = vunpack.c.l.s4 1934713408
    %v1868 = vunpack.c.0.s8 %v1867
    %v1869 = vlaneseq
    %v1870 = vshrl.u32 %v1869, 7
    %v1871 = vsub.s32 %v1868, %v1870
    %v1872 = vrot.slane %v1864, %v1871
    %v1874 = vunpack.c.l.s4 1934713408
    %v1875 = vunpack.c.0.s8 %v1874
    %v1876 = vlaneseq
    %v1877 = vshrl.u32 %v1876, 7
    %v1878 = vsub.s32 %v1875, %v1877
    %v1879 = vrot.slane %v1865, %v1878
    %v1880 = vcombine.low %v1848, %v1863
    %v1881 = vcombine.high %v1848, %v1863
    %v1883 = vunpack.c.l.s4 1934713408
    %v1884 = vunpack.c.0.s8 %v1883
    %v1885 = vlaneseq
    %v1886 = vshrl.u32 %v1885, 7
    %v1887 = vsub.s32 %v1884, %v1886
    %v1888 = vrot.slane %v1880, %v1887
    %v1890 = vunpack.c.l.s4 1934713408
    %v1891 = vunpack.c.0.s8 %v1890
    %v1892 = vlaneseq
    %v1893 = vshrl.u32 %v1892, 7
    %v1894 = vsub.s32 %v1891, %v1893
    %v1895 = vrot.slane %v1881, %v1894
    %v1896 = vcombine.high %v1872, 0.0
    %v1897 = vcombine.high %v1879, 0.0
    %v1898 = vcombine.high %v1888, 0.0
    %v1899 = vcombine.high %v1895, 0.0
    %v1900 = vcombine.high %v1420, 0.0
    %v1902 = vunpack.c.l.s4 1983009808
    %v1903 = vunpack.c.0.s8 %v1902
    %v1904 = vlaneseq
    %v1905 = vshrl.u32 %v1904, 7
    %v1906 = vsub.s32 %v1903, %v1905
    %v1907 = vrot.slane %v1420, %v1906
    %v1909 = vunpack.c.l.s4 1983009808
    %v1910 = vunpack.c.0.s8 %v1909
    %v1911 = vlaneseq
    %v1912 = vshrl.u32 %v1911, 7
    %v1913 = vsub.s32 %v1910, %v1912
    %v1914 = vrot.slane %v1900, %v1913
    %v1915 = vcombine.high %v1421, 0.0
    %v1917 = vunpack.c.l.s4 1983009808
    %v1918 = vunpack.c.0.s8 %v1917
    %v1919 = vlaneseq
    %v1920 = vshrl.u32 %v1919, 7
    %v1921 = vsub.s32 %v1918, %v1920
    %v1922 = vrot.slane %v1421, %v1921
    %v1924 = vunpack.c.l.s4 1983009808
    %v1925 = vunpack.c.0.s8 %v1924
    %v1926 = vlaneseq
    %v1927 = vshrl.u32 %v1926, 7
    %v1928 = vsub.s32 %v1925, %v1927
    %v1929 = vrot.slane %v1915, %v1928
    %v1930 = vcombine.low %v1907, %v1922
    %v1931 = vcombine.high %v1907, %v1922
    %v1933 = vunpack.c.l.s4 1934713408
    %v1934 = vunpack.c.0.s8 %v1933
    %v1935 = vlaneseq
    %v1936 = vshrl.u32 %v1935, 7
    %v1937 = vsub.s32 %v1934, %v1936
    %v1938 = vrot.slane %v1930, %v1937
    %v1940 = vunpack.c.l.s4 1934713408
    %v1941 = vunpack.c.0.s8 %v1940
    %v1942 = vlaneseq
    %v1943 = vshrl.u32 %v1942, 7
    %v1944 = vsub.s32 %v1941, %v1943
    %v1945 = vrot.slane %v1931, %v1944
    %v1946 = vcombine.low %v1914, %v1929
    %v1947 = vcombine.high %v1914, %v1929
    %v1949 = vunpack.c.l.s4 1934713408
    %v1950 = vunpack.c.0.s8 %v1949
    %v1951 = vlaneseq
    %v1952 = vshrl.u32 %v1951, 7
    %v1953 = vsub.s32 %v1950, %v1952
    %v1954 = vrot.slane %v1946, %v1953
    %v1956 = vunpack.c.l.s4 1934713408
    %v1957 = vunpack.c.0.s8 %v1956
    %v1958 = vlaneseq
    %v1959 = vshrl.u32 %v1958, 7
    %v1960 = vsub.s32 %v1957, %v1959
    %v1961 = vrot.slane %v1947, %v1960
    %v1962 = vcombine.high %v1938, 0.0
    %v1963 = vcombine.high %v1945, 0.0
    %v1964 = vcombine.high %v1954, 0.0
    %v1965 = vcombine.high %v1961, 0.0
    %v1966 = vcombine.high %v1422, 0.0
    %v1968 = vunpack.c.l.s4 1983009808
    %v1969 = vunpack.c.0.s8 %v1968
    %v1970 = vlaneseq
    %v1971 = vshrl.u32 %v1970, 7
    %v1972 = vsub.s32 %v1969, %v1971
    %v1973 = vrot.slane %v1422, %v1972
    %v1975 = vunpack.c.l.s4 1983009808
    %v1976 = vunpack.c.0.s8 %v1975
    %v1977 = vlaneseq
    %v1978 = vshrl.u32 %v1977, 7
    %v1979 = vsub.s32 %v1976, %v1978
    %v1980 = vrot.slane %v1966, %v1979
    %v1981 = vcombine.high %v1423, 0.0
    %v1983 = vunpack.c.l.s4 1983009808
    %v1984 = vunpack.c.0.s8 %v1983
    %v1985 = vlaneseq
    %v1986 = vshrl.u32 %v1985, 7
    %v1987 = vsub.s32 %v1984, %v1986
    %v1988 = vrot.slane %v1423, %v1987
    %v1990 = vunpack.c.l.s4 1983009808
    %v1991 = vunpack.c.0.s8 %v1990
    %v1992 = vlaneseq
    %v1993 = vshrl.u32 %v1992, 7
    %v1994 = vsub.s32 %v1991, %v1993
    %v1995 = vrot.slane %v1981, %v1994
    %v1996 = vcombine.low %v1973, %v1988
    %v1997 = vcombine.high %v1973, %v1988
    %v1999 = vunpack.c.l.s4 1934713408
    %v2000 = vunpack.c.0.s8 %v1999
    %v2001 = vlaneseq
    %v2002 = vshrl.u32 %v2001, 7
    %v2003 = vsub.s32 %v2000, %v2002
    %v2004 = vrot.slane %v1996, %v2003
    %v2006 = vunpack.c.l.s4 1934713408
    %v2007 = vunpack.c.0.s8 %v2006
    %v2008 = vlaneseq
    %v2009 = vshrl.u32 %v2008, 7
    %v2010 = vsub.s32 %v2007, %v2009
    %v2011 = vrot.slane %v1997, %v2010
    %v2012 = vcombine.low %v1980, %v1995
    %v2013 = vcombine.high %v1980, %v1995
    %v2015 = vunpack.c.l.s4 1934713408
    %v2016 = vunpack.c.0.s8 %v2015
    %v2017 = vlaneseq
    %v2018 = vshrl.u32 %v2017, 7
    %v2019 = vsub.s32 %v2016, %v2018
    %v2020 = vrot.slane %v2012, %v2019
    %v2022 = vunpack.c.l.s4 1934713408
    %v2023 = vunpack.c.0.s8 %v2022
    %v2024 = vlaneseq
    %v2025 = vshrl.u32 %v2024, 7
    %v2026 = vsub.s32 %v2023, %v2025
    %v2027 = vrot.slane %v2013, %v2026
    %v2028 = vcombine.high %v2004, 0.0
    %v2029 = vcombine.high %v2011, 0.0
    %v2030 = vcombine.high %v2020, 0.0
    %v2031 = vcombine.high %v2027, 0.0
    %v2032 = vcombine.high %v1424, 0.0
    %v2034 = vunpack.c.l.s4 1983009808
    %v2035 = vunpack.c.0.s8 %v2034
    %v2036 = vlaneseq
    %v2037 = vshrl.u32 %v2036, 7
    %v2038 = vsub.s32 %v2035, %v2037
    %v2039 = vrot.slane %v1424, %v2038
    %v2041 = vunpack.c.l.s4 1983009808
    %v2042 = vunpack.c.0.s8 %v2041
    %v2043 = vlaneseq
    %v2044 = vshrl.u32 %v2043, 7
    %v2045 = vsub.s32 %v2042, %v2044
    %v2046 = vrot.slane %v2032, %v2045
    %v2047 = vcombine.high %v1425, 0.0
    %v2049 = vunpack.c.l.s4 1983009808
    %v2050 = vunpack.c.0.s8 %v2049
    %v2051 = vlaneseq
    %v2052 = vshrl.u32 %v2051, 7
    %v2053 = vsub.s32 %v2050, %v2052
    %v2054 = vrot.slane %v1425, %v2053
    %v2056 = vunpack.c.l.s4 1983009808
    %v2057 = vunpack.c.0.s8 %v2056
    %v2058 = vlaneseq
    %v2059 = vshrl.u32 %v2058, 7
    %v2060 = vsub.s32 %v2057, %v2059
    %v2061 = vrot.slane %v2047, %v2060
    %v2062 = vcombine.low %v2039, %v2054
    %v2063 = vcombine.high %v2039, %v2054
    %v2065 = vunpack.c.l.s4 1934713408
    %v2066 = vunpack.c.0.s8 %v2065
    %v2067 = vlaneseq
    %v2068 = vshrl.u32 %v2067, 7
    %v2069 = vsub.s32 %v2066, %v2068
    %v2070 = vrot.slane %v2062, %v2069
    %v2072 = vunpack.c.l.s4 1934713408
    %v2073 = vunpack.c.0.s8 %v2072
    %v2074 = vlaneseq
    %v2075 = vshrl.u32 %v2074, 7
    %v2076 = vsub.s32 %v2073, %v2075
    %v2077 = vrot.slane %v2063, %v2076
    %v2078 = vcombine.low %v2046, %v2061
    %v2079 = vcombine.high %v2046, %v2061
    %v2081 = vunpack.c.l.s4 1934713408
    %v2082 = vunpack.c.0.s8 %v2081
    %v2083 = vlaneseq
    %v2084 = vshrl.u32 %v2083, 7
    %v2085 = vsub.s32 %v2082, %v2084
    %v2086 = vrot.slane %v2078, %v2085
    %v2088 = vunpack.c.l.s4 1934713408
    %v2089 = vunpack.c.0.s8 %v2088
    %v2090 = vlaneseq
    %v2091 = vshrl.u32 %v2090, 7
    %v2092 = vsub.s32 %v2089, %v2091
    %v2093 = vrot.slane %v2079, %v2092
    %v2094 = vcombine.high %v2070, 0.0
    %v2095 = vcombine.high %v2077, 0.0
    %v2096 = vcombine.high %v2086, 0.0
    %v2097 = vcombine.high %v2093, 0.0
    %v2098 = vcombine.high %v1426, 0.0
    %v2100 = vunpack.c.l.s4 1983009808
    %v2101 = vunpack.c.0.s8 %v2100
    %v2102 = vlaneseq
    %v2103 = vshrl.u32 %v2102, 7
    %v2104 = vsub.s32 %v2101, %v2103
    %v2105 = vrot.slane %v1426, %v2104
    %v2107 = vunpack.c.l.s4 1983009808
    %v2108 = vunpack.c.0.s8 %v2107
    %v2109 = vlaneseq
    %v2110 = vshrl.u32 %v2109, 7
    %v2111 = vsub.s32 %v2108, %v2110
    %v2112 = vrot.slane %v2098, %v2111
    %v2113 = vcombine.high %v1427, 0.0
    %v2115 = vunpack.c.l.s4 1983009808
    %v2116 = vunpack.c.0.s8 %v2115
    %v2117 = vlaneseq
    %v2118 = vshrl.u32 %v2117, 7
    %v2119 = vsub.s32 %v2116, %v2118
    %v2120 = vrot.slane %v1427, %v2119
    %v2122 = vunpack.c.l.s4 1983009808
    %v2123 = vunpack.c.0.s8 %v2122
    %v2124 = vlaneseq
    %v2125 = vshrl.u32 %v2124, 7
    %v2126 = vsub.s32 %v2123, %v2125
    %v2127 = vrot.slane %v2113, %v2126
    %v2128 = vcombine.low %v2105, %v2120
    %v2129 = vcombine.high %v2105, %v2120
    %v2131 = vunpack.c.l.s4 1934713408
    %v2132 = vunpack.c.0.s8 %v2131
    %v2133 = vlaneseq
    %v2134 = vshrl.u32 %v2133, 7
    %v2135 = vsub.s32 %v2132, %v2134
    %v2136 = vrot.slane %v2128, %v2135
    %v2138 = vunpack.c.l.s4 1934713408
    %v2139 = vunpack.c.0.s8 %v2138
    %v2140 = vlaneseq
    %v2141 = vshrl.u32 %v2140, 7
    %v2142 = vsub.s32 %v2139, %v2141
    %v2143 = vrot.slane %v2129, %v2142
    %v2144 = vcombine.low %v2112, %v2127
    %v2145 = vcombine.high %v2112, %v2127
    %v2147 = vunpack.c.l.s4 1934713408
    %v2148 = vunpack.c.0.s8 %v2147
    %v2149 = vlaneseq
    %v2150 = vshrl.u32 %v2149, 7
    %v2151 = vsub.s32 %v2148, %v2150
    %v2152 = vrot.slane %v2144, %v2151
    %v2154 = vunpack.c.l.s4 1934713408
    %v2155 = vunpack.c.0.s8 %v2154
    %v2156 = vlaneseq
    %v2157 = vshrl.u32 %v2156, 7
    %v2158 = vsub.s32 %v2155, %v2157
    %v2159 = vrot.slane %v2145, %v2158
    %v2160 = vcombine.high %v2136, 0.0
    %v2161 = vcombine.high %v2143, 0.0
    %v2162 = vcombine.high %v2152, 0.0
    %v2163 = vcombine.high %v2159, 0.0
    %v2164 = vcombine.high %v1428, 0.0
    %v2166 = vunpack.c.l.s4 1983009808
    %v2167 = vunpack.c.0.s8 %v2166
    %v2168 = vlaneseq
    %v2169 = vshrl.u32 %v2168, 7
    %v2170 = vsub.s32 %v2167, %v2169
    %v2171 = vrot.slane %v1428, %v2170
    %v2173 = vunpack.c.l.s4 1983009808
    %v2174 = vunpack.c.0.s8 %v2173
    %v2175 = vlaneseq
    %v2176 = vshrl.u32 %v2175, 7
    %v2177 = vsub.s32 %v2174, %v2176
    %v2178 = vrot.slane %v2164, %v2177
    %v2179 = vcombine.high %v1429, 0.0
    %v2181 = vunpack.c.l.s4 1983009808
    %v2182 = vunpack.c.0.s8 %v2181
    %v2183 = vlaneseq
    %v2184 = vshrl.u32 %v2183, 7
    %v2185 = vsub.s32 %v2182, %v2184
    %v2186 = vrot.slane %v1429, %v2185
    %v2188 = vunpack.c.l.s4 1983009808
    %v2189 = vunpack.c.0.s8 %v2188
    %v2190 = vlaneseq
    %v2191 = vshrl.u32 %v2190, 7
    %v2192 = vsub.s32 %v2189, %v2191
    %v2193 = vrot.slane %v2179, %v2192
    %v2194 = vcombine.low %v2171, %v2186
    %v2195 = vcombine.high %v2171, %v2186
    %v2197 = vunpack.c.l.s4 1934713408
    %v2198 = vunpack.c.0.s8 %v2197
    %v2199 = vlaneseq
    %v2200 = vshrl.u32 %v2199, 7
    %v2201 = vsub.s32 %v2198, %v2200
    %v2202 = vrot.slane %v2194, %v2201
    %v2204 = vunpack.c.l.s4 1934713408
    %v2205 = vunpack.c.0.s8 %v2204
    %v2206 = vlaneseq
    %v2207 = vshrl.u32 %v2206, 7
    %v2208 = vsub.s32 %v2205, %v2207
    %v2209 = vrot.slane %v2195, %v2208
    %v2210 = vcombine.low %v2178, %v2193
    %v2211 = vcombine.high %v2178, %v2193
    %v2213 = vunpack.c.l.s4 1934713408
    %v2214 = vunpack.c.0.s8 %v2213
    %v2215 = vlaneseq
    %v2216 = vshrl.u32 %v2215, 7
    %v2217 = vsub.s32 %v2214, %v2216
    %v2218 = vrot.slane %v2210, %v2217
    %v2220 = vunpack.c.l.s4 1934713408
    %v2221 = vunpack.c.0.s8 %v2220
    %v2222 = vlaneseq
    %v2223 = vshrl.u32 %v2222, 7
    %v2224 = vsub.s32 %v2221, %v2223
    %v2225 = vrot.slane %v2211, %v2224
    %v2226 = vcombine.high %v2202, 0.0
    %v2227 = vcombine.high %v2209, 0.0
    %v2228 = vcombine.high %v2218, 0.0
    %v2229 = vcombine.high %v2225, 0.0
    %v2230 = vcombine.high %v1430, 0.0
    %v2232 = vunpack.c.l.s4 1983009808
    %v2233 = vunpack.c.0.s8 %v2232
    %v2234 = vlaneseq
    %v2235 = vshrl.u32 %v2234, 7
    %v2236 = vsub.s32 %v2233, %v2235
    %v2237 = vrot.slane %v1430, %v2236
    %v2239 = vunpack.c.l.s4 1983009808
    %v2240 = vunpack.c.0.s8 %v2239
    %v2241 = vlaneseq
    %v2242 = vshrl.u32 %v2241, 7
    %v2243 = vsub.s32 %v2240, %v2242
    %v2244 = vrot.slane %v2230, %v2243
    %v2245 = vcombine.high %v1431, 0.0
    %v2247 = vunpack.c.l.s4 1983009808
    %v2248 = vunpack.c.0.s8 %v2247
    %v2249 = vlaneseq
    %v2250 = vshrl.u32 %v2249, 7
    %v2251 = vsub.s32 %v2248, %v2250
    %v2252 = vrot.slane %v1431, %v2251
    %v2254 = vunpack.c.l.s4 1983009808
    %v2255 = vunpack.c.0.s8 %v2254
    %v2256 = vlaneseq
    %v2257 = vshrl.u32 %v2256, 7
    %v2258 = vsub.s32 %v2255, %v2257
    %v2259 = vrot.slane %v2245, %v2258
    %v2260 = vcombine.low %v2237, %v2252
    %v2261 = vcombine.high %v2237, %v2252
    %v2263 = vunpack.c.l.s4 1934713408
    %v2264 = vunpack.c.0.s8 %v2263
    %v2265 = vlaneseq
    %v2266 = vshrl.u32 %v2265, 7
    %v2267 = vsub.s32 %v2264, %v2266
    %v2268 = vrot.slane %v2260, %v2267
    %v2270 = vunpack.c.l.s4 1934713408
    %v2271 = vunpack.c.0.s8 %v2270
    %v2272 = vlaneseq
    %v2273 = vshrl.u32 %v2272, 7
    %v2274 = vsub.s32 %v2271, %v2273
    %v2275 = vrot.slane %v2261, %v2274
    %v2276 = vcombine.low %v2244, %v2259
    %v2277 = vcombine.high %v2244, %v2259
    %v2279 = vunpack.c.l.s4 1934713408
    %v2280 = vunpack.c.0.s8 %v2279
    %v2281 = vlaneseq
    %v2282 = vshrl.u32 %v2281, 7
    %v2283 = vsub.s32 %v2280, %v2282
    %v2284 = vrot.slane %v2276, %v2283
    %v2286 = vunpack.c.l.s4 1934713408
    %v2287 = vunpack.c.0.s8 %v2286
    %v2288 = vlaneseq
    %v2289 = vshrl.u32 %v2288, 7
    %v2290 = vsub.s32 %v2287, %v2289
    %v2291 = vrot.slane %v2277, %v2290
    %v2292 = vcombine.high %v2268, 0.0
    %v2293 = vcombine.high %v2275, 0.0
    %v2294 = vcombine.high %v2284, 0.0
    %v2295 = vcombine.high %v2291, 0.0
    %v2296 = vcombine.high %v1432, 0.0
    %v2298 = vunpack.c.l.s4 1983009808
    %v2299 = vunpack.c.0.s8 %v2298
    %v2300 = vlaneseq
    %v2301 = vshrl.u32 %v2300, 7
    %v2302 = vsub.s32 %v2299, %v2301
    %v2303 = vrot.slane %v1432, %v2302
    %v2305 = vunpack.c.l.s4 1983009808
    %v2306 = vunpack.c.0.s8 %v2305
    %v2307 = vlaneseq
    %v2308 = vshrl.u32 %v2307, 7
    %v2309 = vsub.s32 %v2306, %v2308
    %v2310 = vrot.slane %v2296, %v2309
    %v2311 = vcombine.high %v1433, 0.0
    %v2313 = vunpack.c.l.s4 1983009808
    %v2314 = vunpack.c.0.s8 %v2313
    %v2315 = vlaneseq
    %v2316 = vshrl.u32 %v2315, 7
    %v2317 = vsub.s32 %v2314, %v2316
    %v2318 = vrot.slane %v1433, %v2317
    %v2320 = vunpack.c.l.s4 1983009808
    %v2321 = vunpack.c.0.s8 %v2320
    %v2322 = vlaneseq
    %v2323 = vshrl.u32 %v2322, 7
    %v2324 = vsub.s32 %v2321, %v2323
    %v2325 = vrot.slane %v2311, %v2324
    %v2326 = vcombine.low %v2303, %v2318
    %v2327 = vcombine.high %v2303, %v2318
    %v2329 = vunpack.c.l.s4 1934713408
    %v2330 = vunpack.c.0.s8 %v2329
    %v2331 = vlaneseq
    %v2332 = vshrl.u32 %v2331, 7
    %v2333 = vsub.s32 %v2330, %v2332
    %v2334 = vrot.slane %v2326, %v2333
    %v2336 = vunpack.c.l.s4 1934713408
    %v2337 = vunpack.c.0.s8 %v2336
    %v2338 = vlaneseq
    %v2339 = vshrl.u32 %v2338, 7
    %v2340 = vsub.s32 %v2337, %v2339
    %v2341 = vrot.slane %v2327, %v2340
    %v2342 = vcombine.low %v2310, %v2325
    %v2343 = vcombine.high %v2310, %v2325
    %v2345 = vunpack.c.l.s4 1934713408
    %v2346 = vunpack.c.0.s8 %v2345
    %v2347 = vlaneseq
    %v2348 = vshrl.u32 %v2347, 7
    %v2349 = vsub.s32 %v2346, %v2348
    %v2350 = vrot.slane %v2342, %v2349
    %v2352 = vunpack.c.l.s4 1934713408
    %v2353 = vunpack.c.0.s8 %v2352
    %v2354 = vlaneseq
    %v2355 = vshrl.u32 %v2354, 7
    %v2356 = vsub.s32 %v2353, %v2355
    %v2357 = vrot.slane %v2343, %v2356
    %v2358 = vcombine.high %v2334, 0.0
    %v2359 = vcombine.high %v2341, 0.0
    %v2360 = vcombine.high %v2350, 0.0
    %v2361 = vcombine.high %v2357, 0.0
    %v2362 = vcombine.high %v1434, 0.0
    %v2364 = vunpack.c.l.s4 1983009808
    %v2365 = vunpack.c.0.s8 %v2364
    %v2366 = vlaneseq
    %v2367 = vshrl.u32 %v2366, 7
    %v2368 = vsub.s32 %v2365, %v2367
    %v2369 = vrot.slane %v1434, %v2368
    %v2371 = vunpack.c.l.s4 1983009808
    %v2372 = vunpack.c.0.s8 %v2371
    %v2373 = vlaneseq
    %v2374 = vshrl.u32 %v2373, 7
    %v2375 = vsub.s32 %v2372, %v2374
    %v2376 = vrot.slane %v2362, %v2375
    %v2377 = vcombine.high %v1435, 0.0
    %v2379 = vunpack.c.l.s4 1983009808
    %v2380 = vunpack.c.0.s8 %v2379
    %v2381 = vlaneseq
    %v2382 = vshrl.u32 %v2381, 7
    %v2383 = vsub.s32 %v2380, %v2382
    %v2384 = vrot.slane %v1435, %v2383
    %v2386 = vunpack.c.l.s4 1983009808
    %v2387 = vunpack.c.0.s8 %v2386
    %v2388 = vlaneseq
    %v2389 = vshrl.u32 %v2388, 7
    %v2390 = vsub.s32 %v2387, %v2389
    %v2391 = vrot.slane %v2377, %v2390
    %v2392 = vcombine.low %v2369, %v2384
    %v2393 = vcombine.high %v2369, %v2384
    %v2395 = vunpack.c.l.s4 1934713408
    %v2396 = vunpack.c.0.s8 %v2395
    %v2397 = vlaneseq
    %v2398 = vshrl.u32 %v2397, 7
    %v2399 = vsub.s32 %v2396, %v2398
    %v2400 = vrot.slane %v2392, %v2399
    %v2402 = vunpack.c.l.s4 1934713408
    %v2403 = vunpack.c.0.s8 %v2402
    %v2404 = vlaneseq
    %v2405 = vshrl.u32 %v2404, 7
    %v2406 = vsub.s32 %v2403, %v2405
    %v2407 = vrot.slane %v2393, %v2406
    %v2408 = vcombine.low %v2376, %v2391
    %v2409 = vcombine.high %v2376, %v2391
    %v2411 = vunpack.c.l.s4 1934713408
    %v2412 = vunpack.c.0.s8 %v2411
    %v2413 = vlaneseq
    %v2414 = vshrl.u32 %v2413, 7
    %v2415 = vsub.s32 %v2412, %v2414
    %v2416 = vrot.slane %v2408, %v2415
    %v2418 = vunpack.c.l.s4 1934713408
    %v2419 = vunpack.c.0.s8 %v2418
    %v2420 = vlaneseq
    %v2421 = vshrl.u32 %v2420, 7
    %v2422 = vsub.s32 %v2419, %v2421
    %v2423 = vrot.slane %v2409, %v2422
    %v2424 = vcombine.high %v2400, 0.0
    %v2425 = vcombine.high %v2407, 0.0
    %v2426 = vcombine.high %v2416, 0.0
    %v2427 = vcombine.high %v2423, 0.0
    %v2428 = vcombine.high %v1436, 0.0
    %v2430 = vunpack.c.l.s4 1983009808
    %v2431 = vunpack.c.0.s8 %v2430
    %v2432 = vlaneseq
    %v2433 = vshrl.u32 %v2432, 7
    %v2434 = vsub.s32 %v2431, %v2433
    %v2435 = vrot.slane %v1436, %v2434
    %v2437 = vunpack.c.l.s4 1983009808
    %v2438 = vunpack.c.0.s8 %v2437
    %v2439 = vlaneseq
    %v2440 = vshrl.u32 %v2439, 7
    %v2441 = vsub.s32 %v2438, %v2440
    %v2442 = vrot.slane %v2428, %v2441
    %v2443 = vcombine.high %v1437, 0.0
    %v2445 = vunpack.c.l.s4 1983009808
    %v2446 = vunpack.c.0.s8 %v2445
    %v2447 = vlaneseq
    %v2448 = vshrl.u32 %v2447, 7
    %v2449 = vsub.s32 %v2446, %v2448
    %v2450 = vrot.slane %v1437, %v2449
    %v2452 = vunpack.c.l.s4 1983009808
    %v2453 = vunpack.c.0.s8 %v2452
    %v2454 = vlaneseq
    %v2455 = vshrl.u32 %v2454, 7
    %v2456 = vsub.s32 %v2453, %v2455
    %v2457 = vrot.slane %v2443, %v2456
    %v2458 = vcombine.low %v2435, %v2450
    %v2459 = vcombine.high %v2435, %v2450
    %v2461 = vunpack.c.l.s4 1934713408
    %v2462 = vunpack.c.0.s8 %v2461
    %v2463 = vlaneseq
    %v2464 = vshrl.u32 %v2463, 7
    %v2465 = vsub.s32 %v2462, %v2464
    %v2466 = vrot.slane %v2458, %v2465
    %v2468 = vunpack.c.l.s4 1934713408
    %v2469 = vunpack.c.0.s8 %v2468
    %v2470 = vlaneseq
    %v2471 = vshrl.u32 %v2470, 7
    %v2472 = vsub.s32 %v2469, %v2471
    %v2473 = vrot.slane %v2459, %v2472
    %v2474 = vcombine.low %v2442, %v2457
    %v2475 = vcombine.high %v2442, %v2457
    %v2477 = vunpack.c.l.s4 1934713408
    %v2478 = vunpack.c.0.s8 %v2477
    %v2479 = vlaneseq
    %v2480 = vshrl.u32 %v2479, 7
    %v2481 = vsub.s32 %v2478, %v2480
    %v2482 = vrot.slane %v2474, %v2481
    %v2484 = vunpack.c.l.s4 1934713408
    %v2485 = vunpack.c.0.s8 %v2484
    %v2486 = vlaneseq
    %v2487 = vshrl.u32 %v2486, 7
    %v2488 = vsub.s32 %v2485, %v2487
    %v2489 = vrot.slane %v2475, %v2488
    %v2490 = vcombine.high %v2466, 0.0
    %v2491 = vcombine.high %v2473, 0.0
    %v2492 = vcombine.high %v2482, 0.0
    %v2493 = vcombine.high %v2489, 0.0
    %2510 = vrot.lane.b32.xlu0 %v1500, 8
    %v2511 = vpop.permute.xlu0 %2510
    %2512 = vrot.lane.b32.xlu0 %v1566, 8
    %v2513 = vpop.permute.xlu0 %2512
    %2514 = vrot.lane.b32.xlu0 %v1632, 8
    %v2515 = vpop.permute.xlu0 %2514
    %2516 = vrot.lane.b32.xlu0 %v1698, 8
    %v2517 = vpop.permute.xlu0 %2516
    %2518 = vrot.lane.b32.xlu0 %v1764, 8
    %v2519 = vpop.permute.xlu0 %2518
    %2520 = vrot.lane.b32.xlu0 %v1830, 8
    %v2521 = vpop.permute.xlu0 %2520
    %2522 = vrot.lane.b32.xlu0 %v1896, 8
    %v2523 = vpop.permute.xlu0 %2522
    %2524 = vrot.lane.b32.xlu0 %v1962, 8
    %v2525 = vpop.permute.xlu0 %2524
    %2526 = vrot.lane.b32.xlu0 %v2028, 8
    %v2527 = vpop.permute.xlu0 %2526
    %2528 = vrot.lane.b32.xlu0 %v2094, 8
    %v2529 = vpop.permute.xlu0 %2528
    %2530 = vrot.lane.b32.xlu0 %v2160, 8
    %v2531 = vpop.permute.xlu0 %2530
    %2532 = vrot.lane.b32.xlu0 %v2226, 8
    %v2533 = vpop.permute.xlu0 %2532
    %2534 = vrot.lane.b32.xlu0 %v2292, 8
    %v2535 = vpop.permute.xlu0 %2534
    %2536 = vrot.lane.b32.xlu0 %v2358, 8
    %v2537 = vpop.permute.xlu0 %2536
    %2538 = vrot.lane.b32.xlu0 %v2424, 8
    %v2539 = vpop.permute.xlu0 %2538
    %2540 = vrot.lane.b32.xlu0 %v2490, 8
    %v2541 = vpop.permute.xlu0 %2540
    %2574 = vrot.lane.b32.xlu0 %v1483, 16
    %v2575 = vpop.permute.xlu0 %2574
    %2576 = vrot.lane.b32.xlu0 %v1549, 16
    %v2577 = vpop.permute.xlu0 %2576
    %2578 = vrot.lane.b32.xlu0 %v1615, 16
    %v2579 = vpop.permute.xlu0 %2578
    %2580 = vrot.lane.b32.xlu0 %v1681, 16
    %v2581 = vpop.permute.xlu0 %2580
    %2582 = vrot.lane.b32.xlu0 %v1747, 16
    %v2583 = vpop.permute.xlu0 %2582
    %2584 = vrot.lane.b32.xlu0 %v1813, 16
    %v2585 = vpop.permute.xlu0 %2584
    %2586 = vrot.lane.b32.xlu0 %v1879, 16
    %v2587 = vpop.permute.xlu0 %2586
    %2588 = vrot.lane.b32.xlu0 %v1945, 16
    %v2589 = vpop.permute.xlu0 %2588
    %2590 = vrot.lane.b32.xlu0 %v2011, 16
    %v2591 = vpop.permute.xlu0 %2590
    %2592 = vrot.lane.b32.xlu0 %v2077, 16
    %v2593 = vpop.permute.xlu0 %2592
    %2594 = vrot.lane.b32.xlu0 %v2143, 16
    %v2595 = vpop.permute.xlu0 %2594
    %2596 = vrot.lane.b32.xlu0 %v2209, 16
    %v2597 = vpop.permute.xlu0 %2596
    %2598 = vrot.lane.b32.xlu0 %v2275, 16
    %v2599 = vpop.permute.xlu0 %2598
    %2600 = vrot.lane.b32.xlu0 %v2341, 16
    %v2601 = vpop.permute.xlu0 %2600
    %2602 = vrot.lane.b32.xlu0 %v2407, 16
    %v2603 = vpop.permute.xlu0 %2602
    %2604 = vrot.lane.b32.xlu0 %v2473, 16
    %v2605 = vpop.permute.xlu0 %2604
    %2638 = vrot.lane.b32.xlu0 %v1501, 24
    %v2639 = vpop.permute.xlu0 %2638
    %2640 = vrot.lane.b32.xlu0 %v1567, 24
    %v2641 = vpop.permute.xlu0 %2640
    %2642 = vrot.lane.b32.xlu0 %v1633, 24
    %v2643 = vpop.permute.xlu0 %2642
    %2644 = vrot.lane.b32.xlu0 %v1699, 24
    %v2645 = vpop.permute.xlu0 %2644
    %2646 = vrot.lane.b32.xlu0 %v1765, 24
    %v2647 = vpop.permute.xlu0 %2646
    %2648 = vrot.lane.b32.xlu0 %v1831, 24
    %v2649 = vpop.permute.xlu0 %2648
    %2650 = vrot.lane.b32.xlu0 %v1897, 24
    %v2651 = vpop.permute.xlu0 %2650
    %2652 = vrot.lane.b32.xlu0 %v1963, 24
    %v2653 = vpop.permute.xlu0 %2652
    %2654 = vrot.lane.b32.xlu0 %v2029, 24
    %v2655 = vpop.permute.xlu0 %2654
    %2656 = vrot.lane.b32.xlu0 %v2095, 24
    %v2657 = vpop.permute.xlu0 %2656
    %2658 = vrot.lane.b32.xlu0 %v2161, 24
    %v2659 = vpop.permute.xlu0 %2658
    %2660 = vrot.lane.b32.xlu0 %v2227, 24
    %v2661 = vpop.permute.xlu0 %2660
    %2662 = vrot.lane.b32.xlu0 %v2293, 24
    %v2663 = vpop.permute.xlu0 %2662
    %2664 = vrot.lane.b32.xlu0 %v2359, 24
    %v2665 = vpop.permute.xlu0 %2664
    %2666 = vrot.lane.b32.xlu0 %v2425, 24
    %v2667 = vpop.permute.xlu0 %2666
    %2668 = vrot.lane.b32.xlu0 %v2491, 24
    %v2669 = vpop.permute.xlu0 %2668
    %2702 = vrot.lane.b32.xlu0 %v1492, 32
    %v2703 = vpop.permute.xlu0 %2702
    %2704 = vrot.lane.b32.xlu0 %v1558, 32
    %v2705 = vpop.permute.xlu0 %2704
    %2706 = vrot.lane.b32.xlu0 %v1624, 32
    %v2707 = vpop.permute.xlu0 %2706
    %2708 = vrot.lane.b32.xlu0 %v1690, 32
    %v2709 = vpop.permute.xlu0 %2708
    %2710 = vrot.lane.b32.xlu0 %v1756, 32
    %v2711 = vpop.permute.xlu0 %2710
    %2712 = vrot.lane.b32.xlu0 %v1822, 32
    %v2713 = vpop.permute.xlu0 %2712
    %2714 = vrot.lane.b32.xlu0 %v1888, 32
    %v2715 = vpop.permute.xlu0 %2714
    %2716 = vrot.lane.b32.xlu0 %v1954, 32
    %v2717 = vpop.permute.xlu0 %2716
    %2718 = vrot.lane.b32.xlu0 %v2020, 32
    %v2719 = vpop.permute.xlu0 %2718
    %2720 = vrot.lane.b32.xlu0 %v2086, 32
    %v2721 = vpop.permute.xlu0 %2720
    %2722 = vrot.lane.b32.xlu0 %v2152, 32
    %v2723 = vpop.permute.xlu0 %2722
    %2724 = vrot.lane.b32.xlu0 %v2218, 32
    %v2725 = vpop.permute.xlu0 %2724
    %2726 = vrot.lane.b32.xlu0 %v2284, 32
    %v2727 = vpop.permute.xlu0 %2726
    %2728 = vrot.lane.b32.xlu0 %v2350, 32
    %v2729 = vpop.permute.xlu0 %2728
    %2730 = vrot.lane.b32.xlu0 %v2416, 32
    %v2731 = vpop.permute.xlu0 %2730
    %2732 = vrot.lane.b32.xlu0 %v2482, 32
    %v2733 = vpop.permute.xlu0 %2732
    %2766 = vrot.lane.b32.xlu0 %v1502, 40
    %v2767 = vpop.permute.xlu0 %2766
    %2768 = vrot.lane.b32.xlu0 %v1568, 40
    %v2769 = vpop.permute.xlu0 %2768
    %2770 = vrot.lane.b32.xlu0 %v1634, 40
    %v2771 = vpop.permute.xlu0 %2770
    %2772 = vrot.lane.b32.xlu0 %v1700, 40
    %v2773 = vpop.permute.xlu0 %2772
    %2774 = vrot.lane.b32.xlu0 %v1766, 40
    %v2775 = vpop.permute.xlu0 %2774
    %2776 = vrot.lane.b32.xlu0 %v1832, 40
    %v2777 = vpop.permute.xlu0 %2776
    %2778 = vrot.lane.b32.xlu0 %v1898, 40
    %v2779 = vpop.permute.xlu0 %2778
    %2780 = vrot.lane.b32.xlu0 %v1964, 40
    %v2781 = vpop.permute.xlu0 %2780
    %2782 = vrot.lane.b32.xlu0 %v2030, 40
    %v2783 = vpop.permute.xlu0 %2782
    %2784 = vrot.lane.b32.xlu0 %v2096, 40
    %v2785 = vpop.permute.xlu0 %2784
    %2786 = vrot.lane.b32.xlu0 %v2162, 40
    %v2787 = vpop.permute.xlu0 %2786
    %2788 = vrot.lane.b32.xlu0 %v2228, 40
    %v2789 = vpop.permute.xlu0 %2788
    %2790 = vrot.lane.b32.xlu0 %v2294, 40
    %v2791 = vpop.permute.xlu0 %2790
    %2792 = vrot.lane.b32.xlu0 %v2360, 40
    %v2793 = vpop.permute.xlu0 %2792
    %2794 = vrot.lane.b32.xlu0 %v2426, 40
    %v2795 = vpop.permute.xlu0 %2794
    %2796 = vrot.lane.b32.xlu0 %v2492, 40
    %v2797 = vpop.permute.xlu0 %2796
    %2830 = vrot.lane.b32.xlu0 %v1499, 48
    %v2831 = vpop.permute.xlu0 %2830
    %2832 = vrot.lane.b32.xlu0 %v1565, 48
    %v2833 = vpop.permute.xlu0 %2832
    %2834 = vrot.lane.b32.xlu0 %v1631, 48
    %v2835 = vpop.permute.xlu0 %2834
    %2836 = vrot.lane.b32.xlu0 %v1697, 48
    %v2837 = vpop.permute.xlu0 %2836
    %2838 = vrot.lane.b32.xlu0 %v1763, 48
    %v2839 = vpop.permute.xlu0 %2838
    %2840 = vrot.lane.b32.xlu0 %v1829, 48
    %v2841 = vpop.permute.xlu0 %2840
    %2842 = vrot.lane.b32.xlu0 %v1895, 48
    %v2843 = vpop.permute.xlu0 %2842
    %2844 = vrot.lane.b32.xlu0 %v1961, 48
    %v2845 = vpop.permute.xlu0 %2844
    %2846 = vrot.lane.b32.xlu0 %v2027, 48
    %v2847 = vpop.permute.xlu0 %2846
    %2848 = vrot.lane.b32.xlu0 %v2093, 48
    %v2849 = vpop.permute.xlu0 %2848
    %2850 = vrot.lane.b32.xlu0 %v2159, 48
    %v2851 = vpop.permute.xlu0 %2850
    %2852 = vrot.lane.b32.xlu0 %v2225, 48
    %v2853 = vpop.permute.xlu0 %2852
    %2854 = vrot.lane.b32.xlu0 %v2291, 48
    %v2855 = vpop.permute.xlu0 %2854
    %2856 = vrot.lane.b32.xlu0 %v2357, 48
    %v2857 = vpop.permute.xlu0 %2856
    %2858 = vrot.lane.b32.xlu0 %v2423, 48
    %v2859 = vpop.permute.xlu0 %2858
    %2860 = vrot.lane.b32.xlu0 %v2489, 48
    %v2861 = vpop.permute.xlu0 %2860
    %2894 = vrot.lane.b32.xlu0 %v1503, 56
    %v2895 = vpop.permute.xlu0 %2894
    %2896 = vrot.lane.b32.xlu0 %v1569, 56
    %v2897 = vpop.permute.xlu0 %2896
    %2898 = vrot.lane.b32.xlu0 %v1635, 56
    %v2899 = vpop.permute.xlu0 %2898
    %2900 = vrot.lane.b32.xlu0 %v1701, 56
    %v2901 = vpop.permute.xlu0 %2900
    %2902 = vrot.lane.b32.xlu0 %v1767, 56
    %v2903 = vpop.permute.xlu0 %2902
    %2904 = vrot.lane.b32.xlu0 %v1833, 56
    %v2905 = vpop.permute.xlu0 %2904
    %2906 = vrot.lane.b32.xlu0 %v1899, 56
    %v2907 = vpop.permute.xlu0 %2906
    %2908 = vrot.lane.b32.xlu0 %v1965, 56
    %v2909 = vpop.permute.xlu0 %2908
    %2910 = vrot.lane.b32.xlu0 %v2031, 56
    %v2911 = vpop.permute.xlu0 %2910
    %2912 = vrot.lane.b32.xlu0 %v2097, 56
    %v2913 = vpop.permute.xlu0 %2912
    %2914 = vrot.lane.b32.xlu0 %v2163, 56
    %v2915 = vpop.permute.xlu0 %2914
    %2916 = vrot.lane.b32.xlu0 %v2229, 56
    %v2917 = vpop.permute.xlu0 %2916
    %2918 = vrot.lane.b32.xlu0 %v2295, 56
    %v2919 = vpop.permute.xlu0 %2918
    %2920 = vrot.lane.b32.xlu0 %v2361, 56
    %v2921 = vpop.permute.xlu0 %2920
    %2922 = vrot.lane.b32.xlu0 %v2427, 56
    %v2923 = vpop.permute.xlu0 %2922
    %2924 = vrot.lane.b32.xlu0 %v2493, 56
    %v2925 = vpop.permute.xlu0 %2924
    %vm2942 = vcmask 64512
    %v2943 = vsel %vm2942, %v1476, %v2511
    %v2944 = vsel %vm2942, %v1542, %v2513
    %v2945 = vsel %vm2942, %v1608, %v2515
    %v2946 = vsel %vm2942, %v1674, %v2517
    %v2947 = vsel %vm2942, %v1740, %v2519
    %v2948 = vsel %vm2942, %v1806, %v2521
    %v2949 = vsel %vm2942, %v1872, %v2523
    %v2950 = vsel %vm2942, %v1938, %v2525
    %v2951 = vsel %vm2942, %v2004, %v2527
    %v2952 = vsel %vm2942, %v2070, %v2529
    %v2953 = vsel %vm2942, %v2136, %v2531
    %v2954 = vsel %vm2942, %v2202, %v2533
    %v2955 = vsel %vm2942, %v2268, %v2535
    %v2956 = vsel %vm2942, %v2334, %v2537
    %v2957 = vsel %vm2942, %v2400, %v2539
    %v2958 = vsel %vm2942, %v2466, %v2541
    %vm2959 = vcmask 130048
    %v2960 = vsel %vm2959, %v2943, %v2575
    %v2961 = vsel %vm2959, %v2944, %v2577
    %v2962 = vsel %vm2959, %v2945, %v2579
    %v2963 = vsel %vm2959, %v2946, %v2581
    %v2964 = vsel %vm2959, %v2947, %v2583
    %v2965 = vsel %vm2959, %v2948, %v2585
    %v2966 = vsel %vm2959, %v2949, %v2587
    %v2967 = vsel %vm2959, %v2950, %v2589
    %v2968 = vsel %vm2959, %v2951, %v2591
    %v2969 = vsel %vm2959, %v2952, %v2593
    %v2970 = vsel %vm2959, %v2953, %v2595
    %v2971 = vsel %vm2959, %v2954, %v2597
    %v2972 = vsel %vm2959, %v2955, %v2599
    %v2973 = vsel %vm2959, %v2956, %v2601
    %v2974 = vsel %vm2959, %v2957, %v2603
    %v2975 = vsel %vm2959, %v2958, %v2605
    %vm2976 = vcmask 195584
    %v2977 = vsel %vm2976, %v2960, %v2639
    %v2978 = vsel %vm2976, %v2961, %v2641
    %v2979 = vsel %vm2976, %v2962, %v2643
    %v2980 = vsel %vm2976, %v2963, %v2645
    %v2981 = vsel %vm2976, %v2964, %v2647
    %v2982 = vsel %vm2976, %v2965, %v2649
    %v2983 = vsel %vm2976, %v2966, %v2651
    %v2984 = vsel %vm2976, %v2967, %v2653
    %v2985 = vsel %vm2976, %v2968, %v2655
    %v2986 = vsel %vm2976, %v2969, %v2657
    %v2987 = vsel %vm2976, %v2970, %v2659
    %v2988 = vsel %vm2976, %v2971, %v2661
    %v2989 = vsel %vm2976, %v2972, %v2663
    %v2990 = vsel %vm2976, %v2973, %v2665
    %v2991 = vsel %vm2976, %v2974, %v2667
    %v2992 = vsel %vm2976, %v2975, %v2669
    %vm2993 = vcmask 261120
    %v2994 = vsel %vm2993, %v2977, %v2703
    %v2995 = vsel %vm2993, %v2978, %v2705
    %v2996 = vsel %vm2993, %v2979, %v2707
    %v2997 = vsel %vm2993, %v2980, %v2709
    %v2998 = vsel %vm2993, %v2981, %v2711
    %v2999 = vsel %vm2993, %v2982, %v2713
    %v3000 = vsel %vm2993, %v2983, %v2715
    %v3001 = vsel %vm2993, %v2984, %v2717
    %v3002 = vsel %vm2993, %v2985, %v2719
    %v3003 = vsel %vm2993, %v2986, %v2721
    %v3004 = vsel %vm2993, %v2987, %v2723
    %v3005 = vsel %vm2993, %v2988, %v2725
    %v3006 = vsel %vm2993, %v2989, %v2727
    %v3007 = vsel %vm2993, %v2990, %v2729
    %v3008 = vsel %vm2993, %v2991, %v2731
    %v3009 = vsel %vm2993, %v2992, %v2733
    %vm3010 = vcmask 326656
    %v3011 = vsel %vm3010, %v2994, %v2767
    %v3012 = vsel %vm3010, %v2995, %v2769
    %v3013 = vsel %vm3010, %v2996, %v2771
    %v3014 = vsel %vm3010, %v2997, %v2773
    %v3015 = vsel %vm3010, %v2998, %v2775
    %v3016 = vsel %vm3010, %v2999, %v2777
    %v3017 = vsel %vm3010, %v3000, %v2779
    %v3018 = vsel %vm3010, %v3001, %v2781
    %v3019 = vsel %vm3010, %v3002, %v2783
    %v3020 = vsel %vm3010, %v3003, %v2785
    %v3021 = vsel %vm3010, %v3004, %v2787
    %v3022 = vsel %vm3010, %v3005, %v2789
    %v3023 = vsel %vm3010, %v3006, %v2791
    %v3024 = vsel %vm3010, %v3007, %v2793
    %v3025 = vsel %vm3010, %v3008, %v2795
    %v3026 = vsel %vm3010, %v3009, %v2797
    %vm3027 = vcmask 392192
    %v3028 = vsel %vm3027, %v3011, %v2831
    %v3029 = vsel %vm3027, %v3012, %v2833
    %v3030 = vsel %vm3027, %v3013, %v2835
    %v3031 = vsel %vm3027, %v3014, %v2837
    %v3032 = vsel %vm3027, %v3015, %v2839
    %v3033 = vsel %vm3027, %v3016, %v2841
    %v3034 = vsel %vm3027, %v3017, %v2843
    %v3035 = vsel %vm3027, %v3018, %v2845
    %v3036 = vsel %vm3027, %v3019, %v2847
    %v3037 = vsel %vm3027, %v3020, %v2849
    %v3038 = vsel %vm3027, %v3021, %v2851
    %v3039 = vsel %vm3027, %v3022, %v2853
    %v3040 = vsel %vm3027, %v3023, %v2855
    %v3041 = vsel %vm3027, %v3024, %v2857
    %v3042 = vsel %vm3027, %v3025, %v2859
    %v3043 = vsel %vm3027, %v3026, %v2861
    %vm3044 = vcmask 457728
    %v3045 = vsel %vm3044, %v3028, %v2895
    %v3046 = vsel %vm3044, %v3029, %v2897
    %v3047 = vsel %vm3044, %v3030, %v2899
    %v3048 = vsel %vm3044, %v3031, %v2901
    %v3049 = vsel %vm3044, %v3032, %v2903
    %v3050 = vsel %vm3044, %v3033, %v2905
    %v3051 = vsel %vm3044, %v3034, %v2907
    %v3052 = vsel %vm3044, %v3035, %v2909
    %v3053 = vsel %vm3044, %v3036, %v2911
    %v3054 = vsel %vm3044, %v3037, %v2913
    %v3055 = vsel %vm3044, %v3038, %v2915
    %v3056 = vsel %vm3044, %v3039, %v2917
    %v3057 = vsel %vm3044, %v3040, %v2919
    %v3058 = vsel %vm3044, %v3041, %v2921
    %v3059 = vsel %vm3044, %v3042, %v2923
    %v3060 = vsel %vm3044, %v3043, %v2925
    %v3077 = vrot.slane %v3045, 1
    %v3078 = vrot.slane %v3046, 1
    %v3079 = vrot.slane %v3047, 1
    %v3080 = vrot.slane %v3048, 1
    %v3081 = vrot.slane %v3049, 1
    %v3082 = vrot.slane %v3050, 1
    %v3083 = vrot.slane %v3051, 1
    %v3084 = vrot.slane %v3052, 1
    %v3085 = vrot.slane %v3053, 1
    %v3086 = vrot.slane %v3054, 1
    %v3087 = vrot.slane %v3055, 1
    %v3088 = vrot.slane %v3056, 1
    %v3089 = vrot.slane %v3057, 1
    %v3090 = vrot.slane %v3058, 1
    %v3091 = vrot.slane %v3059, 1
    %v3092 = vrot.slane %v3060, 1
    %v3109 = vmax.f32 %v3045, %v3077
    %v3110 = vmax.f32 %v3046, %v3078
    %v3111 = vmax.f32 %v3047, %v3079
    %v3112 = vmax.f32 %v3048, %v3080
    %v3113 = vmax.f32 %v3049, %v3081
    %v3114 = vmax.f32 %v3050, %v3082
    %v3115 = vmax.f32 %v3051, %v3083
    %v3116 = vmax.f32 %v3052, %v3084
    %v3117 = vmax.f32 %v3053, %v3085
    %v3118 = vmax.f32 %v3054, %v3086
    %v3119 = vmax.f32 %v3055, %v3087
    %v3120 = vmax.f32 %v3056, %v3088
    %v3121 = vmax.f32 %v3057, %v3089
    %v3122 = vmax.f32 %v3058, %v3090
    %v3123 = vmax.f32 %v3059, %v3091
    %v3124 = vmax.f32 %v3060, %v3092
    %v3125 = vpack.c.bf16 %v3109, %v3109
    %v3126 = vpack.c.bf16 %v3110, %v3110
    %v3127 = vpack.c.bf16 %v3111, %v3111
    %v3128 = vpack.c.bf16 %v3112, %v3112
    %v3129 = vpack.c.bf16 %v3113, %v3113
    %v3130 = vpack.c.bf16 %v3114, %v3114
    %v3131 = vpack.c.bf16 %v3115, %v3115
    %v3132 = vpack.c.bf16 %v3116, %v3116
    %v3133 = vpack.c.bf16 %v3117, %v3117
    %v3134 = vpack.c.bf16 %v3118, %v3118
    %v3135 = vpack.c.bf16 %v3119, %v3119
    %v3136 = vpack.c.bf16 %v3120, %v3120
    %v3137 = vpack.c.bf16 %v3121, %v3121
    %v3138 = vpack.c.bf16 %v3122, %v3122
    %v3139 = vpack.c.bf16 %v3123, %v3123
    %v3140 = vpack.c.bf16 %v3124, %v3124
    %v3157 = vunpack.c.l.b16 %v3125
    %v3158 = vunpack.c.l.b16 %v3126
    %v3159 = vunpack.c.l.b16 %v3127
    %v3160 = vunpack.c.l.b16 %v3128
    %v3161 = vunpack.c.l.b16 %v3129
    %v3162 = vunpack.c.l.b16 %v3130
    %v3163 = vunpack.c.l.b16 %v3131
    %v3164 = vunpack.c.l.b16 %v3132
    %v3165 = vunpack.c.l.b16 %v3133
    %v3166 = vunpack.c.l.b16 %v3134
    %v3167 = vunpack.c.l.b16 %v3135
    %v3168 = vunpack.c.l.b16 %v3136
    %v3169 = vunpack.c.l.b16 %v3137
    %v3170 = vunpack.c.l.b16 %v3138
    %v3171 = vunpack.c.l.b16 %v3139
    %v3172 = vunpack.c.l.b16 %v3140
    %v3173 = vpack.c.b16 %v3157, %v3157
    %v3174 = vpack.c.b16 %v3158, %v3158
    %v3175 = vpack.c.b16 %v3159, %v3159
    %v3176 = vpack.c.b16 %v3160, %v3160
    %v3177 = vpack.c.b16 %v3161, %v3161
    %v3178 = vpack.c.b16 %v3162, %v3162
    %v3179 = vpack.c.b16 %v3163, %v3163
    %v3180 = vpack.c.b16 %v3164, %v3164
    %v3181 = vpack.c.b16 %v3165, %v3165
    %v3182 = vpack.c.b16 %v3166, %v3166
    %v3183 = vpack.c.b16 %v3167, %v3167
    %v3184 = vpack.c.b16 %v3168, %v3168
    %v3185 = vpack.c.b16 %v3169, %v3169
    %v3186 = vpack.c.b16 %v3170, %v3170
    %v3187 = vpack.c.b16 %v3171, %v3171
    %v3188 = vpack.c.b16 %v3172, %v3172
    %v3189 = vunpack.c.l.b16 %v3173
    %v3190 = vunpack.c.l.b16 %v3174
    %v3191 = vunpack.c.l.b16 %v3175
    %v3192 = vunpack.c.l.b16 %v3176
    %v3193 = vunpack.c.l.b16 %v3177
    %v3194 = vunpack.c.l.b16 %v3178
    %v3195 = vunpack.c.l.b16 %v3179
    %v3196 = vunpack.c.l.b16 %v3180
    %v3197 = vunpack.c.l.b16 %v3181
    %v3198 = vunpack.c.l.b16 %v3182
    %v3199 = vunpack.c.l.b16 %v3183
    %v3200 = vunpack.c.l.b16 %v3184
    %v3201 = vunpack.c.l.b16 %v3185
    %v3202 = vunpack.c.l.b16 %v3186
    %v3203 = vunpack.c.l.b16 %v3187
    %v3204 = vunpack.c.l.b16 %v3188
    %v3205 = vrot.slane %v3190, 7
    %vm3206 = vcmask 1041409
    %v3207 = vsel %vm3206, %v3205, %v3189
    %v3208 = vrot.slane %v3191, 6
    %vm3209 = vcmask 1042434
    %v3210 = vsel %vm3209, %v3208, %v3207
    %v3211 = vrot.slane %v3192, 5
    %vm3212 = vcmask 1043459
    %v3213 = vsel %vm3212, %v3211, %v3210
    %v3214 = vrot.slane %v3193, 4
    %vm3215 = vcmask 1044484
    %v3216 = vsel %vm3215, %v3214, %v3213
    %v3217 = vrot.slane %v3194, 3
    %vm3218 = vcmask 1045509
    %v3219 = vsel %vm3218, %v3217, %v3216
    %v3220 = vrot.slane %v3195, 2
    %vm3221 = vcmask 1046534
    %v3222 = vsel %vm3221, %v3220, %v3219
    %v3223 = vrot.slane %v3196, 1
    %vm3224 = vcmask 1047559
    %v3225 = vsel %vm3224, %v3223, %v3222
    %v3226 = vrot.slane %v3198, 7
    %v3227 = vsel %vm3206, %v3226, %v3197
    %v3228 = vrot.slane %v3199, 6
    %v3229 = vsel %vm3209, %v3228, %v3227
    %v3230 = vrot.slane %v3200, 5
    %v3231 = vsel %vm3212, %v3230, %v3229
    %v3232 = vrot.slane %v3201, 4
    %v3233 = vsel %vm3215, %v3232, %v3231
    %v3234 = vrot.slane %v3202, 3
    %v3235 = vsel %vm3218, %v3234, %v3233
    %v3236 = vrot.slane %v3203, 2
    %v3237 = vsel %vm3221, %v3236, %v3235
    %v3238 = vrot.slane %v3204, 1
    %v3239 = vsel %vm3224, %v3238, %v3237
    %v3240 = vpack.c.b16 %v3225, %v3225
    %v3241 = vpack.c.b16 %v3239, %v3239
    %vm3244 = vcmask 519168
    %3245 = vst.msk [vmem:[%s5] sm:$0xf] %vm3244, %v3240
    %3246 = vst.msk [vmem:[%s5 + $0x4] sm:$0xf] %vm3244, %v3241
    // Predicated region
    $region26: #{_lambda_.2} parent=1 // pred_check
      _
    $region27: #{_lambda_.2} parent=1 // pred_check_branch
      %3248 = sbr.rel (0) target = $region29
    $region28: #{_lambda_.2} parent=1 // pred_region
      _
    $region29: #{_lambda_.2} parent=1 // pred_fallthru
      _
    // Predicated region
    $region30: #{_lambda_.2} parent=1 // pred_check
      _
    $region31: #{_lambda_.2} parent=1 // pred_check_branch
      %3250 = sbr.rel (0) target = $region33
    $region32: #{_lambda_.2} parent=1 // pred_region
      _
    $region33: #{_lambda_.2} parent=1 // pred_fallthru
      _
    %3251 = vsyncpa [#allocation3], 1

</llo_original>
